<compile_context>
chip_gen: v7x
topology: tpu7x:2x2x1
jax: 0.10.0
libtpu: 0.0.40
codegen_flags: <defaults>
</compile_context>

<pallas_src>
import functools

import jax
import jax.numpy as jnp
from jax.experimental import pallas as pl
from jax.experimental.pallas import tpu as pltpu

ACT_DTYPE = jnp.bfloat16
_EPS = 1e-5


def _caps():
    """(lane-tile cap, vmem_limit_bytes) per TPU generation."""
    kind = ""
    try:
        kind = jax.devices()[0].device_kind.lower()
    except Exception:
        pass
    if "v7" in kind or "tpu7" in kind:
        return 2048, 48 * 1024 * 1024        # 64 MiB physical VMEM -> headroom
    if "v5" in kind or "v6" in kind:
        return 2048, 96 * 1024 * 1024        # 128 MiB physical VMEM
    return 1024, 32 * 1024 * 1024            # conservative default


def _pad_and_tile(m, cap):
    """Pad M so the lane tile is a multiple of 128 and divides M_pad."""
    m128 = ((m + 127) // 128) * 128
    if m128 <= cap:
        return m128, m128
    m_pad = ((m128 + cap - 1) // cap) * cap
    return m_pad, cap


# ----------------------------------------------------------------------------
# Pallas kernels
# ----------------------------------------------------------------------------
def _shift_matmul_kernel(a_ref, b_ref, o_ref, stats_ref, acc_ref, *, act):
    """out = sum_s A[s] @ B[s], accumulated over the (last, 'arbitrary') shift
    grid axis in f32 VMEM scratch.  At the last shift step the per-row
    [sum, sumsq] partials for this lane tile are written (caller reduces over
    tiles) and the optional activation is fused into the store."""
    s = pl.program_id(1)

    @pl.when(s == 0)
    def _():
        acc_ref[...] = jnp.zeros_like(acc_ref)

    acc_ref[...] += jnp.dot(a_ref[...], b_ref[...],
                            preferred_element_type=jnp.float32)

    @pl.when(s == pl.num_programs(1) - 1)
    def _():
        y = acc_ref[...]
        stats_ref[...] = jnp.concatenate(
            [jnp.sum(y, axis=1, keepdims=True),
             jnp.sum(y * y, axis=1, keepdims=True)], axis=1)
        if act == "tanh":
            y = jnp.tanh(y)
        elif act == "relu":
            y = jnp.maximum(y, 0.0)
        o_ref[...] = y.astype(o_ref.dtype)


def _affine_act_kernel(x_ref, s_ref, b_ref, o_ref, *, act):
    """act(x * scale + bias); scale/bias broadcast per-row or per-lane."""
    y = x_ref[...].astype(jnp.float32) * s_ref[...] + b_ref[...]
    if act == "relu":
        y = jnp.maximum(y, 0.0)
    elif act == "tanh":
        y = jnp.tanh(y)
    o_ref[...] = y.astype(o_ref.dtype)


# ----------------------------------------------------------------------------
# Pallas wrappers
# ----------------------------------------------------------------------------
def pallas_shift_matmul(a, b, *, act=None, out_dtype=ACT_DTYPE):
    """a: (S, R, K), b: (S, K, M).  Returns (out (R, M_pad), stats (R, 2))."""
    s_dim, r, k = a.shape
    m = b.shape[2]
    cap, vmem = _caps()
    m_pad, tm = _pad_and_tile(m, cap)
    if m_pad != m:
        # zero lanes contribute nothing to the statistics, sliced off later
        b = jnp.pad(b, ((0, 0), (0, 0), (0, m_pad - m)))
    m_tiles = m_pad // tm

    out, stats = pl.pallas_call(
        functools.partial(_shift_matmul_kernel, act=act),
        grid=(m_tiles, s_dim),
        in_specs=[pl.BlockSpec((None, r, k), lambda i, s: (s, 0, 0)),
                  pl.BlockSpec((None, k, tm), lambda i, s: (s, 0, i))],
        out_specs=(pl.BlockSpec((r, tm), lambda i, s: (0, i)),
                   pl.BlockSpec((None, r, 2), lambda i, s: (i, 0, 0))),
        out_shape=(jax.ShapeDtypeStruct((r, m_pad), out_dtype),
                   jax.ShapeDtypeStruct((m_tiles, r, 2), jnp.float32)),
        scratch_shapes=[pltpu.VMEM((r, tm), jnp.float32)],
        compiler_params=pltpu.CompilerParams(
            dimension_semantics=("parallel", "arbitrary"),
            vmem_limit_bytes=vmem),
    )(a, b)
    return out, jnp.sum(stats, axis=0)          # tiny XLA reduce over tiles


def pallas_affine_act(x, scale, bias, *, act, per_row):
    """x: (R, M) with M a multiple of the lane tile; scale/bias (R,1) or (1,M)."""
    r, m = x.shape
    cap, vmem = _caps()
    tm = m if m <= cap else cap
    assert m % tm == 0
    if per_row:
        s_spec = pl.BlockSpec((r, 1), lambda i: (0, 0))
    else:
        s_spec = pl.BlockSpec((1, tm), lambda i: (0, i))
    return pl.pallas_call(
        functools.partial(_affine_act_kernel, act=act),
        grid=(m // tm,),
        in_specs=[pl.BlockSpec((r, tm), lambda i: (0, i)), s_spec, s_spec],
        out_specs=pl.BlockSpec((r, tm), lambda i: (0, i)),
        out_shape=jax.ShapeDtypeStruct((r, m), ACT_DTYPE),
        compiler_params=pltpu.CompilerParams(
            dimension_semantics=("parallel",), vmem_limit_bytes=vmem),
    )(x, scale, bias)


# ----------------------------------------------------------------------------
# Stride-2 ConvTranspose2d(k=4, pad=1) via 9 shared shift windows
# ----------------------------------------------------------------------------
def _shift_windows(x):
    """x: (Cin, N, H, W) -> (9, Cin, N*H*W) bf16: windows of the zero-padded
    activation at shifts (sy, sx) in {0,1,2}^2 (shared by all output phases)."""
    # TODO(synk): gather these windows inside the kernel (haloed lane slices of
    # one resident padded activation) to cut patch HBM traffic a further ~4x.
    cin, n, h, w = x.shape
    xp = jnp.pad(x, ((0, 0), (0, 0), (1, 1), (1, 1)))
    wins = [xp[:, :, sy:sy + h, sx:sx + w].reshape(cin, n * h * w)
            for sy in range(3) for sx in range(3)]
    return jnp.stack(wins, axis=0).astype(ACT_DTYPE)


def _phase_shift_weights(w):
    """w: (Cin, Cout, 4, 4) PyTorch ConvTranspose2d weight -> (9, 4*Cout, Cin).
    Output phase (ry, rx) pixel (2qy+ry, 2qx+rx) reads padded input
    (qy+sy, qx+sx) through kernel tap (ky, kx) = (3+ry-2sy, 3+rx-2sx);
    invalid (phase, shift) pairs get zero blocks (rows ordered (ry, rx, cout))."""
    cin, cout = w.shape[0], w.shape[1]
    blocks = []
    for sy in range(3):
        for sx in range(3):
            rows = []
            for ry in range(2):
                for rx in range(2):
                    ky, kx = 3 + ry - 2 * sy, 3 + rx - 2 * sx
                    if 0 <= ky <= 3 and 0 <= kx <= 3:
                        rows.append(w[:, :, ky, kx].T)           # (Cout, Cin)
                    else:
                        rows.append(jnp.zeros((cout, cin), w.dtype))
            blocks.append(jnp.concatenate(rows, axis=0))         # (4*Cout, Cin)
    return jnp.stack(blocks, axis=0).astype(ACT_DTYPE)


def _bn_scale_bias(stats, count, gamma, beta):
    """Training-mode BatchNorm from fused per-channel [sum, sumsq]."""
    mean = stats[:, 0] / count
    var = jnp.maximum(stats[:, 1] / count - mean * mean, 0.0)
    scale = gamma / jnp.sqrt(var + _EPS)
    return scale, beta - mean * scale


def generator_forward(z, params):
    """DCGAN generator forward.  z: (N, nz, 1, 1) -> NCHW (N, nc, 64, 64)."""
    n, nz = z.shape[0], z.shape[1]

    # ---- layer 1: ConvTranspose2d(nz, ngf*8, 4, 1, 0) + BN + ReLU ----------
    # 1x1 input => (N, nz) @ (nz, C1*16); lanes = C1*16 (lane-dense output).
    w1 = params["w1"]
    c1 = w1.shape[1]
    a1 = z.reshape(1, n, nz).astype(ACT_DTYPE)
    b1 = w1.reshape(1, nz, c1 * 16).astype(ACT_DTYPE)
    conv1, _ = pallas_shift_matmul(a1, b1, out_dtype=jnp.float32)
    v = conv1[:, :c1 * 16].reshape(n, c1, 16)        # BN stats in XLA (tiny)
    mean = jnp.mean(v, axis=(0, 2))
    var = jnp.var(v, axis=(0, 2))
    scale = params["gamma1"] / jnp.sqrt(var + _EPS)
    bias = params["beta1"] - mean * scale
    m1 = conv1.shape[1]
    scale_col = jnp.pad(jnp.repeat(scale, 16), (0, m1 - c1 * 16))[None, :]
    bias_col = jnp.pad(jnp.repeat(bias, 16), (0, m1 - c1 * 16))[None, :]
    act1 = pallas_affine_act(conv1, scale_col, bias_col, act="relu",
                             per_row=False)
    x = act1[:, :c1 * 16].reshape(n, c1, 4, 4).transpose(1, 0, 2, 3)

    # ---- layers 2..5: stride-2 transposed convs --------------------------
    layers = [("w2", "gamma2", "beta2"), ("w3", "gamma3", "beta3"),
              ("w4", "gamma4", "beta4"), ("w5", None, None)]
    for wname, gname, bname in layers:
        w = params[wname]
        cout = w.shape[1]
        _, nn, h, wd = x.shape
        m = nn * h * wd
        a_mat = _phase_shift_weights(w)                  # (9, 4*Cout, Cin)
        b_mat = _shift_windows(x)                        # (9, Cin, M)
        if gname is not None:                            # conv + BN + ReLU
            conv, st = pallas_shift_matmul(a_mat, b_mat)
            st = st.reshape(4, cout, 2).sum(axis=0)      # per-channel stats
            scale, bias = _bn_scale_bias(st, 4.0 * m, params[gname],
                                         params[bname])
            out = pallas_affine_act(conv, jnp.tile(scale, 4)[:, None],
                                    jnp.tile(bias, 4)[:, None],
                                    act="relu", per_row=True)
        else:                                            # final conv + Tanh
            out, _ = pallas_shift_matmul(a_mat, b_mat, act="tanh",
                                         out_dtype=jnp.float32)
        # interleave the 2x2 output phases -> (Cout, N, 2H, 2W)
        # TODO(synk): keep activations phase-major between layers (or pack the
        # x-interleave with a bf16-pair->u32 bitcast) to drop this HBM pass.
        out = out[:, :m].reshape(2, 2, cout, nn, h, wd)
        x = out.transpose(2, 3, 4, 0, 5, 1).reshape(cout, nn, 2 * h, 2 * wd)

    return x.transpose(1, 0, 2, 3).astype(jnp.float32)   # -> NCHW


# ----------------------------------------------------------------------------
# Pure-JAX reference (ConvTranspose2d == dilated conv with flipped kernel)
# ----------------------------------------------------------------------------
def reference_forward(z, params):
    def convT(x, w, stride, pad):
        wf = jnp.flip(w, (2, 3)).transpose(1, 0, 2, 3)
        return jax.lax.conv_general_dilated(
            x, wf, (1, 1),
            [(w.shape[2] - 1 - pad,) * 2, (w.shape[3] - 1 - pad,) * 2],
            lhs_dilation=(stride, stride),
            dimension_numbers=("NCHW", "OIHW", "NCHW"))

    def bn_relu(x, g, b):
        mean = x.mean(axis=(0, 2, 3), keepdims=True)
        var = x.var(axis=(0, 2, 3), keepdims=True)
        y = (x - mean) / jnp.sqrt(var + _EPS)
        y = y * g[None, :, None, None] + b[None, :, None, None]
        return jnp.maximum(y, 0.0)

    x = bn_relu(convT(z, params["w1"], 1, 0), params["gamma1"], params["beta1"])
    x = bn_relu(convT(x, params["w2"], 2, 1), params["gamma2"], params["beta2"])
    x = bn_relu(convT(x, params["w3"], 2, 1), params["gamma3"], params["beta3"])
    x = bn_relu(convT(x, params["w4"], 2, 1), params["gamma4"], params["beta4"])
    return jnp.tanh(convT(x, params["w5"], 2, 1))


def init_params(key, nz, ngf, nc):
    ks = jax.random.split(key, 5)
    std = 0.02  # DCGAN-style init, deterministic
    p = {
        "w1": jax.random.normal(ks[0], (nz, ngf * 8, 4, 4), jnp.float32) * std,
        "w2": jax.random.normal(ks[1], (ngf * 8, ngf * 4, 4, 4), jnp.float32) * std,
        "w3": jax.random.normal(ks[2], (ngf * 4, ngf * 2, 4, 4), jnp.float32) * std,
        "w4": jax.random.normal(ks[3], (ngf * 2, ngf, 4, 4), jnp.float32) * std,
        "w5": jax.random.normal(ks[4], (ngf, nc, 4, 4), jnp.float32) * std,
    }
    for i, ch in enumerate([ngf * 8, ngf * 4, ngf * 2, ngf]):
        p[f"gamma{i + 1}"] = jnp.ones((ch,), jnp.float32)   # PyTorch defaults
        p[f"beta{i + 1}"] = jnp.zeros((ch,), jnp.float32)
    return p


if __name__ == "__main__":
    # small-but-consistent config: latent 16, base feature maps 8, RGB output
    nz, ngf, nc, batch = 16, 8, 3, 2

    key = jax.random.PRNGKey(0)
    kz, kp = jax.random.split(key)
    z = jax.random.normal(kz, (batch, nz, 1, 1), jnp.float32)
    params = init_params(kp, nz, ngf, nc)

    out = jax.block_until_ready(jax.jit(generator_forward)(z, params))

    assert out.shape == (batch, nc, 64, 64), out.shape
    assert bool(jnp.all(jnp.isfinite(out)))
    assert bool(jnp.all(jnp.abs(out) <= 1.0 + 1e-5))       # tanh range

    ref = reference_forward(z, params)
    max_err = float(jnp.max(jnp.abs(out - ref)))
    assert max_err < 5e-2, f"max abs error vs reference: {max_err}"
    print("KERNEL_OK")
</pallas_src>

<mosaic_0001>
module attributes {stable_mosaic.version = 11 : i64} {
  func.func @_shift_matmul_kernel(%arg0: i32, %arg1: i32, %arg2: memref<1x2x16xbf16, #tpu.memory_space<vmem>>, %arg3: memref<1x16x1024xbf16, #tpu.memory_space<vmem>>, %arg4: memref<2x1024xf32, #tpu.memory_space<vmem>>, %arg5: memref<1x2x2xf32, #tpu.memory_space<vmem>>, %arg6: memref<2x1024xf32, #tpu.memory_space<vmem>>) attributes {dimension_semantics = [#tpu.dimension_semantics<parallel>, #tpu.dimension_semantics<arbitrary>], iteration_bounds = array<i64: 1, 1>, scalar_prefetch = 0 : i64, scratch_operands = 1 : i64, tpu.core_type = #tpu.core_type<tc>, window_params = [{transform_indices = @transform_0, window_bounds = array<i64: 1, 2, 16>}, {transform_indices = @transform_1, window_bounds = array<i64: 1, 16, 1024>}, {transform_indices = @transform_2, window_bounds = array<i64: 2, 1024>}, {transform_indices = @transform_3, window_bounds = array<i64: 1, 2, 2>}]} {
    %c0_i32 = arith.constant 0 : i32
    %0 = arith.cmpi eq, %arg1, %c0_i32 : i32
    %1 = arith.extui %0 : i1 to i32
    %c0_i32_0 = arith.constant 0 : i32
    %2 = arith.cmpi ne, %1, %c0_i32_0 : i32
    scf.if %2 {
      %cst_12 = arith.constant 0.000000e+00 : f32
      %14 = vector.broadcast %cst_12 : f32 to vector<2x1024xf32>
      %c0_13 = arith.constant 0 : index
      %c0_14 = arith.constant 0 : index
      %15 = vector.load %arg6[%c0_13, %c0_14] : memref<2x1024xf32, #tpu.memory_space<vmem>>, vector<2x1024xf32>
      tpu.vector_store %arg6[%c0_13, %c0_14], %14 {strides = array<i32>} : memref<2x1024xf32, #tpu.memory_space<vmem>>, vector<2x1024xf32>,
    } else {
    }
    %c0 = arith.constant 0 : index
    %c0_1 = arith.constant 0 : index
    %3 = vector.load %arg6[%c0, %c0_1] : memref<2x1024xf32, #tpu.memory_space<vmem>>, vector<2x1024xf32>
    %c0_2 = arith.constant 0 : index
    %c0_3 = arith.constant 0 : index
    %c0_4 = arith.constant 0 : index
    %4 = vector.load %arg2[%c0_2, %c0_3, %c0_4] : memref<1x2x16xbf16, #tpu.memory_space<vmem>>, vector<1x2x16xbf16>
    %5 = vector.shape_cast %4 : vector<1x2x16xbf16> to vector<2x16xbf16>
    %c0_5 = arith.constant 0 : index
    %c0_6 = arith.constant 0 : index
    %c0_7 = arith.constant 0 : index
    %6 = vector.load %arg3[%c0_5, %c0_6, %c0_7] : memref<1x16x1024xbf16, #tpu.memory_space<vmem>>, vector<1x16x1024xbf16>
    %7 = vector.shape_cast %6 : vector<1x16x1024xbf16> to vector<16x1024xbf16>
    %cst = arith.constant dense<0.000000e+00> : vector<2x1024xf32>
    %8 = tpu.matmul %5, %7, %cst {dimension_numbers = #tpu.dot_dimension_numbers<[1], [0], [0], [1], [0, 0, 1, 1], [], []>} : vector<2x16xbf16>, vector<16x1024xbf16>, vector<2x1024xf32> -> vector<2x1024xf32>
    %9 = arith.addf %3, %8 : vector<2x1024xf32>
    %c0_8 = arith.constant 0 : index
    %c0_9 = arith.constant 0 : index
    %10 = vector.load %arg6[%c0_8, %c0_9] : memref<2x1024xf32, #tpu.memory_space<vmem>>, vector<2x1024xf32>
    tpu.vector_store %arg6[%c0_8, %c0_9], %9 {strides = array<i32>} : memref<2x1024xf32, #tpu.memory_space<vmem>>, vector<2x1024xf32>,
    %c0_i32_10 = arith.constant 0 : i32
    %11 = arith.cmpi eq, %arg1, %c0_i32_10 : i32
    %12 = arith.extui %11 : i1 to i32
    %c0_i32_11 = arith.constant 0 : i32
    %13 = arith.cmpi ne, %12, %c0_i32_11 : i32
    scf.if %13 {
      %c0_12 = arith.constant 0 : index
      %c0_13 = arith.constant 0 : index
      %14 = vector.load %arg6[%c0_12, %c0_13] : memref<2x1024xf32, #tpu.memory_space<vmem>>, vector<2x1024xf32>
      %cst_14 = arith.constant dense<0.000000e+00> : vector<2xf32>
      %15 = vector.multi_reduction <add>, %14, %cst_14 [1] : vector<2x1024xf32> to vector<2xf32>
      %16 = vector.shape_cast %15 : vector<2xf32> to vector<2x1xf32>
      %17 = arith.mulf %14, %14 : vector<2x1024xf32>
      %cst_15 = arith.constant dense<0.000000e+00> : vector<2xf32>
      %18 = vector.multi_reduction <add>, %17, %cst_15 [1] : vector<2x1024xf32> to vector<2xf32>
      %19 = vector.shape_cast %18 : vector<2xf32> to vector<2x1xf32>
      %20 = tpu.concatenate %16, %19 in 1 : vector<2x1xf32>, vector<2x1xf32> -> vector<2x2xf32>
      %c0_16 = arith.constant 0 : index
      %c0_17 = arith.constant 0 : index
      %c0_18 = arith.constant 0 : index
      %21 = vector.load %arg5[%c0_16, %c0_17, %c0_18] : memref<1x2x2xf32, #tpu.memory_space<vmem>>, vector<1x2x2xf32>
      %22 = vector.shape_cast %21 : vector<1x2x2xf32> to vector<2x2xf32>
      %23 = vector.shape_cast %20 : vector<2x2xf32> to vector<1x2x2xf32>
      tpu.vector_store %arg5[%c0_16, %c0_17, %c0_18], %23 {strides = array<i32>} : memref<1x2x2xf32, #tpu.memory_space<vmem>>, vector<1x2x2xf32>,
      %c0_19 = arith.constant 0 : index
      %c0_20 = arith.constant 0 : index
      %24 = vector.load %arg4[%c0_19, %c0_20] : memref<2x1024xf32, #tpu.memory_space<vmem>>, vector<2x1024xf32>
      tpu.vector_store %arg4[%c0_19, %c0_20], %14 {strides = array<i32>} : memref<2x1024xf32, #tpu.memory_space<vmem>>, vector<2x1024xf32>,
    } else {
    }
    return
  }
  func.func @transform_0(%arg0: i32, %arg1: i32) -> (i32, i32, i32) {
    %c0_i32 = arith.constant 0 : i32
    %c0_i32_0 = arith.constant 0 : i32
    %c0_i32_1 = arith.constant 0 : i32
    return %arg1, %c0_i32, %c0_i32_0 : i32, i32, i32
  }
  func.func @transform_1(%arg0: i32, %arg1: i32) -> (i32, i32, i32) {
    %c0_i32 = arith.constant 0 : i32
    %c0_i32_0 = arith.constant 0 : i32
    return %arg1, %c0_i32, %arg0 : i32, i32, i32
  }
  func.func @transform_2(%arg0: i32, %arg1: i32) -> (i32, i32) {
    %c0_i32 = arith.constant 0 : i32
    %c0_i32_0 = arith.constant 0 : i32
    return %c0_i32, %arg0 : i32, i32
  }
  func.func @transform_3(%arg0: i32, %arg1: i32) -> (i32, i32, i32) {
    %c0_i32 = arith.constant 0 : i32
    %c0_i32_0 = arith.constant 0 : i32
    %c0_i32_1 = arith.constant 0 : i32
    return %arg0, %c0_i32, %c0_i32_0 : i32, i32, i32
  }
}

module attributes {stable_mosaic.version = 11 : i64} {
  func.func @_affine_act_kernel(%arg0: i32, %arg1: memref<2x1024xf32, #tpu.memory_space<vmem>>, %arg2: memref<1x1024xf32, #tpu.memory_space<vmem>>, %arg3: memref<1x1024xf32, #tpu.memory_space<vmem>>, %arg4: memref<2x1024xbf16, #tpu.memory_space<vmem>>) attributes {dimension_semantics = [#tpu.dimension_semantics<parallel>], iteration_bounds = array<i64: 1>, scalar_prefetch = 0 : i64, scratch_operands = 0 : i64, tpu.core_type = #tpu.core_type<tc>, window_params = [{transform_indices = @transform_0, window_bounds = array<i64: 2, 1024>}, {transform_indices = @transform_1, window_bounds = array<i64: 1, 1024>}, {transform_indices = @transform_2, window_bounds = array<i64: 1, 1024>}, {transform_indices = @transform_3, window_bounds = array<i64: 2, 1024>}]} {
    %c0 = arith.constant 0 : index
    %c0_0 = arith.constant 0 : index
    %0 = vector.load %arg1[%c0, %c0_0] : memref<2x1024xf32, #tpu.memory_space<vmem>>, vector<2x1024xf32>
    %c0_1 = arith.constant 0 : index
    %c0_2 = arith.constant 0 : index
    %1 = vector.load %arg2[%c0_1, %c0_2] : memref<1x1024xf32, #tpu.memory_space<vmem>>, vector<1x1024xf32>
    %2 = vector.broadcast %1 : vector<1x1024xf32> to vector<2x1024xf32>
    %3 = arith.mulf %0, %2 : vector<2x1024xf32>
    %c0_3 = arith.constant 0 : index
    %c0_4 = arith.constant 0 : index
    %4 = vector.load %arg3[%c0_3, %c0_4] : memref<1x1024xf32, #tpu.memory_space<vmem>>, vector<1x1024xf32>
    %5 = vector.broadcast %4 : vector<1x1024xf32> to vector<2x1024xf32>
    %6 = arith.addf %3, %5 : vector<2x1024xf32>
    %cst = arith.constant 0.000000e+00 : f32
    %7 = vector.broadcast %cst : f32 to vector<2x1024xf32>
    %8 = arith.maximumf %6, %7 : vector<2x1024xf32>
    %9 = arith.truncf %8 : vector<2x1024xf32> to vector<2x1024xbf16>
    %c0_5 = arith.constant 0 : index
    %c0_6 = arith.constant 0 : index
    %10 = vector.load %arg4[%c0_5, %c0_6] : memref<2x1024xbf16, #tpu.memory_space<vmem>>, vector<2x1024xbf16>
    tpu.vector_store %arg4[%c0_5, %c0_6], %9 {strides = array<i32>} : memref<2x1024xbf16, #tpu.memory_space<vmem>>, vector<2x1024xbf16>,
    return
  }
  func.func @transform_0(%arg0: i32) -> (i32, i32) {
    %c0_i32 = arith.constant 0 : i32
    %c0_i32_0 = arith.constant 0 : i32
    return %c0_i32, %arg0 : i32, i32
  }
  func.func @transform_1(%arg0: i32) -> (i32, i32) {
    %c0_i32 = arith.constant 0 : i32
    %c0_i32_0 = arith.constant 0 : i32
    return %c0_i32, %arg0 : i32, i32
  }
  func.func @transform_2(%arg0: i32) -> (i32, i32) {
    %c0_i32 = arith.constant 0 : i32
    %c0_i32_0 = arith.constant 0 : i32
    return %c0_i32, %arg0 : i32, i32
  }
  func.func @transform_3(%arg0: i32) -> (i32, i32) {
    %c0_i32 = arith.constant 0 : i32
    %c0_i32_0 = arith.constant 0 : i32
    return %c0_i32, %arg0 : i32, i32
  }
}

module attributes {stable_mosaic.version = 11 : i64} {
  func.func @_shift_matmul_kernel(%arg0: i32, %arg1: i32, %arg2: memref<1x128x64xbf16, #tpu.memory_space<vmem>>, %arg3: memref<1x64x128xbf16, #tpu.memory_space<vmem>>, %arg4: memref<128x128xbf16, #tpu.memory_space<vmem>>, %arg5: memref<1x128x2xf32, #tpu.memory_space<vmem>>, %arg6: memref<128x128xf32, #tpu.memory_space<vmem>>) attributes {dimension_semantics = [#tpu.dimension_semantics<parallel>, #tpu.dimension_semantics<arbitrary>], iteration_bounds = array<i64: 1, 9>, scalar_prefetch = 0 : i64, scratch_operands = 1 : i64, tpu.core_type = #tpu.core_type<tc>, window_params = [{transform_indices = @transform_0, window_bounds = array<i64: 1, 128, 64>}, {transform_indices = @transform_1, window_bounds = array<i64: 1, 64, 128>}, {transform_indices = @transform_2, window_bounds = array<i64: 128, 128>}, {transform_indices = @transform_3, window_bounds = array<i64: 1, 128, 2>}]} {
    %c0_i32 = arith.constant 0 : i32
    %0 = arith.cmpi eq, %arg1, %c0_i32 : i32
    %1 = arith.extui %0 : i1 to i32
    %c0_i32_0 = arith.constant 0 : i32
    %2 = arith.cmpi ne, %1, %c0_i32_0 : i32
    scf.if %2 {
      %cst_11 = arith.constant 0.000000e+00 : f32
      %14 = vector.broadcast %cst_11 : f32 to vector<128x128xf32>
      %c0_12 = arith.constant 0 : index
      %c0_13 = arith.constant 0 : index
      %15 = vector.load %arg6[%c0_12, %c0_13] : memref<128x128xf32, #tpu.memory_space<vmem>>, vector<128x128xf32>
      tpu.vector_store %arg6[%c0_12, %c0_13], %14 {strides = array<i32>} : memref<128x128xf32, #tpu.memory_space<vmem>>, vector<128x128xf32>,
    } else {
    }
    %c0 = arith.constant 0 : index
    %c0_1 = arith.constant 0 : index
    %3 = vector.load %arg6[%c0, %c0_1] : memref<128x128xf32, #tpu.memory_space<vmem>>, vector<128x128xf32>
    %c0_2 = arith.constant 0 : index
    %c0_3 = arith.constant 0 : index
    %c0_4 = arith.constant 0 : index
    %4 = vector.load %arg2[%c0_2, %c0_3, %c0_4] : memref<1x128x64xbf16, #tpu.memory_space<vmem>>, vector<1x128x64xbf16>
    %5 = vector.shape_cast %4 : vector<1x128x64xbf16> to vector<128x64xbf16>
    %c0_5 = arith.constant 0 : index
    %c0_6 = arith.constant 0 : index
    %c0_7 = arith.constant 0 : index
    %6 = vector.load %arg3[%c0_5, %c0_6, %c0_7] : memref<1x64x128xbf16, #tpu.memory_space<vmem>>, vector<1x64x128xbf16>
    %7 = vector.shape_cast %6 : vector<1x64x128xbf16> to vector<64x128xbf16>
    %cst = arith.constant dense<0.000000e+00> : vector<128x128xf32>
    %8 = tpu.matmul %5, %7, %cst {dimension_numbers = #tpu.dot_dimension_numbers<[1], [0], [0], [1], [0, 0, 1, 1], [], []>} : vector<128x64xbf16>, vector<64x128xbf16>, vector<128x128xf32> -> vector<128x128xf32>
    %9 = arith.addf %3, %8 : vector<128x128xf32>
    %c0_8 = arith.constant 0 : index
    %c0_9 = arith.constant 0 : index
    %10 = vector.load %arg6[%c0_8, %c0_9] : memref<128x128xf32, #tpu.memory_space<vmem>>, vector<128x128xf32>
    tpu.vector_store %arg6[%c0_8, %c0_9], %9 {strides = array<i32>} : memref<128x128xf32, #tpu.memory_space<vmem>>, vector<128x128xf32>,
    %c8_i32 = arith.constant 8 : i32
    %11 = arith.cmpi eq, %arg1, %c8_i32 : i32
    %12 = arith.extui %11 : i1 to i32
    %c0_i32_10 = arith.constant 0 : i32
    %13 = arith.cmpi ne, %12, %c0_i32_10 : i32
    scf.if %13 {
      %c0_11 = arith.constant 0 : index
      %c0_12 = arith.constant 0 : index
      %14 = vector.load %arg6[%c0_11, %c0_12] : memref<128x128xf32, #tpu.memory_space<vmem>>, vector<128x128xf32>
      %cst_13 = arith.constant dense<0.000000e+00> : vector<128xf32>
      %15 = vector.multi_reduction <add>, %14, %cst_13 [1] : vector<128x128xf32> to vector<128xf32>
      %16 = vector.shape_cast %15 : vector<128xf32> to vector<128x1xf32>
      %17 = arith.mulf %14, %14 : vector<128x128xf32>
      %cst_14 = arith.constant dense<0.000000e+00> : vector<128xf32>
      %18 = vector.multi_reduction <add>, %17, %cst_14 [1] : vector<128x128xf32> to vector<128xf32>
      %19 = vector.shape_cast %18 : vector<128xf32> to vector<128x1xf32>
      %20 = tpu.concatenate %16, %19 in 1 : vector<128x1xf32>, vector<128x1xf32> -> vector<128x2xf32>
      %c0_15 = arith.constant 0 : index
      %c0_16 = arith.constant 0 : index
      %c0_17 = arith.constant 0 : index
      %21 = vector.load %arg5[%c0_15, %c0_16, %c0_17] : memref<1x128x2xf32, #tpu.memory_space<vmem>>, vector<1x128x2xf32>
      %22 = vector.shape_cast %21 : vector<1x128x2xf32> to vector<128x2xf32>
      %23 = vector.shape_cast %20 : vector<128x2xf32> to vector<1x128x2xf32>
      tpu.vector_store %arg5[%c0_15, %c0_16, %c0_17], %23 {strides = array<i32>} : memref<1x128x2xf32, #tpu.memory_space<vmem>>, vector<1x128x2xf32>,
      %24 = arith.truncf %14 : vector<128x128xf32> to vector<128x128xbf16>
      %c0_18 = arith.constant 0 : index
      %c0_19 = arith.constant 0 : index
      %25 = vector.load %arg4[%c0_18, %c0_19] : memref<128x128xbf16, #tpu.memory_space<vmem>>, vector<128x128xbf16>
      tpu.vector_store %arg4[%c0_18, %c0_19], %24 {strides = array<i32>} : memref<128x128xbf16, #tpu.memory_space<vmem>>, vector<128x128xbf16>,
    } else {
    }
    return
  }
  func.func @transform_0(%arg0: i32, %arg1: i32) -> (i32, i32, i32) {
    %c0_i32 = arith.constant 0 : i32
    %c0_i32_0 = arith.constant 0 : i32
    %c0_i32_1 = arith.constant 0 : i32
    return %arg1, %c0_i32, %c0_i32_0 : i32, i32, i32
  }
  func.func @transform_1(%arg0: i32, %arg1: i32) -> (i32, i32, i32) {
    %c0_i32 = arith.constant 0 : i32
    %c0_i32_0 = arith.constant 0 : i32
    return %arg1, %c0_i32, %arg0 : i32, i32, i32
  }
  func.func @transform_2(%arg0: i32, %arg1: i32) -> (i32, i32) {
    %c0_i32 = arith.constant 0 : i32
    %c0_i32_0 = arith.constant 0 : i32
    return %c0_i32, %arg0 : i32, i32
  }
  func.func @transform_3(%arg0: i32, %arg1: i32) -> (i32, i32, i32) {
    %c0_i32 = arith.constant 0 : i32
    %c0_i32_0 = arith.constant 0 : i32
    %c0_i32_1 = arith.constant 0 : i32
    return %arg0, %c0_i32, %c0_i32_0 : i32, i32, i32
  }
}

module attributes {stable_mosaic.version = 11 : i64} {
  func.func @_affine_act_kernel(%arg0: i32, %arg1: memref<128x128xbf16, #tpu.memory_space<vmem>>, %arg2: memref<128x1xf32, #tpu.memory_space<vmem>>, %arg3: memref<128x1xf32, #tpu.memory_space<vmem>>, %arg4: memref<128x128xbf16, #tpu.memory_space<vmem>>) attributes {dimension_semantics = [#tpu.dimension_semantics<parallel>], iteration_bounds = array<i64: 1>, scalar_prefetch = 0 : i64, scratch_operands = 0 : i64, tpu.core_type = #tpu.core_type<tc>, window_params = [{transform_indices = @transform_0, window_bounds = array<i64: 128, 128>}, {pipeline_mode = #tpu.pipeline_mode<synchronous>, transform_indices = @transform_1, window_bounds = array<i64: 128, 1>}, {pipeline_mode = #tpu.pipeline_mode<synchronous>, transform_indices = @transform_2, window_bounds = array<i64: 128, 1>}, {transform_indices = @transform_3, window_bounds = array<i64: 128, 128>}]} {
    %c0 = arith.constant 0 : index
    %c0_0 = arith.constant 0 : index
    %0 = vector.load %arg1[%c0, %c0_0] : memref<128x128xbf16, #tpu.memory_space<vmem>>, vector<128x128xbf16>
    %1 = arith.extf %0 : vector<128x128xbf16> to vector<128x128xf32>
    %c0_1 = arith.constant 0 : index
    %c0_2 = arith.constant 0 : index
    %2 = vector.load %arg2[%c0_1, %c0_2] : memref<128x1xf32, #tpu.memory_space<vmem>>, vector<128x1xf32>
    %3 = vector.broadcast %2 : vector<128x1xf32> to vector<128x128xf32>
    %4 = arith.mulf %1, %3 : vector<128x128xf32>
    %c0_3 = arith.constant 0 : index
    %c0_4 = arith.constant 0 : index
    %5 = vector.load %arg3[%c0_3, %c0_4] : memref<128x1xf32, #tpu.memory_space<vmem>>, vector<128x1xf32>
    %6 = vector.broadcast %5 : vector<128x1xf32> to vector<128x128xf32>
    %7 = arith.addf %4, %6 : vector<128x128xf32>
    %cst = arith.constant 0.000000e+00 : f32
    %8 = vector.broadcast %cst : f32 to vector<128x128xf32>
    %9 = arith.maximumf %7, %8 : vector<128x128xf32>
    %10 = arith.truncf %9 : vector<128x128xf32> to vector<128x128xbf16>
    %c0_5 = arith.constant 0 : index
    %c0_6 = arith.constant 0 : index
    %11 = vector.load %arg4[%c0_5, %c0_6] : memref<128x128xbf16, #tpu.memory_space<vmem>>, vector<128x128xbf16>
    tpu.vector_store %arg4[%c0_5, %c0_6], %10 {strides = array<i32>} : memref<128x128xbf16, #tpu.memory_space<vmem>>, vector<128x128xbf16>,
    return
  }
  func.func @transform_0(%arg0: i32) -> (i32, i32) {
    %c0_i32 = arith.constant 0 : i32
    %c0_i32_0 = arith.constant 0 : i32
    return %c0_i32, %arg0 : i32, i32
  }
  func.func @transform_1(%arg0: i32) -> (i32, i32) {
    %c0_i32 = arith.constant 0 : i32
    %c0_i32_0 = arith.constant 0 : i32
    %c0_i32_1 = arith.constant 0 : i32
    return %c0_i32, %c0_i32_0 : i32, i32
  }
  func.func @transform_2(%arg0: i32) -> (i32, i32) {
    %c0_i32 = arith.constant 0 : i32
    %c0_i32_0 = arith.constant 0 : i32
    %c0_i32_1 = arith.constant 0 : i32
    return %c0_i32, %c0_i32_0 : i32, i32
  }
  func.func @transform_3(%arg0: i32) -> (i32, i32) {
    %c0_i32 = arith.constant 0 : i32
    %c0_i32_0 = arith.constant 0 : i32
    return %c0_i32, %arg0 : i32, i32
  }
}

module attributes {stable_mosaic.version = 11 : i64} {
  func.func @_shift_matmul_kernel(%arg0: i32, %arg1: i32, %arg2: memref<1x64x32xbf16, #tpu.memory_space<vmem>>, %arg3: memref<1x32x128xbf16, #tpu.memory_space<vmem>>, %arg4: memref<64x128xbf16, #tpu.memory_space<vmem>>, %arg5: memref<1x64x2xf32, #tpu.memory_space<vmem>>, %arg6: memref<64x128xf32, #tpu.memory_space<vmem>>) attributes {dimension_semantics = [#tpu.dimension_semantics<parallel>, #tpu.dimension_semantics<arbitrary>], iteration_bounds = array<i64: 1, 9>, scalar_prefetch = 0 : i64, scratch_operands = 1 : i64, tpu.core_type = #tpu.core_type<tc>, window_params = [{transform_indices = @transform_0, window_bounds = array<i64: 1, 64, 32>}, {transform_indices = @transform_1, window_bounds = array<i64: 1, 32, 128>}, {transform_indices = @transform_2, window_bounds = array<i64: 64, 128>}, {transform_indices = @transform_3, window_bounds = array<i64: 1, 64, 2>}]} {
    %c0_i32 = arith.constant 0 : i32
    %0 = arith.cmpi eq, %arg1, %c0_i32 : i32
    %1 = arith.extui %0 : i1 to i32
    %c0_i32_0 = arith.constant 0 : i32
    %2 = arith.cmpi ne, %1, %c0_i32_0 : i32
    scf.if %2 {
      %cst_11 = arith.constant 0.000000e+00 : f32
      %14 = vector.broadcast %cst_11 : f32 to vector<64x128xf32>
      %c0_12 = arith.constant 0 : index
      %c0_13 = arith.constant 0 : index
      %15 = vector.load %arg6[%c0_12, %c0_13] : memref<64x128xf32, #tpu.memory_space<vmem>>, vector<64x128xf32>
      tpu.vector_store %arg6[%c0_12, %c0_13], %14 {strides = array<i32>} : memref<64x128xf32, #tpu.memory_space<vmem>>, vector<64x128xf32>,
    } else {
    }
    %c0 = arith.constant 0 : index
    %c0_1 = arith.constant 0 : index
    %3 = vector.load %arg6[%c0, %c0_1] : memref<64x128xf32, #tpu.memory_space<vmem>>, vector<64x128xf32>
    %c0_2 = arith.constant 0 : index
    %c0_3 = arith.constant 0 : index
    %c0_4 = arith.constant 0 : index
    %4 = vector.load %arg2[%c0_2, %c0_3, %c0_4] : memref<1x64x32xbf16, #tpu.memory_space<vmem>>, vector<1x64x32xbf16>
    %5 = vector.shape_cast %4 : vector<1x64x32xbf16> to vector<64x32xbf16>
    %c0_5 = arith.constant 0 : index
    %c0_6 = arith.constant 0 : index
    %c0_7 = arith.constant 0 : index
    %6 = vector.load %arg3[%c0_5, %c0_6, %c0_7] : memref<1x32x128xbf16, #tpu.memory_space<vmem>>, vector<1x32x128xbf16>
    %7 = vector.shape_cast %6 : vector<1x32x128xbf16> to vector<32x128xbf16>
    %cst = arith.constant dense<0.000000e+00> : vector<64x128xf32>
    %8 = tpu.matmul %5, %7, %cst {dimension_numbers = #tpu.dot_dimension_numbers<[1], [0], [0], [1], [0, 0, 1, 1], [], []>} : vector<64x32xbf16>, vector<32x128xbf16>, vector<64x128xf32> -> vector<64x128xf32>
    %9 = arith.addf %3, %8 : vector<64x128xf32>
    %c0_8 = arith.constant 0 : index
    %c0_9 = arith.constant 0 : index
    %10 = vector.load %arg6[%c0_8, %c0_9] : memref<64x128xf32, #tpu.memory_space<vmem>>, vector<64x128xf32>
    tpu.vector_store %arg6[%c0_8, %c0_9], %9 {strides = array<i32>} : memref<64x128xf32, #tpu.memory_space<vmem>>, vector<64x128xf32>,
    %c8_i32 = arith.constant 8 : i32
    %11 = arith.cmpi eq, %arg1, %c8_i32 : i32
    %12 = arith.extui %11 : i1 to i32
    %c0_i32_10 = arith.constant 0 : i32
    %13 = arith.cmpi ne, %12, %c0_i32_10 : i32
    scf.if %13 {
      %c0_11 = arith.constant 0 : index
      %c0_12 = arith.constant 0 : index
      %14 = vector.load %arg6[%c0_11, %c0_12] : memref<64x128xf32, #tpu.memory_space<vmem>>, vector<64x128xf32>
      %cst_13 = arith.constant dense<0.000000e+00> : vector<64xf32>
      %15 = vector.multi_reduction <add>, %14, %cst_13 [1] : vector<64x128xf32> to vector<64xf32>
      %16 = vector.shape_cast %15 : vector<64xf32> to vector<64x1xf32>
      %17 = arith.mulf %14, %14 : vector<64x128xf32>
      %cst_14 = arith.constant dense<0.000000e+00> : vector<64xf32>
      %18 = vector.multi_reduction <add>, %17, %cst_14 [1] : vector<64x128xf32> to vector<64xf32>
      %19 = vector.shape_cast %18 : vector<64xf32> to vector<64x1xf32>
      %20 = tpu.concatenate %16, %19 in 1 : vector<64x1xf32>, vector<64x1xf32> -> vector<64x2xf32>
      %c0_15 = arith.constant 0 : index
      %c0_16 = arith.constant 0 : index
      %c0_17 = arith.constant 0 : index
      %21 = vector.load %arg5[%c0_15, %c0_16, %c0_17] : memref<1x64x2xf32, #tpu.memory_space<vmem>>, vector<1x64x2xf32>
      %22 = vector.shape_cast %21 : vector<1x64x2xf32> to vector<64x2xf32>
      %23 = vector.shape_cast %20 : vector<64x2xf32> to vector<1x64x2xf32>
      tpu.vector_store %arg5[%c0_15, %c0_16, %c0_17], %23 {strides = array<i32>} : memref<1x64x2xf32, #tpu.memory_space<vmem>>, vector<1x64x2xf32>,
      %24 = arith.truncf %14 : vector<64x128xf32> to vector<64x128xbf16>
      %c0_18 = arith.constant 0 : index
      %c0_19 = arith.constant 0 : index
      %25 = vector.load %arg4[%c0_18, %c0_19] : memref<64x128xbf16, #tpu.memory_space<vmem>>, vector<64x128xbf16>
      tpu.vector_store %arg4[%c0_18, %c0_19], %24 {strides = array<i32>} : memref<64x128xbf16, #tpu.memory_space<vmem>>, vector<64x128xbf16>,
    } else {
    }
    return
  }
  func.func @transform_0(%arg0: i32, %arg1: i32) -> (i32, i32, i32) {
    %c0_i32 = arith.constant 0 : i32
    %c0_i32_0 = arith.constant 0 : i32
    %c0_i32_1 = arith.constant 0 : i32
    return %arg1, %c0_i32, %c0_i32_0 : i32, i32, i32
  }
  func.func @transform_1(%arg0: i32, %arg1: i32) -> (i32, i32, i32) {
    %c0_i32 = arith.constant 0 : i32
    %c0_i32_0 = arith.constant 0 : i32
    return %arg1, %c0_i32, %arg0 : i32, i32, i32
  }
  func.func @transform_2(%arg0: i32, %arg1: i32) -> (i32, i32) {
    %c0_i32 = arith.constant 0 : i32
    %c0_i32_0 = arith.constant 0 : i32
    return %c0_i32, %arg0 : i32, i32
  }
  func.func @transform_3(%arg0: i32, %arg1: i32) -> (i32, i32, i32) {
    %c0_i32 = arith.constant 0 : i32
    %c0_i32_0 = arith.constant 0 : i32
    %c0_i32_1 = arith.constant 0 : i32
    return %arg0, %c0_i32, %c0_i32_0 : i32, i32, i32
  }
}

module attributes {stable_mosaic.version = 11 : i64} {
  func.func @_affine_act_kernel(%arg0: i32, %arg1: memref<64x128xbf16, #tpu.memory_space<vmem>>, %arg2: memref<64x1xf32, #tpu.memory_space<vmem>>, %arg3: memref<64x1xf32, #tpu.memory_space<vmem>>, %arg4: memref<64x128xbf16, #tpu.memory_space<vmem>>) attributes {dimension_semantics = [#tpu.dimension_semantics<parallel>], iteration_bounds = array<i64: 1>, scalar_prefetch = 0 : i64, scratch_operands = 0 : i64, tpu.core_type = #tpu.core_type<tc>, window_params = [{transform_indices = @transform_0, window_bounds = array<i64: 64, 128>}, {pipeline_mode = #tpu.pipeline_mode<synchronous>, transform_indices = @transform_1, window_bounds = array<i64: 64, 1>}, {pipeline_mode = #tpu.pipeline_mode<synchronous>, transform_indices = @transform_2, window_bounds = array<i64: 64, 1>}, {transform_indices = @transform_3, window_bounds = array<i64: 64, 128>}]} {
    %c0 = arith.constant 0 : index
    %c0_0 = arith.constant 0 : index
    %0 = vector.load %arg1[%c0, %c0_0] : memref<64x128xbf16, #tpu.memory_space<vmem>>, vector<64x128xbf16>
    %1 = arith.extf %0 : vector<64x128xbf16> to vector<64x128xf32>
    %c0_1 = arith.constant 0 : index
    %c0_2 = arith.constant 0 : index
    %2 = vector.load %arg2[%c0_1, %c0_2] : memref<64x1xf32, #tpu.memory_space<vmem>>, vector<64x1xf32>
    %3 = vector.broadcast %2 : vector<64x1xf32> to vector<64x128xf32>
    %4 = arith.mulf %1, %3 : vector<64x128xf32>
    %c0_3 = arith.constant 0 : index
    %c0_4 = arith.constant 0 : index
    %5 = vector.load %arg3[%c0_3, %c0_4] : memref<64x1xf32, #tpu.memory_space<vmem>>, vector<64x1xf32>
    %6 = vector.broadcast %5 : vector<64x1xf32> to vector<64x128xf32>
    %7 = arith.addf %4, %6 : vector<64x128xf32>
    %cst = arith.constant 0.000000e+00 : f32
    %8 = vector.broadcast %cst : f32 to vector<64x128xf32>
    %9 = arith.maximumf %7, %8 : vector<64x128xf32>
    %10 = arith.truncf %9 : vector<64x128xf32> to vector<64x128xbf16>
    %c0_5 = arith.constant 0 : index
    %c0_6 = arith.constant 0 : index
    %11 = vector.load %arg4[%c0_5, %c0_6] : memref<64x128xbf16, #tpu.memory_space<vmem>>, vector<64x128xbf16>
    tpu.vector_store %arg4[%c0_5, %c0_6], %10 {strides = array<i32>} : memref<64x128xbf16, #tpu.memory_space<vmem>>, vector<64x128xbf16>,
    return
  }
  func.func @transform_0(%arg0: i32) -> (i32, i32) {
    %c0_i32 = arith.constant 0 : i32
    %c0_i32_0 = arith.constant 0 : i32
    return %c0_i32, %arg0 : i32, i32
  }
  func.func @transform_1(%arg0: i32) -> (i32, i32) {
    %c0_i32 = arith.constant 0 : i32
    %c0_i32_0 = arith.constant 0 : i32
    %c0_i32_1 = arith.constant 0 : i32
    return %c0_i32, %c0_i32_0 : i32, i32
  }
  func.func @transform_2(%arg0: i32) -> (i32, i32) {
    %c0_i32 = arith.constant 0 : i32
    %c0_i32_0 = arith.constant 0 : i32
    %c0_i32_1 = arith.constant 0 : i32
    return %c0_i32, %c0_i32_0 : i32, i32
  }
  func.func @transform_3(%arg0: i32) -> (i32, i32) {
    %c0_i32 = arith.constant 0 : i32
    %c0_i32_0 = arith.constant 0 : i32
    return %c0_i32, %arg0 : i32, i32
  }
}

module attributes {stable_mosaic.version = 11 : i64} {
  func.func @_shift_matmul_kernel(%arg0: i32, %arg1: i32, %arg2: memref<1x32x16xbf16, #tpu.memory_space<vmem>>, %arg3: memref<1x16x512xbf16, #tpu.memory_space<vmem>>, %arg4: memref<32x512xbf16, #tpu.memory_space<vmem>>, %arg5: memref<1x32x2xf32, #tpu.memory_space<vmem>>, %arg6: memref<32x512xf32, #tpu.memory_space<vmem>>) attributes {dimension_semantics = [#tpu.dimension_semantics<parallel>, #tpu.dimension_semantics<arbitrary>], iteration_bounds = array<i64: 1, 9>, scalar_prefetch = 0 : i64, scratch_operands = 1 : i64, tpu.core_type = #tpu.core_type<tc>, window_params = [{transform_indices = @transform_0, window_bounds = array<i64: 1, 32, 16>}, {transform_indices = @transform_1, window_bounds = array<i64: 1, 16, 512>}, {transform_indices = @transform_2, window_bounds = array<i64: 32, 512>}, {transform_indices = @transform_3, window_bounds = array<i64: 1, 32, 2>}]} {
    %c0_i32 = arith.constant 0 : i32
    %0 = arith.cmpi eq, %arg1, %c0_i32 : i32
    %1 = arith.extui %0 : i1 to i32
    %c0_i32_0 = arith.constant 0 : i32
    %2 = arith.cmpi ne, %1, %c0_i32_0 : i32
    scf.if %2 {
      %cst_11 = arith.constant 0.000000e+00 : f32
      %14 = vector.broadcast %cst_11 : f32 to vector<32x512xf32>
      %c0_12 = arith.constant 0 : index
      %c0_13 = arith.constant 0 : index
      %15 = vector.load %arg6[%c0_12, %c0_13] : memref<32x512xf32, #tpu.memory_space<vmem>>, vector<32x512xf32>
      tpu.vector_store %arg6[%c0_12, %c0_13], %14 {strides = array<i32>} : memref<32x512xf32, #tpu.memory_space<vmem>>, vector<32x512xf32>,
    } else {
    }
    %c0 = arith.constant 0 : index
    %c0_1 = arith.constant 0 : index
    %3 = vector.load %arg6[%c0, %c0_1] : memref<32x512xf32, #tpu.memory_space<vmem>>, vector<32x512xf32>
    %c0_2 = arith.constant 0 : index
    %c0_3 = arith.constant 0 : index
    %c0_4 = arith.constant 0 : index
    %4 = vector.load %arg2[%c0_2, %c0_3, %c0_4] : memref<1x32x16xbf16, #tpu.memory_space<vmem>>, vector<1x32x16xbf16>
    %5 = vector.shape_cast %4 : vector<1x32x16xbf16> to vector<32x16xbf16>
    %c0_5 = arith.constant 0 : index
    %c0_6 = arith.constant 0 : index
    %c0_7 = arith.constant 0 : index
    %6 = vector.load %arg3[%c0_5, %c0_6, %c0_7] : memref<1x16x512xbf16, #tpu.memory_space<vmem>>, vector<1x16x512xbf16>
    %7 = vector.shape_cast %6 : vector<1x16x512xbf16> to vector<16x512xbf16>
    %cst = arith.constant dense<0.000000e+00> : vector<32x512xf32>
    %8 = tpu.matmul %5, %7, %cst {dimension_numbers = #tpu.dot_dimension_numbers<[1], [0], [0], [1], [0, 0, 1, 1], [], []>} : vector<32x16xbf16>, vector<16x512xbf16>, vector<32x512xf32> -> vector<32x512xf32>
    %9 = arith.addf %3, %8 : vector<32x512xf32>
    %c0_8 = arith.constant 0 : index
    %c0_9 = arith.constant 0 : index
    %10 = vector.load %arg6[%c0_8, %c0_9] : memref<32x512xf32, #tpu.memory_space<vmem>>, vector<32x512xf32>
    tpu.vector_store %arg6[%c0_8, %c0_9], %9 {strides = array<i32>} : memref<32x512xf32, #tpu.memory_space<vmem>>, vector<32x512xf32>,
    %c8_i32 = arith.constant 8 : i32
    %11 = arith.cmpi eq, %arg1, %c8_i32 : i32
    %12 = arith.extui %11 : i1 to i32
    %c0_i32_10 = arith.constant 0 : i32
    %13 = arith.cmpi ne, %12, %c0_i32_10 : i32
    scf.if %13 {
      %c0_11 = arith.constant 0 : index
      %c0_12 = arith.constant 0 : index
      %14 = vector.load %arg6[%c0_11, %c0_12] : memref<32x512xf32, #tpu.memory_space<vmem>>, vector<32x512xf32>
      %cst_13 = arith.constant dense<0.000000e+00> : vector<32xf32>
      %15 = vector.multi_reduction <add>, %14, %cst_13 [1] : vector<32x512xf32> to vector<32xf32>
      %16 = vector.shape_cast %15 : vector<32xf32> to vector<32x1xf32>
      %17 = arith.mulf %14, %14 : vector<32x512xf32>
      %cst_14 = arith.constant dense<0.000000e+00> : vector<32xf32>
      %18 = vector.multi_reduction <add>, %17, %cst_14 [1] : vector<32x512xf32> to vector<32xf32>
      %19 = vector.shape_cast %18 : vector<32xf32> to vector<32x1xf32>
      %20 = tpu.concatenate %16, %19 in 1 : vector<32x1xf32>, vector<32x1xf32> -> vector<32x2xf32>
      %c0_15 = arith.constant 0 : index
      %c0_16 = arith.constant 0 : index
      %c0_17 = arith.constant 0 : index
      %21 = vector.load %arg5[%c0_15, %c0_16, %c0_17] : memref<1x32x2xf32, #tpu.memory_space<vmem>>, vector<1x32x2xf32>
      %22 = vector.shape_cast %21 : vector<1x32x2xf32> to vector<32x2xf32>
      %23 = vector.shape_cast %20 : vector<32x2xf32> to vector<1x32x2xf32>
      tpu.vector_store %arg5[%c0_15, %c0_16, %c0_17], %23 {strides = array<i32>} : memref<1x32x2xf32, #tpu.memory_space<vmem>>, vector<1x32x2xf32>,
      %24 = arith.truncf %14 : vector<32x512xf32> to vector<32x512xbf16>
      %c0_18 = arith.constant 0 : index
      %c0_19 = arith.constant 0 : index
      %25 = vector.load %arg4[%c0_18, %c0_19] : memref<32x512xbf16, #tpu.memory_space<vmem>>, vector<32x512xbf16>
      tpu.vector_store %arg4[%c0_18, %c0_19], %24 {strides = array<i32>} : memref<32x512xbf16, #tpu.memory_space<vmem>>, vector<32x512xbf16>,
    } else {
    }
    return
  }
  func.func @transform_0(%arg0: i32, %arg1: i32) -> (i32, i32, i32) {
    %c0_i32 = arith.constant 0 : i32
    %c0_i32_0 = arith.constant 0 : i32
    %c0_i32_1 = arith.constant 0 : i32
    return %arg1, %c0_i32, %c0_i32_0 : i32, i32, i32
  }
  func.func @transform_1(%arg0: i32, %arg1: i32) -> (i32, i32, i32) {
    %c0_i32 = arith.constant 0 : i32
    %c0_i32_0 = arith.constant 0 : i32
    return %arg1, %c0_i32, %arg0 : i32, i32, i32
  }
  func.func @transform_2(%arg0: i32, %arg1: i32) -> (i32, i32) {
    %c0_i32 = arith.constant 0 : i32
    %c0_i32_0 = arith.constant 0 : i32
    return %c0_i32, %arg0 : i32, i32
  }
  func.func @transform_3(%arg0: i32, %arg1: i32) -> (i32, i32, i32) {
    %c0_i32 = arith.constant 0 : i32
    %c0_i32_0 = arith.constant 0 : i32
    %c0_i32_1 = arith.constant 0 : i32
    return %arg0, %c0_i32, %c0_i32_0 : i32, i32, i32
  }
}

module attributes {stable_mosaic.version = 11 : i64} {
  func.func @_affine_act_kernel(%arg0: i32, %arg1: memref<32x512xbf16, #tpu.memory_space<vmem>>, %arg2: memref<32x1xf32, #tpu.memory_space<vmem>>, %arg3: memref<32x1xf32, #tpu.memory_space<vmem>>, %arg4: memref<32x512xbf16, #tpu.memory_space<vmem>>) attributes {dimension_semantics = [#tpu.dimension_semantics<parallel>], iteration_bounds = array<i64: 1>, scalar_prefetch = 0 : i64, scratch_operands = 0 : i64, tpu.core_type = #tpu.core_type<tc>, window_params = [{transform_indices = @transform_0, window_bounds = array<i64: 32, 512>}, {pipeline_mode = #tpu.pipeline_mode<synchronous>, transform_indices = @transform_1, window_bounds = array<i64: 32, 1>}, {pipeline_mode = #tpu.pipeline_mode<synchronous>, transform_indices = @transform_2, window_bounds = array<i64: 32, 1>}, {transform_indices = @transform_3, window_bounds = array<i64: 32, 512>}]} {
    %c0 = arith.constant 0 : index
    %c0_0 = arith.constant 0 : index
    %0 = vector.load %arg1[%c0, %c0_0] : memref<32x512xbf16, #tpu.memory_space<vmem>>, vector<32x512xbf16>
    %1 = arith.extf %0 : vector<32x512xbf16> to vector<32x512xf32>
    %c0_1 = arith.constant 0 : index
    %c0_2 = arith.constant 0 : index
    %2 = vector.load %arg2[%c0_1, %c0_2] : memref<32x1xf32, #tpu.memory_space<vmem>>, vector<32x1xf32>
    %3 = vector.broadcast %2 : vector<32x1xf32> to vector<32x512xf32>
    %4 = arith.mulf %1, %3 : vector<32x512xf32>
    %c0_3 = arith.constant 0 : index
    %c0_4 = arith.constant 0 : index
    %5 = vector.load %arg3[%c0_3, %c0_4] : memref<32x1xf32, #tpu.memory_space<vmem>>, vector<32x1xf32>
    %6 = vector.broadcast %5 : vector<32x1xf32> to vector<32x512xf32>
    %7 = arith.addf %4, %6 : vector<32x512xf32>
    %cst = arith.constant 0.000000e+00 : f32
    %8 = vector.broadcast %cst : f32 to vector<32x512xf32>
    %9 = arith.maximumf %7, %8 : vector<32x512xf32>
    %10 = arith.truncf %9 : vector<32x512xf32> to vector<32x512xbf16>
    %c0_5 = arith.constant 0 : index
    %c0_6 = arith.constant 0 : index
    %11 = vector.load %arg4[%c0_5, %c0_6] : memref<32x512xbf16, #tpu.memory_space<vmem>>, vector<32x512xbf16>
    tpu.vector_store %arg4[%c0_5, %c0_6], %10 {strides = array<i32>} : memref<32x512xbf16, #tpu.memory_space<vmem>>, vector<32x512xbf16>,
    return
  }
  func.func @transform_0(%arg0: i32) -> (i32, i32) {
    %c0_i32 = arith.constant 0 : i32
    %c0_i32_0 = arith.constant 0 : i32
    return %c0_i32, %arg0 : i32, i32
  }
  func.func @transform_1(%arg0: i32) -> (i32, i32) {
    %c0_i32 = arith.constant 0 : i32
    %c0_i32_0 = arith.constant 0 : i32
    %c0_i32_1 = arith.constant 0 : i32
    return %c0_i32, %c0_i32_0 : i32, i32
  }
  func.func @transform_2(%arg0: i32) -> (i32, i32) {
    %c0_i32 = arith.constant 0 : i32
    %c0_i32_0 = arith.constant 0 : i32
    %c0_i32_1 = arith.constant 0 : i32
    return %c0_i32, %c0_i32_0 : i32, i32
  }
  func.func @transform_3(%arg0: i32) -> (i32, i32) {
    %c0_i32 = arith.constant 0 : i32
    %c0_i32_0 = arith.constant 0 : i32
    return %c0_i32, %arg0 : i32, i32
  }
}

module attributes {stable_mosaic.version = 11 : i64} {
  func.func @_shift_matmul_kernel(%arg0: i32, %arg1: i32, %arg2: memref<1x12x8xbf16, #tpu.memory_space<vmem>>, %arg3: memref<1x8x1024xbf16, #tpu.memory_space<vmem>>, %arg4: memref<12x1024xf32, #tpu.memory_space<vmem>>, %arg5: memref<1x12x2xf32, #tpu.memory_space<vmem>>, %arg6: memref<12x1024xf32, #tpu.memory_space<vmem>>) attributes {dimension_semantics = [#tpu.dimension_semantics<parallel>, #tpu.dimension_semantics<arbitrary>], iteration_bounds = array<i64: 2, 9>, scalar_prefetch = 0 : i64, scratch_operands = 1 : i64, tpu.core_type = #tpu.core_type<tc>, window_params = [{transform_indices = @transform_0, window_bounds = array<i64: 1, 12, 8>}, {transform_indices = @transform_1, window_bounds = array<i64: 1, 8, 1024>}, {transform_indices = @transform_2, window_bounds = array<i64: 12, 1024>}, {transform_indices = @transform_3, window_bounds = array<i64: 1, 12, 2>}]} {
    %c0_i32 = arith.constant 0 : i32
    %0 = arith.cmpi eq, %arg1, %c0_i32 : i32
    %1 = arith.extui %0 : i1 to i32
    %c0_i32_0 = arith.constant 0 : i32
    %2 = arith.cmpi ne, %1, %c0_i32_0 : i32
    scf.if %2 {
      %cst_11 = arith.constant 0.000000e+00 : f32
      %14 = vector.broadcast %cst_11 : f32 to vector<12x1024xf32>
      %c0_12 = arith.constant 0 : index
      %c0_13 = arith.constant 0 : index
      %15 = vector.load %arg6[%c0_12, %c0_13] : memref<12x1024xf32, #tpu.memory_space<vmem>>, vector<12x1024xf32>
      tpu.vector_store %arg6[%c0_12, %c0_13], %14 {strides = array<i32>} : memref<12x1024xf32, #tpu.memory_space<vmem>>, vector<12x1024xf32>,
    } else {
    }
    %c0 = arith.constant 0 : index
    %c0_1 = arith.constant 0 : index
    %3 = vector.load %arg6[%c0, %c0_1] : memref<12x1024xf32, #tpu.memory_space<vmem>>, vector<12x1024xf32>
    %c0_2 = arith.constant 0 : index
    %c0_3 = arith.constant 0 : index
    %c0_4 = arith.constant 0 : index
    %4 = vector.load %arg2[%c0_2, %c0_3, %c0_4] : memref<1x12x8xbf16, #tpu.memory_space<vmem>>, vector<1x12x8xbf16>
    %5 = vector.shape_cast %4 : vector<1x12x8xbf16> to vector<12x8xbf16>
    %c0_5 = arith.constant 0 : index
    %c0_6 = arith.constant 0 : index
    %c0_7 = arith.constant 0 : index
    %6 = vector.load %arg3[%c0_5, %c0_6, %c0_7] : memref<1x8x1024xbf16, #tpu.memory_space<vmem>>, vector<1x8x1024xbf16>
    %7 = vector.shape_cast %6 : vector<1x8x1024xbf16> to vector<8x1024xbf16>
    %cst = arith.constant dense<0.000000e+00> : vector<12x1024xf32>
    %8 = tpu.matmul %5, %7, %cst {dimension_numbers = #tpu.dot_dimension_numbers<[1], [0], [0], [1], [0, 0, 1, 1], [], []>} : vector<12x8xbf16>, vector<8x1024xbf16>, vector<12x1024xf32> -> vector<12x1024xf32>
    %9 = arith.addf %3, %8 : vector<12x1024xf32>
    %c0_8 = arith.constant 0 : index
    %c0_9 = arith.constant 0 : index
    %10 = vector.load %arg6[%c0_8, %c0_9] : memref<12x1024xf32, #tpu.memory_space<vmem>>, vector<12x1024xf32>
    tpu.vector_store %arg6[%c0_8, %c0_9], %9 {strides = array<i32>} : memref<12x1024xf32, #tpu.memory_space<vmem>>, vector<12x1024xf32>,
    %c8_i32 = arith.constant 8 : i32
    %11 = arith.cmpi eq, %arg1, %c8_i32 : i32
    %12 = arith.extui %11 : i1 to i32
    %c0_i32_10 = arith.constant 0 : i32
    %13 = arith.cmpi ne, %12, %c0_i32_10 : i32
    scf.if %13 {
      %c0_11 = arith.constant 0 : index
      %c0_12 = arith.constant 0 : index
      %14 = vector.load %arg6[%c0_11, %c0_12] : memref<12x1024xf32, #tpu.memory_space<vmem>>, vector<12x1024xf32>
      %cst_13 = arith.constant dense<0.000000e+00> : vector<12xf32>
      %15 = vector.multi_reduction <add>, %14, %cst_13 [1] : vector<12x1024xf32> to vector<12xf32>
      %16 = vector.shape_cast %15 : vector<12xf32> to vector<12x1xf32>
      %17 = arith.mulf %14, %14 : vector<12x1024xf32>
      %cst_14 = arith.constant dense<0.000000e+00> : vector<12xf32>
      %18 = vector.multi_reduction <add>, %17, %cst_14 [1] : vector<12x1024xf32> to vector<12xf32>
      %19 = vector.shape_cast %18 : vector<12xf32> to vector<12x1xf32>
      %20 = tpu.concatenate %16, %19 in 1 : vector<12x1xf32>, vector<12x1xf32> -> vector<12x2xf32>
      %c0_15 = arith.constant 0 : index
      %c0_16 = arith.constant 0 : index
      %c0_17 = arith.constant 0 : index
      %21 = vector.load %arg5[%c0_15, %c0_16, %c0_17] : memref<1x12x2xf32, #tpu.memory_space<vmem>>, vector<1x12x2xf32>
      %22 = vector.shape_cast %21 : vector<1x12x2xf32> to vector<12x2xf32>
      %23 = vector.shape_cast %20 : vector<12x2xf32> to vector<1x12x2xf32>
      tpu.vector_store %arg5[%c0_15, %c0_16, %c0_17], %23 {strides = array<i32>} : memref<1x12x2xf32, #tpu.memory_space<vmem>>, vector<1x12x2xf32>,
      %24 = math.tanh %14 : vector<12x1024xf32>
      %c0_18 = arith.constant 0 : index
      %c0_19 = arith.constant 0 : index
      %25 = vector.load %arg4[%c0_18, %c0_19] : memref<12x1024xf32, #tpu.memory_space<vmem>>, vector<12x1024xf32>
      tpu.vector_store %arg4[%c0_18, %c0_19], %24 {strides = array<i32>} : memref<12x1024xf32, #tpu.memory_space<vmem>>, vector<12x1024xf32>,
    } else {
    }
    return
  }
  func.func @transform_0(%arg0: i32, %arg1: i32) -> (i32, i32, i32) {
    %c0_i32 = arith.constant 0 : i32
    %c0_i32_0 = arith.constant 0 : i32
    %c0_i32_1 = arith.constant 0 : i32
    return %arg1, %c0_i32, %c0_i32_0 : i32, i32, i32
  }
  func.func @transform_1(%arg0: i32, %arg1: i32) -> (i32, i32, i32) {
    %c0_i32 = arith.constant 0 : i32
    %c0_i32_0 = arith.constant 0 : i32
    return %arg1, %c0_i32, %arg0 : i32, i32, i32
  }
  func.func @transform_2(%arg0: i32, %arg1: i32) -> (i32, i32) {
    %c0_i32 = arith.constant 0 : i32
    %c0_i32_0 = arith.constant 0 : i32
    return %c0_i32, %arg0 : i32, i32
  }
  func.func @transform_3(%arg0: i32, %arg1: i32) -> (i32, i32, i32) {
    %c0_i32 = arith.constant 0 : i32
    %c0_i32_0 = arith.constant 0 : i32
    %c0_i32_1 = arith.constant 0 : i32
    return %arg0, %c0_i32, %c0_i32_0 : i32, i32, i32
  }
}

</mosaic_0001>

<llo_original>
// kernel: generator_forward.9
$region0: #{generator_forward.9}
  #allocation0 [shape = 'u32[]', space=smem, size = 0x4, offset = 0x4, fixed_abs, tag = 'smem constant byte address 0x4 - core index']
  #allocation1 [shape = 'u32[144,128]{1,0:T(1,128)}', space=vmem, size = 0x12000, scoped, tag = 'internal scratch']
  #allocation2 [shape = 'f32[2,1024]{1,0:T(2,128)}', space=vmem, size = 0x2000, scoped, tag = 'scratch operand']
  %s0 = inlined_call_operand.vmem [shape: bf16[1,2,16], index: 0, kind: input, shape index: {}]
  %s1 = inlined_call_operand.vmem [shape: bf16[1,16,1024], index: 1, kind: input, shape index: {}]
  %s2 = inlined_call_operand.vmem [shape: f32[2,1024], index: 2, kind: output, shape index: {0}]
  %s3 = inlined_call_operand.hbm [shape: f32[1,2,2], index: 3, kind: output, shape index: {1}]
  %4 = xla_tuple %s2, %s3
  %s5 = sld [smem:[#allocation0]]
  $region34: #{generator_forward.9} parent=0
    _
  %s7 = ssub.s32 1, %s5
  %s8 = scalar_select 0, %s7, %s5
  $region1: #{generator_forward.9} parent=0
    #allocation3 [shape = 'u8[1024]{0}', space=vmem, size = 0x400, scoped, tag = 'output window, operand 1, single buffered']
    #allocation4 [shape = 's32[1]{0}', space=sflag, size = 0x4, scoped, tag = 'scoped memory for generator_forward.9']
    %9 = vsyncpa [#allocation4], 0
    // Predicated region
    $region2: #{generator_forward.9} parent=1 // pred_check
      _
    $region3: #{generator_forward.9} parent=1 // pred_check_branch
      %11 = sbr.rel (0) target = $region5
    $region4: #{generator_forward.9} parent=1 // pred_region
      _
    $region5: #{generator_forward.9} parent=1 // pred_fallthru
      _
    // Predicated region
    $region6: #{generator_forward.9} parent=1 // pred_check
      _
    $region7: #{generator_forward.9} parent=1 // pred_check_branch
      %13 = sbr.rel (0) target = $region9
    $region8: #{generator_forward.9} parent=1 // pred_region
      _
    $region9: #{generator_forward.9} parent=1 // pred_fallthru
      _
    %p15 = scmp.eq.s32.totalorder 0, 0
    // Predicated region
    $region10: #{generator_forward.9} parent=1 // pred_check
      %p16 = pneg %p15
    $region11: #{generator_forward.9} parent=1 // pred_check_branch
      %18 = sbr.rel (%p16) target = $region13
    $region12: #{generator_forward.9} parent=1 // pred_region
      %19 = vst [vmem:[#allocation2] sm:$0xff] 0.0
      %20 = vst [vmem:[#allocation2 + $0x8] sm:$0xff] 0.0
    $region13: #{generator_forward.9} parent=1 // pred_fallthru
      _
    %v21 = vld [vmem:[#allocation2] sm:$0xff]
    %v22 = vld [vmem:[#allocation2 + $0x8] sm:$0xff]
    %v23 = vld [vmem:[%s0] sm:$0x1]
    %v24 = vld [vmem:[%s1] sm:$0xff]
    %v25 = vld [vmem:[%s1 + $0x8] sm:$0xff]
    %v26 = vld [vmem:[%s1 + $0x10] sm:$0xff]
    %v27 = vld [vmem:[%s1 + $0x18] sm:$0xff]
    %v28 = vld [vmem:[%s1 + $0x20] sm:$0xff]
    %v29 = vld [vmem:[%s1 + $0x28] sm:$0xff]
    %v30 = vld [vmem:[%s1 + $0x30] sm:$0xff]
    %v31 = vld [vmem:[%s1 + $0x38] sm:$0xff]
    %v40 = vunpack.c.l.b16 %v24
    %v41 = vunpack.c.h.b16 %v24
    %v42 = vunpack.c.l.b16 %v25
    %v43 = vunpack.c.h.b16 %v25
    %v44 = vunpack.c.l.b16 %v26
    %v45 = vunpack.c.h.b16 %v26
    %v46 = vunpack.c.l.b16 %v27
    %v47 = vunpack.c.h.b16 %v27
    %v48 = vunpack.c.l.b16 %v28
    %v49 = vunpack.c.h.b16 %v28
    %v50 = vunpack.c.l.b16 %v29
    %v51 = vunpack.c.h.b16 %v29
    %v52 = vunpack.c.l.b16 %v30
    %v53 = vunpack.c.h.b16 %v30
    %v54 = vunpack.c.l.b16 %v31
    %v55 = vunpack.c.h.b16 %v31
    %v56 = vpack.c.b16 %v48, %v40
    %v57 = vpack.c.b16 %v49, %v41
    %v58 = vpack.c.b16 %v50, %v42
    %v59 = vpack.c.b16 %v51, %v43
    %v60 = vpack.c.b16 %v52, %v44
    %v61 = vpack.c.b16 %v53, %v45
    %v62 = vpack.c.b16 %v54, %v46
    %v63 = vpack.c.b16 %v55, %v47
    %vm72 = vcmask 130048
    %v74 = vsel %vm72, %v23, 0
    %76 = vmatprep.subr.bf16.mxu0 %v57
    %77 = vmatpush1.bf16.msra.mxu0 %v56
    %78 = vmatprep.subr.bf16.mxu0 0
    %79 = vmatpush1.bf16.msra.mxu0 0
    %80 = vmatprep.subr.bf16.mxu0 0
    %81 = vmatpush1.bf16.msra.mxu0 0
    %82 = vmatprep.subr.bf16.mxu0 0
    %83 = vmatpush1.bf16.msra.mxu0 0
    %84 = vmatprep.subr.bf16.mxu0 0
    %85 = vmatpush1.bf16.msra.mxu0 0
    %86 = vmatprep.subr.bf16.mxu0 0
    %87 = vmatpush1.bf16.msra.mxu0 0
    %88 = vmatprep.subr.bf16.mxu0 0
    %89 = vmatpush1.bf16.msra.mxu0 0
    %90 = vmatprep.subr.bf16.mxu0 0
    %91 = vmatpush1.bf16.msra.mxu0 0
    %92 = vmatprep.subr.bf16.mxu0 0
    %93 = vmatpush1.bf16.msra.mxu0 0
    %94 = vmatprep.subr.bf16.mxu0 0
    %95 = vmatpush1.bf16.msra.mxu0 0
    %96 = vmatprep.subr.bf16.mxu0 0
    %97 = vmatpush1.bf16.msra.mxu0 0
    %98 = vmatprep.subr.bf16.mxu0 0
    %99 = vmatpush1.bf16.msra.mxu0 0
    %100 = vmatprep.subr.bf16.mxu0 0
    %101 = vmatpush1.bf16.msra.mxu0 0
    %102 = vmatprep.subr.bf16.mxu0 0
    %103 = vmatpush1.bf16.msra.mxu0 0
    %104 = vmatprep.subr.bf16.mxu0 0
    %105 = vmatpush1.bf16.msra.mxu0 0
    %106 = vmatprep.subr.bf16.mxu0 0
    %107 = vmatpush1.bf16.msra.mxu0 0
    %108 = vmatprep.mubr.bf16.mxu0 0
    %109 = vmatmul.mubr.bf16.gmra.mrb[0].mxu0 %v74
    %v110 = vpop.f32.mrb[0].mxu0
    %v111 = vadd.f32 0.0, %v110
    %v112 = vpop.f32.mrb[0].mxu0
    %v113 = vadd.f32 0.0, %v112
    %v114 = vpop.f32.mrb[0].mxu0
    %v115 = vpop.f32.mrb[0].mxu0
    %116 = vdwg.mxu0
    %117 = vmatprep.subr.bf16.mxu0 %v59
    %118 = vmatpush1.bf16.msra.mxu0 %v58
    %119 = vmatprep.subr.bf16.mxu0 0
    %120 = vmatpush1.bf16.msra.mxu0 0
    %121 = vmatprep.subr.bf16.mxu0 0
    %122 = vmatpush1.bf16.msra.mxu0 0
    %123 = vmatprep.subr.bf16.mxu0 0
    %124 = vmatpush1.bf16.msra.mxu0 0
    %125 = vmatprep.subr.bf16.mxu0 0
    %126 = vmatpush1.bf16.msra.mxu0 0
    %127 = vmatprep.subr.bf16.mxu0 0
    %128 = vmatpush1.bf16.msra.mxu0 0
    %129 = vmatprep.subr.bf16.mxu0 0
    %130 = vmatpush1.bf16.msra.mxu0 0
    %131 = vmatprep.subr.bf16.mxu0 0
    %132 = vmatpush1.bf16.msra.mxu0 0
    %133 = vmatprep.subr.bf16.mxu0 0
    %134 = vmatpush1.bf16.msra.mxu0 0
    %135 = vmatprep.subr.bf16.mxu0 0
    %136 = vmatpush1.bf16.msra.mxu0 0
    %137 = vmatprep.subr.bf16.mxu0 0
    %138 = vmatpush1.bf16.msra.mxu0 0
    %139 = vmatprep.subr.bf16.mxu0 0
    %140 = vmatpush1.bf16.msra.mxu0 0
    %141 = vmatprep.subr.bf16.mxu0 0
    %142 = vmatpush1.bf16.msra.mxu0 0
    %143 = vmatprep.subr.bf16.mxu0 0
    %144 = vmatpush1.bf16.msra.mxu0 0
    %145 = vmatprep.subr.bf16.mxu0 0
    %146 = vmatpush1.bf16.msra.mxu0 0
    %147 = vmatprep.subr.bf16.mxu0 0
    %148 = vmatpush1.bf16.msra.mxu0 0
    %149 = vmatprep.mubr.bf16.mxu0 0
    %150 = vmatmul.mubr.bf16.gmra.mrb[0].mxu0 %v74
    %v151 = vpop.f32.mrb[0].mxu0
    %v152 = vadd.f32 0.0, %v151
    %v153 = vpop.f32.mrb[0].mxu0
    %v154 = vadd.f32 0.0, %v153
    %v155 = vpop.f32.mrb[0].mxu0
    %v156 = vpop.f32.mrb[0].mxu0
    %157 = vdwg.mxu0
    %158 = vmatprep.subr.bf16.mxu0 %v61
    %159 = vmatpush1.bf16.msra.mxu0 %v60
    %160 = vmatprep.subr.bf16.mxu0 0
    %161 = vmatpush1.bf16.msra.mxu0 0
    %162 = vmatprep.subr.bf16.mxu0 0
    %163 = vmatpush1.bf16.msra.mxu0 0
    %164 = vmatprep.subr.bf16.mxu0 0
    %165 = vmatpush1.bf16.msra.mxu0 0
    %166 = vmatprep.subr.bf16.mxu0 0
    %167 = vmatpush1.bf16.msra.mxu0 0
    %168 = vmatprep.subr.bf16.mxu0 0
    %169 = vmatpush1.bf16.msra.mxu0 0
    %170 = vmatprep.subr.bf16.mxu0 0
    %171 = vmatpush1.bf16.msra.mxu0 0
    %172 = vmatprep.subr.bf16.mxu0 0
    %173 = vmatpush1.bf16.msra.mxu0 0
    %174 = vmatprep.subr.bf16.mxu0 0
    %175 = vmatpush1.bf16.msra.mxu0 0
    %176 = vmatprep.subr.bf16.mxu0 0
    %177 = vmatpush1.bf16.msra.mxu0 0
    %178 = vmatprep.subr.bf16.mxu0 0
    %179 = vmatpush1.bf16.msra.mxu0 0
    %180 = vmatprep.subr.bf16.mxu0 0
    %181 = vmatpush1.bf16.msra.mxu0 0
    %182 = vmatprep.subr.bf16.mxu0 0
    %183 = vmatpush1.bf16.msra.mxu0 0
    %184 = vmatprep.subr.bf16.mxu0 0
    %185 = vmatpush1.bf16.msra.mxu0 0
    %186 = vmatprep.subr.bf16.mxu0 0
    %187 = vmatpush1.bf16.msra.mxu0 0
    %188 = vmatprep.subr.bf16.mxu0 0
    %189 = vmatpush1.bf16.msra.mxu0 0
    %190 = vmatprep.mubr.bf16.mxu0 0
    %191 = vmatmul.mubr.bf16.gmra.mrb[0].mxu0 %v74
    %v192 = vpop.f32.mrb[0].mxu0
    %v193 = vadd.f32 0.0, %v192
    %v194 = vpop.f32.mrb[0].mxu0
    %v195 = vadd.f32 0.0, %v194
    %v196 = vpop.f32.mrb[0].mxu0
    %v197 = vpop.f32.mrb[0].mxu0
    %198 = vdwg.mxu0
    %199 = vmatprep.subr.bf16.mxu0 %v63
    %200 = vmatpush1.bf16.msra.mxu0 %v62
    %201 = vmatprep.subr.bf16.mxu0 0
    %202 = vmatpush1.bf16.msra.mxu0 0
    %203 = vmatprep.subr.bf16.mxu0 0
    %204 = vmatpush1.bf16.msra.mxu0 0
    %205 = vmatprep.subr.bf16.mxu0 0
    %206 = vmatpush1.bf16.msra.mxu0 0
    %207 = vmatprep.subr.bf16.mxu0 0
    %208 = vmatpush1.bf16.msra.mxu0 0
    %209 = vmatprep.subr.bf16.mxu0 0
    %210 = vmatpush1.bf16.msra.mxu0 0
    %211 = vmatprep.subr.bf16.mxu0 0
    %212 = vmatpush1.bf16.msra.mxu0 0
    %213 = vmatprep.subr.bf16.mxu0 0
    %214 = vmatpush1.bf16.msra.mxu0 0
    %215 = vmatprep.subr.bf16.mxu0 0
    %216 = vmatpush1.bf16.msra.mxu0 0
    %217 = vmatprep.subr.bf16.mxu0 0
    %218 = vmatpush1.bf16.msra.mxu0 0
    %219 = vmatprep.subr.bf16.mxu0 0
    %220 = vmatpush1.bf16.msra.mxu0 0
    %221 = vmatprep.subr.bf16.mxu0 0
    %222 = vmatpush1.bf16.msra.mxu0 0
    %223 = vmatprep.subr.bf16.mxu0 0
    %224 = vmatpush1.bf16.msra.mxu0 0
    %225 = vmatprep.subr.bf16.mxu0 0
    %226 = vmatpush1.bf16.msra.mxu0 0
    %227 = vmatprep.subr.bf16.mxu0 0
    %228 = vmatpush1.bf16.msra.mxu0 0
    %229 = vmatprep.subr.bf16.mxu0 0
    %230 = vmatpush1.bf16.msra.mxu0 0
    %231 = vmatprep.mubr.bf16.mxu0 0
    %232 = vmatmul.mubr.bf16.gmra.mrb[0].mxu0 %v74
    %v233 = vpop.f32.mrb[0].mxu0
    %v234 = vadd.f32 0.0, %v233
    %v235 = vpop.f32.mrb[0].mxu0
    %v236 = vadd.f32 0.0, %v235
    %v237 = vpop.f32.mrb[0].mxu0
    %v238 = vpop.f32.mrb[0].mxu0
    %239 = vdwg.mxu0
    %v248 = vcombine.low %v111, %v113
    %v249 = vcombine.low %v152, %v154
    %v251 = vunpack.c.l.s4 1983009808
    %v252 = vunpack.c.0.s8 %v251
    %v253 = vlaneseq
    %v254 = vshrl.u32 %v253, 7
    %v255 = vsub.s32 %v252, %v254
    %v256 = vrot.slane %v248, %v255
    %v258 = vunpack.c.l.s4 1983009808
    %v259 = vunpack.c.0.s8 %v258
    %v260 = vlaneseq
    %v261 = vshrl.u32 %v260, 7
    %v262 = vsub.s32 %v259, %v261
    %v263 = vrot.slane %v249, %v262
    %v264 = vcombine.low %v256, %v263
    %v265 = vcombine.low %v193, %v195
    %v266 = vcombine.low %v234, %v236
    %v268 = vunpack.c.l.s4 1983009808
    %v269 = vunpack.c.0.s8 %v268
    %v270 = vlaneseq
    %v271 = vshrl.u32 %v270, 7
    %v272 = vsub.s32 %v269, %v271
    %v273 = vrot.slane %v265, %v272
    %v275 = vunpack.c.l.s4 1983009808
    %v276 = vunpack.c.0.s8 %v275
    %v277 = vlaneseq
    %v278 = vshrl.u32 %v277, 7
    %v279 = vsub.s32 %v276, %v278
    %v280 = vrot.slane %v266, %v279
    %v281 = vcombine.low %v273, %v280
    %v284 = vadd.f32 %v21, %v264
    %v285 = vadd.f32 %v22, %v281
    %286 = vst [vmem:[#allocation2] sm:$0xff] %v284
    %287 = vst [vmem:[#allocation2 + $0x8] sm:$0xff] %v285
    // Predicated region
    $region14: #{generator_forward.9} parent=1 // pred_check
      %p288 = pneg %p15
    $region15: #{generator_forward.9} parent=1 // pred_check_branch
      %290 = sbr.rel (%p288) target = $region17
    $region16: #{generator_forward.9} parent=1 // pred_region
      %v291 = vld [vmem:[#allocation2] sm:$0xff]
      %v292 = vld [vmem:[#allocation2 + $0x8] sm:$0xff]
      %v295 = vcombine.high %v291, %v291
      %v297 = vunpack.c.l.s4 1983009808
      %v298 = vunpack.c.0.s8 %v297
      %v299 = vlaneseq
      %v300 = vshrl.u32 %v299, 7
      %v301 = vsub.s32 %v298, %v300
      %v302 = vrot.slane %v291, %v301
      %v304 = vunpack.c.l.s4 1983009808
      %v305 = vunpack.c.0.s8 %v304
      %v306 = vlaneseq
      %v307 = vshrl.u32 %v306, 7
      %v308 = vsub.s32 %v305, %v307
      %v309 = vrot.slane %v295, %v308
      %v310 = vcombine.high %v302, %v302
      %v311 = vcombine.high %v309, %v309
      %v312 = vcombine.high %v292, %v292
      %v314 = vunpack.c.l.s4 1983009808
      %v315 = vunpack.c.0.s8 %v314
      %v316 = vlaneseq
      %v317 = vshrl.u32 %v316, 7
      %v318 = vsub.s32 %v315, %v317
      %v319 = vrot.slane %v292, %v318
      %v321 = vunpack.c.l.s4 1983009808
      %v322 = vunpack.c.0.s8 %v321
      %v323 = vlaneseq
      %v324 = vshrl.u32 %v323, 7
      %v325 = vsub.s32 %v322, %v324
      %v326 = vrot.slane %v312, %v325
      %v327 = vcombine.high %v319, %v319
      %v328 = vcombine.high %v326, %v326
      %vm337 = vcmask 1041408
      %v338 = vsel %vm337, %v302, 0.0
      %v339 = vsel %vm337, %v310, 0.0
      %v340 = vadd.f32 %v338, %v339
      %v341 = vsel %vm337, %v309, 0.0
      %v342 = vadd.f32 %v340, %v341
      %v343 = vsel %vm337, %v311, 0.0
      %v344 = vadd.f32 %v342, %v343
      %v345 = vsel %vm337, %v319, 0.0
      %v346 = vadd.f32 %v344, %v345
      %v347 = vsel %vm337, %v327, 0.0
      %v348 = vadd.f32 %v346, %v347
      %v349 = vsel %vm337, %v326, 0.0
      %v350 = vadd.f32 %v348, %v349
      %v351 = vsel %vm337, %v328, 0.0
      %v352 = vadd.f32 %v350, %v351
      %353 = vadd.xlane.f32.xlu0 %v352
      %v354 = vpop.xlane.xlu0 %353
      %v355 = vmul.f32 %v291, %v291
      %v356 = vmul.f32 %v292, %v292
      %v359 = vcombine.high %v355, %v355
      %v361 = vunpack.c.l.s4 1983009808
      %v362 = vunpack.c.0.s8 %v361
      %v363 = vlaneseq
      %v364 = vshrl.u32 %v363, 7
      %v365 = vsub.s32 %v362, %v364
      %v366 = vrot.slane %v355, %v365
      %v368 = vunpack.c.l.s4 1983009808
      %v369 = vunpack.c.0.s8 %v368
      %v370 = vlaneseq
      %v371 = vshrl.u32 %v370, 7
      %v372 = vsub.s32 %v369, %v371
      %v373 = vrot.slane %v359, %v372
      %v374 = vcombine.high %v366, %v366
      %v375 = vcombine.high %v373, %v373
      %v376 = vcombine.high %v356, %v356
      %v378 = vunpack.c.l.s4 1983009808
      %v379 = vunpack.c.0.s8 %v378
      %v380 = vlaneseq
      %v381 = vshrl.u32 %v380, 7
      %v382 = vsub.s32 %v379, %v381
      %v383 = vrot.slane %v356, %v382
      %v385 = vunpack.c.l.s4 1983009808
      %v386 = vunpack.c.0.s8 %v385
      %v387 = vlaneseq
      %v388 = vshrl.u32 %v387, 7
      %v389 = vsub.s32 %v386, %v388
      %v390 = vrot.slane %v376, %v389
      %v391 = vcombine.high %v383, %v383
      %v392 = vcombine.high %v390, %v390
      %v401 = vsel %vm337, %v366, 0.0
      %v402 = vsel %vm337, %v374, 0.0
      %v403 = vadd.f32 %v401, %v402
      %v404 = vsel %vm337, %v373, 0.0
      %v405 = vadd.f32 %v403, %v404
      %v406 = vsel %vm337, %v375, 0.0
      %v407 = vadd.f32 %v405, %v406
      %v408 = vsel %vm337, %v383, 0.0
      %v409 = vadd.f32 %v407, %v408
      %v410 = vsel %vm337, %v391, 0.0
      %v411 = vadd.f32 %v409, %v410
      %v412 = vsel %vm337, %v390, 0.0
      %v413 = vadd.f32 %v411, %v412
      %v414 = vsel %vm337, %v392, 0.0
      %v415 = vadd.f32 %v413, %v414
      %416 = vadd.xlane.f32.xlu0 %v415
      %v417 = vpop.xlane.xlu0 %416
      %vm418 = vcmask 7168
      %v419 = vsel %vm418, %v354, %v417
      %vm420 = vcmask 9216
      %421 = vst.msk [vmem:[#allocation3] sm:$0x3] %vm420, %v419
      %422 = vst [vmem:[%s2] sm:$0xff] %v291
      %423 = vst [vmem:[%s2 + $0x8] sm:$0xff] %v292
    $region17: #{generator_forward.9} parent=1 // pred_fallthru
      _
    // Predicated region
    $region18: #{generator_forward.9} parent=1 // pred_check
      _
    $region19: #{generator_forward.9} parent=1 // pred_check_branch
      %425 = sbr.rel (0) target = $region21
    $region20: #{generator_forward.9} parent=1 // pred_region
      _
    $region21: #{generator_forward.9} parent=1 // pred_fallthru
      _
    // Predicated region
    $region22: #{generator_forward.9} parent=1 // pred_check
      _
    $region23: #{generator_forward.9} parent=1 // pred_check_branch
      %427 = sbr.rel (0) target = $region25
    $region24: #{generator_forward.9} parent=1 // pred_region
      %s429 = ssub.s32 32, 32
      %430 = vsyncadd [#allocation4], %s429
      %s432 = sshll.u32 [#allocation3], 4
      %s433 = int_to_ptr.vmem [resolvable:$true] %s432
      %435 = dma.vmem_to_hbm [thread:$0]  %s433, 32, %s3, [#allocation4]
    $region25: #{generator_forward.9} parent=1 // pred_fallthru
      _
    // Predicated region
    $region26: #{generator_forward.9} parent=1 // pred_check
      _
    $region27: #{generator_forward.9} parent=1 // pred_check_branch
      %437 = sbr.rel (0) target = $region29
    $region28: #{generator_forward.9} parent=1 // pred_region
      _
    $region29: #{generator_forward.9} parent=1 // pred_fallthru
      _
    // Predicated region
    $region30: #{generator_forward.9} parent=1 // pred_check
      _
    $region31: #{generator_forward.9} parent=1 // pred_check_branch
      %439 = sbr.rel (0) target = $region33
    $region32: #{generator_forward.9} parent=1 // pred_region
      %440 = dma.done [#allocation4], 32
    $region33: #{generator_forward.9} parent=1 // pred_fallthru
      _
    %441 = vsyncpa [#allocation4], 1

// kernel: generator_forward.10
$region0: #{generator_forward.10}
  #allocation0 [shape = 'u32[]', space=smem, size = 0x4, offset = 0x4, fixed_abs, tag = 'smem constant byte address 0x4 - core index']
  #allocation1 [shape = 'u32[144,128]{1,0:T(1,128)}', space=vmem, size = 0x12000, scoped, tag = 'internal scratch']
  %s0 = inlined_call_operand.vmem [shape: f32[2,1024], index: 0, kind: input, shape index: {}]
  %s1 = inlined_call_operand.vmem [shape: f32[1,1024], index: 1, kind: input, shape index: {}]
  %s2 = inlined_call_operand.vmem [shape: f32[1,1024], index: 2, kind: input, shape index: {}]
  %s3 = inlined_call_operand.vmem [shape: bf16[2,1024], index: 3, kind: output, shape index: {}]
  %s4 = sld [smem:[#allocation0]]
  $region22: #{generator_forward.10} parent=0
    _
  %s6 = ssub.s32 1, %s4
  %s7 = scalar_select 0, %s6, %s4
  // Predicated region
  $region2: #{generator_forward.10} parent=0 // pred_check
    _
  $region3: #{generator_forward.10} parent=0 // pred_check_branch
    %9 = sbr.rel (0) target = $region5
  $region4: #{generator_forward.10} parent=0 // pred_region
    _
  $region5: #{generator_forward.10} parent=0 // pred_fallthru
    _
  // Predicated region
  $region6: #{generator_forward.10} parent=0 // pred_check
    _
  $region7: #{generator_forward.10} parent=0 // pred_check_branch
    %11 = sbr.rel (0) target = $region9
  $region8: #{generator_forward.10} parent=0 // pred_region
    _
  $region9: #{generator_forward.10} parent=0 // pred_fallthru
    _
  // Predicated region
  $region10: #{generator_forward.10} parent=0 // pred_check
    _
  $region11: #{generator_forward.10} parent=0 // pred_check_branch
    %13 = sbr.rel (0) target = $region13
  $region12: #{generator_forward.10} parent=0 // pred_region
    _
  $region13: #{generator_forward.10} parent=0 // pred_fallthru
    _
  %v14 = vld [vmem:[%s0] sm:$0xff]
  %v15 = vld [vmem:[%s0 + $0x8] sm:$0xff]
  %v16 = vld [vmem:[%s1] sm:$0xff]
  %v18 = vlaneseq
  %v19 = vshrl.u32 %v18, 7
  %v20 = vsub.s32 0, %v19
  %v21 = vrot.slane %v16, %v20
  %v22 = vlaneseq
  %v23 = vshrl.u32 %v22, 7
  %v24 = vsub.s32 1, %v23
  %v25 = vrot.slane %v16, %v24
  %v26 = vlaneseq
  %v27 = vshrl.u32 %v26, 7
  %v28 = vsub.s32 2, %v27
  %v29 = vrot.slane %v16, %v28
  %v30 = vlaneseq
  %v31 = vshrl.u32 %v30, 7
  %v32 = vsub.s32 3, %v31
  %v33 = vrot.slane %v16, %v32
  %v34 = vlaneseq
  %v35 = vshrl.u32 %v34, 7
  %v36 = vsub.s32 4, %v35
  %v37 = vrot.slane %v16, %v36
  %v38 = vlaneseq
  %v39 = vshrl.u32 %v38, 7
  %v40 = vsub.s32 5, %v39
  %v41 = vrot.slane %v16, %v40
  %v42 = vlaneseq
  %v43 = vshrl.u32 %v42, 7
  %v44 = vsub.s32 6, %v43
  %v45 = vrot.slane %v16, %v44
  %v46 = vlaneseq
  %v47 = vshrl.u32 %v46, 7
  %v48 = vsub.s32 7, %v47
  %v49 = vrot.slane %v16, %v48
  %v50 = vcombine.low %v21, %v25
  %v51 = vcombine.low %v29, %v33
  %v53 = vunpack.c.l.s4 1983009808
  %v54 = vunpack.c.0.s8 %v53
  %v55 = vlaneseq
  %v56 = vshrl.u32 %v55, 7
  %v57 = vsub.s32 %v54, %v56
  %v58 = vrot.slane %v50, %v57
  %v60 = vunpack.c.l.s4 1983009808
  %v61 = vunpack.c.0.s8 %v60
  %v62 = vlaneseq
  %v63 = vshrl.u32 %v62, 7
  %v64 = vsub.s32 %v61, %v63
  %v65 = vrot.slane %v51, %v64
  %v66 = vcombine.low %v58, %v65
  %v67 = vcombine.low %v37, %v41
  %v68 = vcombine.low %v45, %v49
  %v70 = vunpack.c.l.s4 1983009808
  %v71 = vunpack.c.0.s8 %v70
  %v72 = vlaneseq
  %v73 = vshrl.u32 %v72, 7
  %v74 = vsub.s32 %v71, %v73
  %v75 = vrot.slane %v67, %v74
  %v77 = vunpack.c.l.s4 1983009808
  %v78 = vunpack.c.0.s8 %v77
  %v79 = vlaneseq
  %v80 = vshrl.u32 %v79, 7
  %v81 = vsub.s32 %v78, %v80
  %v82 = vrot.slane %v68, %v81
  %v83 = vcombine.low %v75, %v82
  %v86 = vmul.f32 %v14, %v66
  %v87 = vmul.f32 %v15, %v83
  %v88 = vld [vmem:[%s2] sm:$0xff]
  %v90 = vlaneseq
  %v91 = vshrl.u32 %v90, 7
  %v92 = vsub.s32 0, %v91
  %v93 = vrot.slane %v88, %v92
  %v94 = vlaneseq
  %v95 = vshrl.u32 %v94, 7
  %v96 = vsub.s32 1, %v95
  %v97 = vrot.slane %v88, %v96
  %v98 = vlaneseq
  %v99 = vshrl.u32 %v98, 7
  %v100 = vsub.s32 2, %v99
  %v101 = vrot.slane %v88, %v100
  %v102 = vlaneseq
  %v103 = vshrl.u32 %v102, 7
  %v104 = vsub.s32 3, %v103
  %v105 = vrot.slane %v88, %v104
  %v106 = vlaneseq
  %v107 = vshrl.u32 %v106, 7
  %v108 = vsub.s32 4, %v107
  %v109 = vrot.slane %v88, %v108
  %v110 = vlaneseq
  %v111 = vshrl.u32 %v110, 7
  %v112 = vsub.s32 5, %v111
  %v113 = vrot.slane %v88, %v112
  %v114 = vlaneseq
  %v115 = vshrl.u32 %v114, 7
  %v116 = vsub.s32 6, %v115
  %v117 = vrot.slane %v88, %v116
  %v118 = vlaneseq
  %v119 = vshrl.u32 %v118, 7
  %v120 = vsub.s32 7, %v119
  %v121 = vrot.slane %v88, %v120
  %v122 = vcombine.low %v93, %v97
  %v123 = vcombine.low %v101, %v105
  %v125 = vunpack.c.l.s4 1983009808
  %v126 = vunpack.c.0.s8 %v125
  %v127 = vlaneseq
  %v128 = vshrl.u32 %v127, 7
  %v129 = vsub.s32 %v126, %v128
  %v130 = vrot.slane %v122, %v129
  %v132 = vunpack.c.l.s4 1983009808
  %v133 = vunpack.c.0.s8 %v132
  %v134 = vlaneseq
  %v135 = vshrl.u32 %v134, 7
  %v136 = vsub.s32 %v133, %v135
  %v137 = vrot.slane %v123, %v136
  %v138 = vcombine.low %v130, %v137
  %v139 = vcombine.low %v109, %v113
  %v140 = vcombine.low %v117, %v121
  %v142 = vunpack.c.l.s4 1983009808
  %v143 = vunpack.c.0.s8 %v142
  %v144 = vlaneseq
  %v145 = vshrl.u32 %v144, 7
  %v146 = vsub.s32 %v143, %v145
  %v147 = vrot.slane %v139, %v146
  %v149 = vunpack.c.l.s4 1983009808
  %v150 = vunpack.c.0.s8 %v149
  %v151 = vlaneseq
  %v152 = vshrl.u32 %v151, 7
  %v153 = vsub.s32 %v150, %v152
  %v154 = vrot.slane %v140, %v153
  %v155 = vcombine.low %v147, %v154
  %v158 = vadd.f32 %v86, %v138
  %v159 = vadd.f32 %v87, %v155
  %v160 = vmax.f32 %v158, 0.0
  %v161 = vmax.f32 %v159, 0.0
  %v164 = vcombine.high %v160, %v160
  %v166 = vunpack.c.l.s4 1983009808
  %v167 = vunpack.c.0.s8 %v166
  %v168 = vlaneseq
  %v169 = vshrl.u32 %v168, 7
  %v170 = vsub.s32 %v167, %v169
  %v171 = vrot.slane %v160, %v170
  %v173 = vunpack.c.l.s4 1983009808
  %v174 = vunpack.c.0.s8 %v173
  %v175 = vlaneseq
  %v176 = vshrl.u32 %v175, 7
  %v177 = vsub.s32 %v174, %v176
  %v178 = vrot.slane %v164, %v177
  %v179 = vcombine.high %v171, %v171
  %v180 = vcombine.high %v178, %v178
  %v181 = vcombine.high %v161, %v161
  %v183 = vunpack.c.l.s4 1983009808
  %v184 = vunpack.c.0.s8 %v183
  %v185 = vlaneseq
  %v186 = vshrl.u32 %v185, 7
  %v187 = vsub.s32 %v184, %v186
  %v188 = vrot.slane %v161, %v187
  %v190 = vunpack.c.l.s4 1983009808
  %v191 = vunpack.c.0.s8 %v190
  %v192 = vlaneseq
  %v193 = vshrl.u32 %v192, 7
  %v194 = vsub.s32 %v191, %v193
  %v195 = vrot.slane %v181, %v194
  %v196 = vcombine.high %v188, %v188
  %v197 = vcombine.high %v195, %v195
  %v206 = vpack.c.bf16 %v171, %v171
  %v207 = vpack.c.bf16 %v179, %v179
  %v208 = vpack.c.bf16 %v178, %v178
  %v209 = vpack.c.bf16 %v180, %v180
  %v210 = vpack.c.bf16 %v188, %v188
  %v211 = vpack.c.bf16 %v196, %v196
  %v212 = vpack.c.bf16 %v195, %v195
  %v213 = vpack.c.bf16 %v197, %v197
  %v222 = vcombine.low %v206, %v207
  %v223 = vcombine.low %v208, %v209
  %v224 = vcombine.low %v210, %v211
  %v225 = vcombine.low %v212, %v213
  %v227 = vunpack.c.l.s4 1966171168
  %v228 = vunpack.c.0.s8 %v227
  %v229 = vlaneseq
  %v230 = vshrl.u32 %v229, 7
  %v231 = vsub.s32 %v228, %v230
  %v232 = vrot.slane %v222, %v231
  %v234 = vunpack.c.l.s4 1966171168
  %v235 = vunpack.c.0.s8 %v234
  %v236 = vlaneseq
  %v237 = vshrl.u32 %v236, 7
  %v238 = vsub.s32 %v235, %v237
  %v239 = vrot.slane %v223, %v238
  %v241 = vunpack.c.l.s4 1966171168
  %v242 = vunpack.c.0.s8 %v241
  %v243 = vlaneseq
  %v244 = vshrl.u32 %v243, 7
  %v245 = vsub.s32 %v242, %v244
  %v246 = vrot.slane %v224, %v245
  %v248 = vunpack.c.l.s4 1966171168
  %v249 = vunpack.c.0.s8 %v248
  %v250 = vlaneseq
  %v251 = vshrl.u32 %v250, 7
  %v252 = vsub.s32 %v249, %v251
  %v253 = vrot.slane %v225, %v252
  %v254 = vcombine.low %v232, %v239
  %v255 = vcombine.low %v246, %v253
  %v257 = vunpack.c.l.s4 1966171168
  %v258 = vunpack.c.0.s8 %v257
  %v259 = vlaneseq
  %v260 = vshrl.u32 %v259, 7
  %v261 = vsub.s32 %v258, %v260
  %v262 = vrot.slane %v254, %v261
  %v264 = vunpack.c.l.s4 1966171168
  %v265 = vunpack.c.0.s8 %v264
  %v266 = vlaneseq
  %v267 = vshrl.u32 %v266, 7
  %v268 = vsub.s32 %v265, %v267
  %v269 = vrot.slane %v255, %v268
  %v270 = vcombine.low %v262, %v269
  %272 = vst [vmem:[%s3] sm:$0xff] %v270
  // Predicated region
  $region14: #{generator_forward.10} parent=0 // pred_check
    _
  $region15: #{generator_forward.10} parent=0 // pred_check_branch
    %274 = sbr.rel (0) target = $region17
  $region16: #{generator_forward.10} parent=0 // pred_region
    _
  $region17: #{generator_forward.10} parent=0 // pred_fallthru
    _
  // Predicated region
  $region18: #{generator_forward.10} parent=0 // pred_check
    _
  $region19: #{generator_forward.10} parent=0 // pred_check_branch
    %276 = sbr.rel (0) target = $region21
  $region20: #{generator_forward.10} parent=0 // pred_region
    _
  $region21: #{generator_forward.10} parent=0 // pred_fallthru
    _

// kernel: tile.38
$region0: #{tile.38}
  #allocation0 [shape = 's32[1]{0}', space=sflag, size = 0x4, scoped, tag = 'scoped memory for tile.38']
  %s0 = inlined_call_operand.vmem [shape: f32[32], index: 0, kind: input, shape index: {}]
  %s1 = inlined_call_operand.vmem [shape: f32[4,32], index: 1, kind: output, shape index: {}]
  // Predicated region
  $region2: #{tile.38} parent=0 // pred_check
    _
  $region3: #{tile.38} parent=0 // pred_check_branch
    %3 = sbr.rel (0) target = $region5
  $region4: #{tile.38} parent=0 // pred_region
    _
  $region5: #{tile.38} parent=0 // pred_fallthru
    _
  %v4 = vld [vmem:[%s0] ss:$0 sm:$0xff]
  %5 = vst [vmem:[%s1] sm:$0xf] %v4

// kernel: tile.0
$region0: #{tile.0}
  %s0 = inlined_call_operand.vmem [shape: f32[4,32], index: 0, kind: input, shape index: {}]
  %s1 = inlined_call_operand.vmem [shape: f32[128,1], index: 1, kind: output, shape index: {}]
  $region1: #{tile.0} parent=0
    #allocation0 [shape = 'u8[4096]{0}', space=vmem, size = 0x1000, scoped, tag = 'scoped mem for input reshape']
    %s3 = sshllo.u32 0, 4
    %v4 = vld [vmem:[%s0] sm:%s3]
    %5 = vst [vmem:[#allocation0] sm:%s3] %v4
    %v6 = vld [vmem:[#allocation0] sm:$0xf]
    %vm7 = vcmask 7168
    %8 = vst.msk [vmem:[%s1] sm:$0x1] %vm7, %v6
    %s9 = scalar_lea.vmem %s1, 31
    %10 = vst.msk [vmem:[%s9] sm:$0x2] %vm7, %v6
    %s11 = scalar_lea.vmem %s1, 62
    %12 = vst.msk [vmem:[%s11] sm:$0x4] %vm7, %v6
    %s13 = scalar_lea.vmem %s1, 93
    %14 = vst.msk [vmem:[%s13] sm:$0x8] %vm7, %v6
    %v15 = vld [vmem:[#allocation0] sm:$0xf]
    %16 = vrot.lane.b32.xlu0 %v15, 127
    %v17 = vpop.permute.xlu0 %16
    %vm18 = vcmask 7168
    %s19 = scalar_lea.vmem %s1, 1
    %20 = vst.msk [vmem:[%s19] sm:$0x1] %vm18, %v17
    %s21 = scalar_lea.vmem %s1, 32
    %22 = vst.msk [vmem:[%s21] sm:$0x2] %vm18, %v17
    %s23 = scalar_lea.vmem %s1, 63
    %24 = vst.msk [vmem:[%s23] sm:$0x4] %vm18, %v17
    %s25 = scalar_lea.vmem %s1, 94
    %26 = vst.msk [vmem:[%s25] sm:$0x8] %vm18, %v17
    %v27 = vld [vmem:[#allocation0] sm:$0xf]
    %28 = vrot.lane.b32.xlu0 %v27, 126
    %v29 = vpop.permute.xlu0 %28
    %vm30 = vcmask 7168
    %s31 = scalar_lea.vmem %s1, 2
    %32 = vst.msk [vmem:[%s31] sm:$0x1] %vm30, %v29
    %s33 = scalar_lea.vmem %s1, 33
    %34 = vst.msk [vmem:[%s33] sm:$0x2] %vm30, %v29
    %s35 = scalar_lea.vmem %s1, 64
    %36 = vst.msk [vmem:[%s35] sm:$0x4] %vm30, %v29
    %s37 = scalar_lea.vmem %s1, 95
    %38 = vst.msk [vmem:[%s37] sm:$0x8] %vm30, %v29
    %v39 = vld [vmem:[#allocation0] sm:$0xf]
    %40 = vrot.lane.b32.xlu0 %v39, 125
    %v41 = vpop.permute.xlu0 %40
    %vm42 = vcmask 7168
    %s43 = scalar_lea.vmem %s1, 3
    %44 = vst.msk [vmem:[%s43] sm:$0x1] %vm42, %v41
    %s45 = scalar_lea.vmem %s1, 34
    %46 = vst.msk [vmem:[%s45] sm:$0x2] %vm42, %v41
    %s47 = scalar_lea.vmem %s1, 65
    %48 = vst.msk [vmem:[%s47] sm:$0x4] %vm42, %v41
    %s49 = scalar_lea.vmem %s1, 96
    %50 = vst.msk [vmem:[%s49] sm:$0x8] %vm42, %v41
    %v51 = vld [vmem:[#allocation0] sm:$0xf]
    %52 = vrot.lane.b32.xlu0 %v51, 124
    %v53 = vpop.permute.xlu0 %52
    %vm54 = vcmask 7168
    %s55 = scalar_lea.vmem %s1, 4
    %56 = vst.msk [vmem:[%s55] sm:$0x1] %vm54, %v53
    %s57 = scalar_lea.vmem %s1, 35
    %58 = vst.msk [vmem:[%s57] sm:$0x2] %vm54, %v53
    %s59 = scalar_lea.vmem %s1, 66
    %60 = vst.msk [vmem:[%s59] sm:$0x4] %vm54, %v53
    %s61 = scalar_lea.vmem %s1, 97
    %62 = vst.msk [vmem:[%s61] sm:$0x8] %vm54, %v53
    %v63 = vld [vmem:[#allocation0] sm:$0xf]
    %64 = vrot.lane.b32.xlu0 %v63, 123
    %v65 = vpop.permute.xlu0 %64
    %vm66 = vcmask 7168
    %s67 = scalar_lea.vmem %s1, 5
    %68 = vst.msk [vmem:[%s67] sm:$0x1] %vm66, %v65
    %s69 = scalar_lea.vmem %s1, 36
    %70 = vst.msk [vmem:[%s69] sm:$0x2] %vm66, %v65
    %s71 = scalar_lea.vmem %s1, 67
    %72 = vst.msk [vmem:[%s71] sm:$0x4] %vm66, %v65
    %s73 = scalar_lea.vmem %s1, 98
    %74 = vst.msk [vmem:[%s73] sm:$0x8] %vm66, %v65
    %v75 = vld [vmem:[#allocation0] sm:$0xf]
    %76 = vrot.lane.b32.xlu0 %v75, 122
    %v77 = vpop.permute.xlu0 %76
    %vm78 = vcmask 7168
    %s79 = scalar_lea.vmem %s1, 6
    %80 = vst.msk [vmem:[%s79] sm:$0x1] %vm78, %v77
    %s81 = scalar_lea.vmem %s1, 37
    %82 = vst.msk [vmem:[%s81] sm:$0x2] %vm78, %v77
    %s83 = scalar_lea.vmem %s1, 68
    %84 = vst.msk [vmem:[%s83] sm:$0x4] %vm78, %v77
    %s85 = scalar_lea.vmem %s1, 99
    %86 = vst.msk [vmem:[%s85] sm:$0x8] %vm78, %v77
    %v87 = vld [vmem:[#allocation0] sm:$0xf]
    %88 = vrot.lane.b32.xlu0 %v87, 121
    %v89 = vpop.permute.xlu0 %88
    %vm90 = vcmask 7168
    %s91 = scalar_lea.vmem %s1, 7
    %92 = vst.msk [vmem:[%s91] sm:$0x1] %vm90, %v89
    %s93 = scalar_lea.vmem %s1, 38
    %94 = vst.msk [vmem:[%s93] sm:$0x2] %vm90, %v89
    %s95 = scalar_lea.vmem %s1, 69
    %96 = vst.msk [vmem:[%s95] sm:$0x4] %vm90, %v89
    %s97 = scalar_lea.vmem %s1, 100
    %98 = vst.msk [vmem:[%s97] sm:$0x8] %vm90, %v89
    %v99 = vld [vmem:[#allocation0] sm:$0xf]
    %100 = vrot.lane.b32.xlu0 %v99, 120
    %v101 = vpop.permute.xlu0 %100
    %vm102 = vcmask 7168
    %s103 = scalar_lea.vmem %s1, 8
    %104 = vst.msk [vmem:[%s103] sm:$0x1] %vm102, %v101
    %s105 = scalar_lea.vmem %s1, 39
    %106 = vst.msk [vmem:[%s105] sm:$0x2] %vm102, %v101
    %s107 = scalar_lea.vmem %s1, 70
    %108 = vst.msk [vmem:[%s107] sm:$0x4] %vm102, %v101
    %s109 = scalar_lea.vmem %s1, 101
    %110 = vst.msk [vmem:[%s109] sm:$0x8] %vm102, %v101
    %v111 = vld [vmem:[#allocation0] sm:$0xf]
    %112 = vrot.lane.b32.xlu0 %v111, 119
    %v113 = vpop.permute.xlu0 %112
    %vm114 = vcmask 7168
    %s115 = scalar_lea.vmem %s1, 9
    %116 = vst.msk [vmem:[%s115] sm:$0x1] %vm114, %v113
    %s117 = scalar_lea.vmem %s1, 40
    %118 = vst.msk [vmem:[%s117] sm:$0x2] %vm114, %v113
    %s119 = scalar_lea.vmem %s1, 71
    %120 = vst.msk [vmem:[%s119] sm:$0x4] %vm114, %v113
    %s121 = scalar_lea.vmem %s1, 102
    %122 = vst.msk [vmem:[%s121] sm:$0x8] %vm114, %v113
    %v123 = vld [vmem:[#allocation0] sm:$0xf]
    %124 = vrot.lane.b32.xlu0 %v123, 118
    %v125 = vpop.permute.xlu0 %124
    %vm126 = vcmask 7168
    %s127 = scalar_lea.vmem %s1, 10
    %128 = vst.msk [vmem:[%s127] sm:$0x1] %vm126, %v125
    %s129 = scalar_lea.vmem %s1, 41
    %130 = vst.msk [vmem:[%s129] sm:$0x2] %vm126, %v125
    %s131 = scalar_lea.vmem %s1, 72
    %132 = vst.msk [vmem:[%s131] sm:$0x4] %vm126, %v125
    %s133 = scalar_lea.vmem %s1, 103
    %134 = vst.msk [vmem:[%s133] sm:$0x8] %vm126, %v125
    %v135 = vld [vmem:[#allocation0] sm:$0xf]
    %136 = vrot.lane.b32.xlu0 %v135, 117
    %v137 = vpop.permute.xlu0 %136
    %vm138 = vcmask 7168
    %s139 = scalar_lea.vmem %s1, 11
    %140 = vst.msk [vmem:[%s139] sm:$0x1] %vm138, %v137
    %s141 = scalar_lea.vmem %s1, 42
    %142 = vst.msk [vmem:[%s141] sm:$0x2] %vm138, %v137
    %s143 = scalar_lea.vmem %s1, 73
    %144 = vst.msk [vmem:[%s143] sm:$0x4] %vm138, %v137
    %s145 = scalar_lea.vmem %s1, 104
    %146 = vst.msk [vmem:[%s145] sm:$0x8] %vm138, %v137
    %v147 = vld [vmem:[#allocation0] sm:$0xf]
    %148 = vrot.lane.b32.xlu0 %v147, 116
    %v149 = vpop.permute.xlu0 %148
    %vm150 = vcmask 7168
    %s151 = scalar_lea.vmem %s1, 12
    %152 = vst.msk [vmem:[%s151] sm:$0x1] %vm150, %v149
    %s153 = scalar_lea.vmem %s1, 43
    %154 = vst.msk [vmem:[%s153] sm:$0x2] %vm150, %v149
    %s155 = scalar_lea.vmem %s1, 74
    %156 = vst.msk [vmem:[%s155] sm:$0x4] %vm150, %v149
    %s157 = scalar_lea.vmem %s1, 105
    %158 = vst.msk [vmem:[%s157] sm:$0x8] %vm150, %v149
    %v159 = vld [vmem:[#allocation0] sm:$0xf]
    %160 = vrot.lane.b32.xlu0 %v159, 115
    %v161 = vpop.permute.xlu0 %160
    %vm162 = vcmask 7168
    %s163 = scalar_lea.vmem %s1, 13
    %164 = vst.msk [vmem:[%s163] sm:$0x1] %vm162, %v161
    %s165 = scalar_lea.vmem %s1, 44
    %166 = vst.msk [vmem:[%s165] sm:$0x2] %vm162, %v161
    %s167 = scalar_lea.vmem %s1, 75
    %168 = vst.msk [vmem:[%s167] sm:$0x4] %vm162, %v161
    %s169 = scalar_lea.vmem %s1, 106
    %170 = vst.msk [vmem:[%s169] sm:$0x8] %vm162, %v161
    %v171 = vld [vmem:[#allocation0] sm:$0xf]
    %172 = vrot.lane.b32.xlu0 %v171, 114
    %v173 = vpop.permute.xlu0 %172
    %vm174 = vcmask 7168
    %s175 = scalar_lea.vmem %s1, 14
    %176 = vst.msk [vmem:[%s175] sm:$0x1] %vm174, %v173
    %s177 = scalar_lea.vmem %s1, 45
    %178 = vst.msk [vmem:[%s177] sm:$0x2] %vm174, %v173
    %s179 = scalar_lea.vmem %s1, 76
    %180 = vst.msk [vmem:[%s179] sm:$0x4] %vm174, %v173
    %s181 = scalar_lea.vmem %s1, 107
    %182 = vst.msk [vmem:[%s181] sm:$0x8] %vm174, %v173
    %v183 = vld [vmem:[#allocation0] sm:$0xf]
    %184 = vrot.lane.b32.xlu0 %v183, 113
    %v185 = vpop.permute.xlu0 %184
    %vm186 = vcmask 7168
    %s187 = scalar_lea.vmem %s1, 15
    %188 = vst.msk [vmem:[%s187] sm:$0x1] %vm186, %v185
    %s189 = scalar_lea.vmem %s1, 46
    %190 = vst.msk [vmem:[%s189] sm:$0x2] %vm186, %v185
    %s191 = scalar_lea.vmem %s1, 77
    %192 = vst.msk [vmem:[%s191] sm:$0x4] %vm186, %v185
    %s193 = scalar_lea.vmem %s1, 108
    %194 = vst.msk [vmem:[%s193] sm:$0x8] %vm186, %v185
    %v195 = vld [vmem:[#allocation0] sm:$0xf]
    %196 = vrot.lane.b32.xlu0 %v195, 112
    %v197 = vpop.permute.xlu0 %196
    %vm198 = vcmask 7168
    %s199 = scalar_lea.vmem %s1, 16
    %200 = vst.msk [vmem:[%s199] sm:$0x1] %vm198, %v197
    %s201 = scalar_lea.vmem %s1, 47
    %202 = vst.msk [vmem:[%s201] sm:$0x2] %vm198, %v197
    %s203 = scalar_lea.vmem %s1, 78
    %204 = vst.msk [vmem:[%s203] sm:$0x4] %vm198, %v197
    %s205 = scalar_lea.vmem %s1, 109
    %206 = vst.msk [vmem:[%s205] sm:$0x8] %vm198, %v197
    %v207 = vld [vmem:[#allocation0] sm:$0xf]
    %208 = vrot.lane.b32.xlu0 %v207, 111
    %v209 = vpop.permute.xlu0 %208
    %vm210 = vcmask 7168
    %s211 = scalar_lea.vmem %s1, 17
    %212 = vst.msk [vmem:[%s211] sm:$0x1] %vm210, %v209
    %s213 = scalar_lea.vmem %s1, 48
    %214 = vst.msk [vmem:[%s213] sm:$0x2] %vm210, %v209
    %s215 = scalar_lea.vmem %s1, 79
    %216 = vst.msk [vmem:[%s215] sm:$0x4] %vm210, %v209
    %s217 = scalar_lea.vmem %s1, 110
    %218 = vst.msk [vmem:[%s217] sm:$0x8] %vm210, %v209
    %v219 = vld [vmem:[#allocation0] sm:$0xf]
    %220 = vrot.lane.b32.xlu0 %v219, 110
    %v221 = vpop.permute.xlu0 %220
    %vm222 = vcmask 7168
    %s223 = scalar_lea.vmem %s1, 18
    %224 = vst.msk [vmem:[%s223] sm:$0x1] %vm222, %v221
    %s225 = scalar_lea.vmem %s1, 49
    %226 = vst.msk [vmem:[%s225] sm:$0x2] %vm222, %v221
    %s227 = scalar_lea.vmem %s1, 80
    %228 = vst.msk [vmem:[%s227] sm:$0x4] %vm222, %v221
    %s229 = scalar_lea.vmem %s1, 111
    %230 = vst.msk [vmem:[%s229] sm:$0x8] %vm222, %v221
    %v231 = vld [vmem:[#allocation0] sm:$0xf]
    %232 = vrot.lane.b32.xlu0 %v231, 109
    %v233 = vpop.permute.xlu0 %232
    %vm234 = vcmask 7168
    %s235 = scalar_lea.vmem %s1, 19
    %236 = vst.msk [vmem:[%s235] sm:$0x1] %vm234, %v233
    %s237 = scalar_lea.vmem %s1, 50
    %238 = vst.msk [vmem:[%s237] sm:$0x2] %vm234, %v233
    %s239 = scalar_lea.vmem %s1, 81
    %240 = vst.msk [vmem:[%s239] sm:$0x4] %vm234, %v233
    %s241 = scalar_lea.vmem %s1, 112
    %242 = vst.msk [vmem:[%s241] sm:$0x8] %vm234, %v233
    %v243 = vld [vmem:[#allocation0] sm:$0xf]
    %244 = vrot.lane.b32.xlu0 %v243, 108
    %v245 = vpop.permute.xlu0 %244
    %vm246 = vcmask 7168
    %s247 = scalar_lea.vmem %s1, 20
    %248 = vst.msk [vmem:[%s247] sm:$0x1] %vm246, %v245
    %s249 = scalar_lea.vmem %s1, 51
    %250 = vst.msk [vmem:[%s249] sm:$0x2] %vm246, %v245
    %s251 = scalar_lea.vmem %s1, 82
    %252 = vst.msk [vmem:[%s251] sm:$0x4] %vm246, %v245
    %s253 = scalar_lea.vmem %s1, 113
    %254 = vst.msk [vmem:[%s253] sm:$0x8] %vm246, %v245
    %v255 = vld [vmem:[#allocation0] sm:$0xf]
    %256 = vrot.lane.b32.xlu0 %v255, 107
    %v257 = vpop.permute.xlu0 %256
    %vm258 = vcmask 7168
    %s259 = scalar_lea.vmem %s1, 21
    %260 = vst.msk [vmem:[%s259] sm:$0x1] %vm258, %v257
    %s261 = scalar_lea.vmem %s1, 52
    %262 = vst.msk [vmem:[%s261] sm:$0x2] %vm258, %v257
    %s263 = scalar_lea.vmem %s1, 83
    %264 = vst.msk [vmem:[%s263] sm:$0x4] %vm258, %v257
    %s265 = scalar_lea.vmem %s1, 114
    %266 = vst.msk [vmem:[%s265] sm:$0x8] %vm258, %v257
    %v267 = vld [vmem:[#allocation0] sm:$0xf]
    %268 = vrot.lane.b32.xlu0 %v267, 106
    %v269 = vpop.permute.xlu0 %268
    %vm270 = vcmask 7168
    %s271 = scalar_lea.vmem %s1, 22
    %272 = vst.msk [vmem:[%s271] sm:$0x1] %vm270, %v269
    %s273 = scalar_lea.vmem %s1, 53
    %274 = vst.msk [vmem:[%s273] sm:$0x2] %vm270, %v269
    %s275 = scalar_lea.vmem %s1, 84
    %276 = vst.msk [vmem:[%s275] sm:$0x4] %vm270, %v269
    %s277 = scalar_lea.vmem %s1, 115
    %278 = vst.msk [vmem:[%s277] sm:$0x8] %vm270, %v269
    %v279 = vld [vmem:[#allocation0] sm:$0xf]
    %280 = vrot.lane.b32.xlu0 %v279, 105
    %v281 = vpop.permute.xlu0 %280
    %vm282 = vcmask 7168
    %s283 = scalar_lea.vmem %s1, 23
    %284 = vst.msk [vmem:[%s283] sm:$0x1] %vm282, %v281
    %s285 = scalar_lea.vmem %s1, 54
    %286 = vst.msk [vmem:[%s285] sm:$0x2] %vm282, %v281
    %s287 = scalar_lea.vmem %s1, 85
    %288 = vst.msk [vmem:[%s287] sm:$0x4] %vm282, %v281
    %s289 = scalar_lea.vmem %s1, 116
    %290 = vst.msk [vmem:[%s289] sm:$0x8] %vm282, %v281
    %v291 = vld [vmem:[#allocation0] sm:$0xf]
    %292 = vrot.lane.b32.xlu0 %v291, 104
    %v293 = vpop.permute.xlu0 %292
    %vm294 = vcmask 7168
    %s295 = scalar_lea.vmem %s1, 24
    %296 = vst.msk [vmem:[%s295] sm:$0x1] %vm294, %v293
    %s297 = scalar_lea.vmem %s1, 55
    %298 = vst.msk [vmem:[%s297] sm:$0x2] %vm294, %v293
    %s299 = scalar_lea.vmem %s1, 86
    %300 = vst.msk [vmem:[%s299] sm:$0x4] %vm294, %v293
    %s301 = scalar_lea.vmem %s1, 117
    %302 = vst.msk [vmem:[%s301] sm:$0x8] %vm294, %v293
    %v303 = vld [vmem:[#allocation0] sm:$0xf]
    %304 = vrot.lane.b32.xlu0 %v303, 103
    %v305 = vpop.permute.xlu0 %304
    %vm306 = vcmask 7168
    %s307 = scalar_lea.vmem %s1, 25
    %308 = vst.msk [vmem:[%s307] sm:$0x1] %vm306, %v305
    %s309 = scalar_lea.vmem %s1, 56
    %310 = vst.msk [vmem:[%s309] sm:$0x2] %vm306, %v305
    %s311 = scalar_lea.vmem %s1, 87
    %312 = vst.msk [vmem:[%s311] sm:$0x4] %vm306, %v305
    %s313 = scalar_lea.vmem %s1, 118
    %314 = vst.msk [vmem:[%s313] sm:$0x8] %vm306, %v305
    %v315 = vld [vmem:[#allocation0] sm:$0xf]
    %316 = vrot.lane.b32.xlu0 %v315, 102
    %v317 = vpop.permute.xlu0 %316
    %vm318 = vcmask 7168
    %s319 = scalar_lea.vmem %s1, 26
    %320 = vst.msk [vmem:[%s319] sm:$0x1] %vm318, %v317
    %s321 = scalar_lea.vmem %s1, 57
    %322 = vst.msk [vmem:[%s321] sm:$0x2] %vm318, %v317
    %s323 = scalar_lea.vmem %s1, 88
    %324 = vst.msk [vmem:[%s323] sm:$0x4] %vm318, %v317
    %s325 = scalar_lea.vmem %s1, 119
    %326 = vst.msk [vmem:[%s325] sm:$0x8] %vm318, %v317
    %v327 = vld [vmem:[#allocation0] sm:$0xf]
    %328 = vrot.lane.b32.xlu0 %v327, 101
    %v329 = vpop.permute.xlu0 %328
    %vm330 = vcmask 7168
    %s331 = scalar_lea.vmem %s1, 27
    %332 = vst.msk [vmem:[%s331] sm:$0x1] %vm330, %v329
    %s333 = scalar_lea.vmem %s1, 58
    %334 = vst.msk [vmem:[%s333] sm:$0x2] %vm330, %v329
    %s335 = scalar_lea.vmem %s1, 89
    %336 = vst.msk [vmem:[%s335] sm:$0x4] %vm330, %v329
    %s337 = scalar_lea.vmem %s1, 120
    %338 = vst.msk [vmem:[%s337] sm:$0x8] %vm330, %v329
    %v339 = vld [vmem:[#allocation0] sm:$0xf]
    %340 = vrot.lane.b32.xlu0 %v339, 100
    %v341 = vpop.permute.xlu0 %340
    %vm342 = vcmask 7168
    %s343 = scalar_lea.vmem %s1, 28
    %344 = vst.msk [vmem:[%s343] sm:$0x1] %vm342, %v341
    %s345 = scalar_lea.vmem %s1, 59
    %346 = vst.msk [vmem:[%s345] sm:$0x2] %vm342, %v341
    %s347 = scalar_lea.vmem %s1, 90
    %348 = vst.msk [vmem:[%s347] sm:$0x4] %vm342, %v341
    %s349 = scalar_lea.vmem %s1, 121
    %350 = vst.msk [vmem:[%s349] sm:$0x8] %vm342, %v341
    %v351 = vld [vmem:[#allocation0] sm:$0xf]
    %352 = vrot.lane.b32.xlu0 %v351, 99
    %v353 = vpop.permute.xlu0 %352
    %vm354 = vcmask 7168
    %s355 = scalar_lea.vmem %s1, 29
    %356 = vst.msk [vmem:[%s355] sm:$0x1] %vm354, %v353
    %s357 = scalar_lea.vmem %s1, 60
    %358 = vst.msk [vmem:[%s357] sm:$0x2] %vm354, %v353
    %s359 = scalar_lea.vmem %s1, 91
    %360 = vst.msk [vmem:[%s359] sm:$0x4] %vm354, %v353
    %s361 = scalar_lea.vmem %s1, 122
    %362 = vst.msk [vmem:[%s361] sm:$0x8] %vm354, %v353
    %v363 = vld [vmem:[#allocation0] sm:$0xf]
    %364 = vrot.lane.b32.xlu0 %v363, 98
    %v365 = vpop.permute.xlu0 %364
    %vm366 = vcmask 7168
    %s367 = scalar_lea.vmem %s1, 30
    %368 = vst.msk [vmem:[%s367] sm:$0x1] %vm366, %v365
    %s369 = scalar_lea.vmem %s1, 61
    %370 = vst.msk [vmem:[%s369] sm:$0x2] %vm366, %v365
    %s371 = scalar_lea.vmem %s1, 92
    %372 = vst.msk [vmem:[%s371] sm:$0x4] %vm366, %v365
    %s373 = scalar_lea.vmem %s1, 123
    %374 = vst.msk [vmem:[%s373] sm:$0x8] %vm366, %v365
    %v375 = vld [vmem:[#allocation0] sm:$0xf]
    %376 = vrot.lane.b32.xlu0 %v375, 97
    %v377 = vpop.permute.xlu0 %376
    %vm378 = vcmask 7168
    %s379 = scalar_lea.vmem %s1, 31
    %380 = vst.msk [vmem:[%s379] sm:$0x1] %vm378, %v377
    %s381 = scalar_lea.vmem %s1, 62
    %382 = vst.msk [vmem:[%s381] sm:$0x2] %vm378, %v377
    %s383 = scalar_lea.vmem %s1, 93
    %384 = vst.msk [vmem:[%s383] sm:$0x4] %vm378, %v377
    %s385 = scalar_lea.vmem %s1, 124
    %386 = vst.msk [vmem:[%s385] sm:$0x8] %vm378, %v377

// kernel: generator_forward.11
$region0: #{generator_forward.11}
  #allocation0 [shape = 'u32[]', space=smem, size = 0x4, offset = 0x4, fixed_abs, tag = 'smem constant byte address 0x4 - core index']
  #allocation1 [shape = 'u32[144,128]{1,0:T(1,128)}', space=vmem, size = 0x12000, scoped, tag = 'internal scratch']
  #allocation2 [shape = 'f32[128,128]{1,0:T(8,128)}', space=vmem, size = 0x10000, scoped, tag = 'scratch operand']
  %s0 = inlined_call_operand.vmem [shape: bf16[9,128,64], index: 0, kind: input, shape index: {}]
  %s1 = inlined_call_operand.vmem [shape: bf16[9,64,128], index: 1, kind: input, shape index: {}]
  %s2 = inlined_call_operand.vmem [shape: bf16[128,128], index: 2, kind: output, shape index: {0}]
  %s3 = inlined_call_operand.vmem [shape: f32[1,128,2], index: 3, kind: output, shape index: {1}]
  %4 = xla_tuple %s2, %s3
  %s5 = sld [smem:[#allocation0]]
  $region57: #{generator_forward.11} parent=0
    _
  %s7 = ssub.s32 1, %s5
  %s8 = scalar_select 0, %s7, %s5
  loop: start=0, step=1, limit=11
  $region2: #{generator_forward.11} parent=0 // loop_pre_header
    _
  $region3: #{generator_forward.11} parent=0 // loop_header
    %s10 = sphi 0, %s14
    %p11 = scmp.ge.s32.totalorder %s10, 11
    %s17 = sphi 0, %s29
    %s18 = sphi 0, %s25
    %s19 = sphi 0, %s17
    %s20 = sphi 0, %s18
    %s21 = sphi 0, %s19
    %s22 = sphi 0, %s20
    %s32 = sphi 0, %s34
    %s35 = sphi 0, %s32
    %s36 = sphi 0, %s35
    %s52 = sphi 0, %s36
    %s60 = sphi 0, %s62
    %s63 = sphi 0, %s60
    %s64 = sphi 0, %s63
    %s80 = sphi 0, %s64
    %s86 = sphi 0, %s88
    %s89 = sphi 0, %s86
    %s90 = sphi 0, %s89
    %s106 = sphi 0, %s90
    %s112 = sphi 0, %s114
    %s115 = sphi 0, %s112
    %s116 = sphi 0, %s115
    %s132 = sphi 0, %s116
  $region4: #{generator_forward.11} parent=0 // loop_header_branch
    %13 = sbr.rel (%p11) target = $region8
  $region5: #{generator_forward.11} parent=0 // loop_body
    %s15 = ssub.s32 %s10, 1
    %s16 = ssub.s32 %s10, 2
    %s23 = sadd.s32 1, %s18
    %p24 = scmp.ge.s32.totalorder %s23, 9
    %s25 = scalar_select %p24, 0, %s23
    %s26 = sadd.s32 1, %s17
    %s27 = scalar_select %p24, %s26, %s17
    %p28 = scmp.ge.s32.totalorder %s27, 1
    %s29 = scalar_select %p28, 0, %s27
    %s30 = ssub.s32 %s18, %s25
    %p31 = scmp.eq.s32.totalorder %s30, 0
    %s33 = sadd.s32 %s32, 1
    %s34 = scalar_select %p31, %s32, %s33
    %p37 = pneg %p31
    %p38 = scmp.eq.s32.totalorder %s10, 8
    %p39 = por %p37, %p38
    %p40 = scmp.ne.s32.totalorder %s32, %s35
    %p41 = scmp.eq.s32.totalorder %s10, 0
    %p42 = por %p40, %p41
    %p43 = scmp.ne.s32.totalorder %s32, %s35
    %p44 = scmp.eq.s32.totalorder %s15, 8
    %p45 = por %p43, %p44
    %p46 = scmp.ne.s32.totalorder %s35, %s36
    %p47 = scmp.eq.s32.totalorder %s15, 0
    %p48 = por %p46, %p47
    %p49 = scmp.ne.s32.totalorder %s35, %s36
    %p50 = scmp.eq.s32.totalorder %s16, 8
    %p51 = por %p49, %p50
    %p53 = scmp.ne.s32.totalorder %s36, %s52
    %p54 = scmp.eq.s32.totalorder %s16, 0
    %p55 = por %p53, %p54
    %s56 = ssub.s32 %s18, %s25
    %s57 = ssub.s32 %s17, %s29
    %s58 = sor.u32 %s56, %s57
    %p59 = scmp.eq.s32.totalorder %s58, 0
    %s61 = sadd.s32 %s60, 1
    %s62 = scalar_select %p59, %s60, %s61
    %p65 = pneg %p59
    %p66 = scmp.eq.s32.totalorder %s10, 8
    %p67 = por %p65, %p66
    %p68 = scmp.ne.s32.totalorder %s60, %s63
    %p69 = scmp.eq.s32.totalorder %s10, 0
    %p70 = por %p68, %p69
    %p71 = scmp.ne.s32.totalorder %s60, %s63
    %p72 = scmp.eq.s32.totalorder %s15, 8
    %p73 = por %p71, %p72
    %p74 = scmp.ne.s32.totalorder %s63, %s64
    %p75 = scmp.eq.s32.totalorder %s15, 0
    %p76 = por %p74, %p75
    %p77 = scmp.ne.s32.totalorder %s63, %s64
    %p78 = scmp.eq.s32.totalorder %s16, 8
    %p79 = por %p77, %p78
    %p81 = scmp.ne.s32.totalorder %s64, %s80
    %p82 = scmp.eq.s32.totalorder %s16, 0
    %p83 = por %p81, %p82
    %s84 = ssub.s32 %s17, %s29
    %p85 = scmp.eq.s32.totalorder %s84, 0
    %s87 = sadd.s32 %s86, 1
    %s88 = scalar_select %p85, %s86, %s87
    %p91 = pneg %p85
    %p92 = scmp.eq.s32.totalorder %s10, 8
    %p93 = por %p91, %p92
    %p94 = scmp.ne.s32.totalorder %s86, %s89
    %p95 = scmp.eq.s32.totalorder %s10, 0
    %p96 = por %p94, %p95
    %p97 = scmp.ne.s32.totalorder %s86, %s89
    %p98 = scmp.eq.s32.totalorder %s15, 8
    %p99 = por %p97, %p98
    %p100 = scmp.ne.s32.totalorder %s89, %s90
    %p101 = scmp.eq.s32.totalorder %s15, 0
    %p102 = por %p100, %p101
    %p103 = scmp.ne.s32.totalorder %s89, %s90
    %p104 = scmp.eq.s32.totalorder %s16, 8
    %p105 = por %p103, %p104
    %p107 = scmp.ne.s32.totalorder %s90, %s106
    %p108 = scmp.eq.s32.totalorder %s16, 0
    %p109 = por %p107, %p108
    %s110 = ssub.s32 %s17, %s29
    %p111 = scmp.eq.s32.totalorder %s110, 0
    %s113 = sadd.s32 %s112, 1
    %s114 = scalar_select %p111, %s112, %s113
    %p117 = pneg %p111
    %p118 = scmp.eq.s32.totalorder %s10, 8
    %p119 = por %p117, %p118
    %p120 = scmp.ne.s32.totalorder %s112, %s115
    %p121 = scmp.eq.s32.totalorder %s10, 0
    %p122 = por %p120, %p121
    %p123 = scmp.ne.s32.totalorder %s112, %s115
    %p124 = scmp.eq.s32.totalorder %s15, 8
    %p125 = por %p123, %p124
    %p126 = scmp.ne.s32.totalorder %s115, %s116
    %p127 = scmp.eq.s32.totalorder %s15, 0
    %p128 = por %p126, %p127
    %p129 = scmp.ne.s32.totalorder %s115, %s116
    %p130 = scmp.eq.s32.totalorder %s16, 8
    %p131 = por %p129, %p130
    %p133 = scmp.ne.s32.totalorder %s116, %s132
    %p134 = scmp.eq.s32.totalorder %s16, 0
    %p135 = por %p133, %p134
    %p136 = scmp.le.s32.totalorder 1, %s10
    %p137 = scmp.lt.s32.totalorder %s10, 10
    %p138 = pnand %p136, %p137
    %p139 = pneg %p138
    // Predicated region
    $region9: #{generator_forward.11} parent=5 // pred_check
      _
    $region10: #{generator_forward.11} parent=5 // pred_check_branch
      %141 = sbr.rel (%p138) target = $region12
    $region11: #{generator_forward.11} parent=5 // pred_region
      %s142 = ssub.s32 %s10, 1
    $region12: #{generator_forward.11} parent=5 // pred_fallthru
      _
    %p143 = scmp.lt.s32.totalorder %s10, 9
    // Predicated region
    $region13: #{generator_forward.11} parent=5 // pred_check
      %p144 = pneg %p143
    $region14: #{generator_forward.11} parent=5 // pred_check_branch
      %146 = sbr.rel (%p144) target = $region16
    $region15: #{generator_forward.11} parent=5 // pred_region
      // Predicated region
      $region17: #{generator_forward.11} parent=15 // pred_check
        %p147 = pneg %p42
      $region18: #{generator_forward.11} parent=15 // pred_check_branch
        %149 = sbr.rel (%p147) target = $region20
      $region19: #{generator_forward.11} parent=15 // pred_region
        %p150 = scmp.lt.s32.totalorder %s18, 8
        %s151 = scalar_select %p150, %s18, 8
        %s152 = smul.addr %s151, 16
        %s153 = smul.addr %s152, 4
        %s154 = scalar_lea.vmem %s0, %s153
      $region20: #{generator_forward.11} parent=15 // pred_fallthru
        _
      // Predicated region
      $region21: #{generator_forward.11} parent=15 // pred_check
        %p155 = pneg %p70
      $region22: #{generator_forward.11} parent=15 // pred_check_branch
        %157 = sbr.rel (%p155) target = $region24
      $region23: #{generator_forward.11} parent=15 // pred_region
        %p158 = scmp.lt.s32.totalorder %s18, 8
        %s159 = scalar_select %p158, %s18, 8
        %p160 = scmp.lt.s32.totalorder %s17, 0
        %s161 = scalar_select %p160, %s17, 0
        %s162 = smul.addr %s159, 8
        %s163 = sadd.s32 %s161, %s162
        %s164 = smul.addr %s163, 4
        %s165 = scalar_lea.vmem %s1, %s164
      $region24: #{generator_forward.11} parent=15 // pred_fallthru
        _
    $region16: #{generator_forward.11} parent=5 // pred_fallthru
      _
    %p166 = scmp.le.s32.totalorder 1, %s10
    %p167 = scmp.lt.s32.totalorder %s10, 10
    %p168 = pnand %p166, %p167
    %p169 = pneg %p168
    // Predicated region
    $region25: #{generator_forward.11} parent=5 // pred_check
      _
    $region26: #{generator_forward.11} parent=5 // pred_check_branch
      %171 = sbr.rel (%p168) target = $region28
    $region27: #{generator_forward.11} parent=5 // pred_region
      %s172 = ssub.s32 %s10, 1
      %p173 = scmp.lt.s32.totalorder %s20, 8
      %s174 = scalar_select %p173, %s20, 8
      %s175 = smul.addr %s174, 16
      %s176 = smul.addr %s175, 4
      %s177 = scalar_lea.vmem %s0, %s176
      %p178 = pneg %p48
      %p179 = pneg %p45
      %p180 = scmp.lt.s32.totalorder %s20, 8
      %s181 = scalar_select %p180, %s20, 8
      %p182 = scmp.lt.s32.totalorder %s19, 0
      %s183 = scalar_select %p182, %s19, 0
      %s184 = smul.addr %s181, 8
      %s185 = sadd.s32 %s183, %s184
      %s186 = smul.addr %s185, 4
      %s187 = scalar_lea.vmem %s1, %s186
      %p188 = pneg %p76
      %p189 = pneg %p73
      %p190 = pneg %p102
      %p191 = pneg %p99
      %p192 = scmp.lt.s32.totalorder %s19, 0
      %s193 = scalar_select %p192, %s19, 0
      %s194 = smul.addr %s193, 4
      %s195 = scalar_lea.vmem %s2, %s194
      %p196 = pneg %p128
      %p197 = pneg %p125
      %p198 = scmp.lt.s32.totalorder %s19, 0
      %s199 = scalar_select %p198, %s19, 0
      %s200 = smul.addr %s199, 16
      %s201 = smul.addr %s200, 8
      %s202 = scalar_lea.vmem %s3, %s201
      %p203 = scmp.lt.s32.totalorder %s20, 8
      %s204 = scalar_select %p203, %s20, 8
      %s205 = smul.addr %s204, 16
      %s206 = smul.addr %s205, 4
      %s207 = scalar_lea.vmem %s0, %s206
      %p208 = scmp.lt.s32.totalorder %s20, 8
      %s209 = scalar_select %p208, %s20, 8
      %p210 = scmp.lt.s32.totalorder %s19, 0
      %s211 = scalar_select %p210, %s19, 0
      %s212 = smul.addr %s209, 8
      %s213 = sadd.s32 %s211, %s212
      %s214 = smul.addr %s213, 4
      %s215 = scalar_lea.vmem %s1, %s214
      %p216 = scmp.lt.s32.totalorder %s19, 0
      %s217 = scalar_select %p216, %s19, 0
      %s218 = smul.addr %s217, 4
      %s219 = scalar_lea.vmem %s2, %s218
      %p220 = scmp.lt.s32.totalorder %s19, 0
      %s221 = scalar_select %p220, %s19, 0
      %s222 = smul.addr %s221, 16
      %s223 = smul.addr %s222, 8
      %s224 = scalar_lea.vmem %s3, %s223
      %p226 = scmp.eq.s32.totalorder %s20, 0
      // Predicated region
      $region29: #{generator_forward.11} parent=27 // pred_check
        %p227 = pneg %p226
      $region30: #{generator_forward.11} parent=27 // pred_check_branch
        %229 = sbr.rel (%p227) target = $region32
      $region31: #{generator_forward.11} parent=27 // pred_region
        %230 = vst [vmem:[#allocation2] sm:$0xff] 0.0
        %231 = vst [vmem:[#allocation2 + $0x8] sm:$0xff] 0.0
        %232 = vst [vmem:[#allocation2 + $0x10] sm:$0xff] 0.0
        %233 = vst [vmem:[#allocation2 + $0x18] sm:$0xff] 0.0
        %234 = vst [vmem:[#allocation2 + $0x20] sm:$0xff] 0.0
        %235 = vst [vmem:[#allocation2 + $0x28] sm:$0xff] 0.0
        %236 = vst [vmem:[#allocation2 + $0x30] sm:$0xff] 0.0
        %237 = vst [vmem:[#allocation2 + $0x38] sm:$0xff] 0.0
        %238 = vst [vmem:[#allocation2 + $0x40] sm:$0xff] 0.0
        %239 = vst [vmem:[#allocation2 + $0x48] sm:$0xff] 0.0
        %240 = vst [vmem:[#allocation2 + $0x50] sm:$0xff] 0.0
        %241 = vst [vmem:[#allocation2 + $0x58] sm:$0xff] 0.0
        %242 = vst [vmem:[#allocation2 + $0x60] sm:$0xff] 0.0
        %243 = vst [vmem:[#allocation2 + $0x68] sm:$0xff] 0.0
        %244 = vst [vmem:[#allocation2 + $0x70] sm:$0xff] 0.0
        %245 = vst [vmem:[#allocation2 + $0x78] sm:$0xff] 0.0
      $region32: #{generator_forward.11} parent=27 // pred_fallthru
        _
      %v246 = vld [vmem:[#allocation2] sm:$0xff]
      %v247 = vld [vmem:[#allocation2 + $0x8] sm:$0xff]
      %v248 = vld [vmem:[#allocation2 + $0x10] sm:$0xff]
      %v249 = vld [vmem:[#allocation2 + $0x18] sm:$0xff]
      %v250 = vld [vmem:[#allocation2 + $0x20] sm:$0xff]
      %v251 = vld [vmem:[#allocation2 + $0x28] sm:$0xff]
      %v252 = vld [vmem:[#allocation2 + $0x30] sm:$0xff]
      %v253 = vld [vmem:[#allocation2 + $0x38] sm:$0xff]
      %v254 = vld [vmem:[#allocation2 + $0x40] sm:$0xff]
      %v255 = vld [vmem:[#allocation2 + $0x48] sm:$0xff]
      %v256 = vld [vmem:[#allocation2 + $0x50] sm:$0xff]
      %v257 = vld [vmem:[#allocation2 + $0x58] sm:$0xff]
      %v258 = vld [vmem:[#allocation2 + $0x60] sm:$0xff]
      %v259 = vld [vmem:[#allocation2 + $0x68] sm:$0xff]
      %v260 = vld [vmem:[#allocation2 + $0x70] sm:$0xff]
      %v261 = vld [vmem:[#allocation2 + $0x78] sm:$0xff]
      %v262 = vld [vmem:[%s207] sm:$0xf]
      %v263 = vld [vmem:[%s207 + $0x4] sm:$0xf]
      %v264 = vld [vmem:[%s207 + $0x8] sm:$0xf]
      %v265 = vld [vmem:[%s207 + $0xc] sm:$0xf]
      %v266 = vld [vmem:[%s207 + $0x10] sm:$0xf]
      %v267 = vld [vmem:[%s207 + $0x14] sm:$0xf]
      %v268 = vld [vmem:[%s207 + $0x18] sm:$0xf]
      %v269 = vld [vmem:[%s207 + $0x1c] sm:$0xf]
      %v270 = vld [vmem:[%s207 + $0x20] sm:$0xf]
      %v271 = vld [vmem:[%s207 + $0x24] sm:$0xf]
      %v272 = vld [vmem:[%s207 + $0x28] sm:$0xf]
      %v273 = vld [vmem:[%s207 + $0x2c] sm:$0xf]
      %v274 = vld [vmem:[%s207 + $0x30] sm:$0xf]
      %v275 = vld [vmem:[%s207 + $0x34] sm:$0xf]
      %v276 = vld [vmem:[%s207 + $0x38] sm:$0xf]
      %v277 = vld [vmem:[%s207 + $0x3c] sm:$0xf]
      %v278 = vld [vmem:[%s215] sm:$0xf]
      %v279 = vld [vmem:[%s215 + $0x4] sm:$0xf]
      %v280 = vld [vmem:[%s215 + $0x8] sm:$0xf]
      %v281 = vld [vmem:[%s215 + $0xc] sm:$0xf]
      %v282 = vld [vmem:[%s215 + $0x10] sm:$0xf]
      %v283 = vld [vmem:[%s215 + $0x14] sm:$0xf]
      %v284 = vld [vmem:[%s215 + $0x18] sm:$0xf]
      %v285 = vld [vmem:[%s215 + $0x1c] sm:$0xf]
      %v302 = vunpack.c.l.b16 %v262
      %v303 = vunpack.c.l.b16 %v263
      %v304 = vunpack.c.l.b16 %v264
      %v305 = vunpack.c.l.b16 %v265
      %v306 = vunpack.c.l.b16 %v266
      %v307 = vunpack.c.l.b16 %v267
      %v308 = vunpack.c.l.b16 %v268
      %v309 = vunpack.c.l.b16 %v269
      %v310 = vunpack.c.l.b16 %v270
      %v311 = vunpack.c.l.b16 %v271
      %v312 = vunpack.c.l.b16 %v272
      %v313 = vunpack.c.l.b16 %v273
      %v314 = vunpack.c.l.b16 %v274
      %v315 = vunpack.c.l.b16 %v275
      %v316 = vunpack.c.l.b16 %v276
      %v317 = vunpack.c.l.b16 %v277
      %v318 = vpack.c.b16 %v303, %v302
      %v319 = vpack.c.b16 %v305, %v304
      %v320 = vpack.c.b16 %v307, %v306
      %v321 = vpack.c.b16 %v309, %v308
      %v322 = vpack.c.b16 %v311, %v310
      %v323 = vpack.c.b16 %v313, %v312
      %v324 = vpack.c.b16 %v315, %v314
      %v325 = vpack.c.b16 %v317, %v316
      %v334 = vunpack.c.l.b16 %v278
      %v335 = vunpack.c.l.b16 %v279
      %v336 = vunpack.c.l.b16 %v280
      %v337 = vunpack.c.l.b16 %v281
      %v338 = vunpack.c.l.b16 %v282
      %v339 = vunpack.c.l.b16 %v283
      %v340 = vunpack.c.l.b16 %v284
      %v341 = vunpack.c.l.b16 %v285
      %v342 = vpack.c.b16 %v335, %v334
      %v343 = vpack.c.b16 %v337, %v336
      %v344 = vpack.c.b16 %v339, %v338
      %v345 = vpack.c.b16 %v341, %v340
      %vm350 = vcmask 523264
      %v352 = vsel %vm350, %v318, 0
      %v355 = vsel %vm350, %v319, 0
      %v358 = vsel %vm350, %v320, 0
      %v361 = vsel %vm350, %v321, 0
      %v364 = vsel %vm350, %v322, 0
      %v367 = vsel %vm350, %v323, 0
      %v370 = vsel %vm350, %v324, 0
      %v373 = vsel %vm350, %v325, 0
      %375 = vmatprep.subr.bf16.mxu0 0
      %376 = vmatpush1.bf16.msra.mxu0 %v342
      %377 = vmatprep.subr.bf16.mxu0 0
      %378 = vmatpush1.bf16.msra.mxu0 %v343
      %379 = vmatprep.subr.bf16.mxu0 0
      %380 = vmatpush1.bf16.msra.mxu0 %v344
      %381 = vmatprep.subr.bf16.mxu0 0
      %382 = vmatpush1.bf16.msra.mxu0 %v345
      %383 = vmatprep.subr.bf16.mxu0 0
      %384 = vmatpush1.bf16.msra.mxu0 0
      %385 = vmatprep.subr.bf16.mxu0 0
      %386 = vmatpush1.bf16.msra.mxu0 0
      %387 = vmatprep.subr.bf16.mxu0 0
      %388 = vmatpush1.bf16.msra.mxu0 0
      %389 = vmatprep.subr.bf16.mxu0 0
      %390 = vmatpush1.bf16.msra.mxu0 0
      %391 = vmatprep.subr.bf16.mxu0 0
      %392 = vmatpush1.bf16.msra.mxu0 0
      %393 = vmatprep.subr.bf16.mxu0 0
      %394 = vmatpush1.bf16.msra.mxu0 0
      %395 = vmatprep.subr.bf16.mxu0 0
      %396 = vmatpush1.bf16.msra.mxu0 0
      %397 = vmatprep.subr.bf16.mxu0 0
      %398 = vmatpush1.bf16.msra.mxu0 0
      %399 = vmatprep.subr.bf16.mxu0 0
      %400 = vmatpush1.bf16.msra.mxu0 0
      %401 = vmatprep.subr.bf16.mxu0 0
      %402 = vmatpush1.bf16.msra.mxu0 0
      %403 = vmatprep.subr.bf16.mxu0 0
      %404 = vmatpush1.bf16.msra.mxu0 0
      %405 = vmatprep.subr.bf16.mxu0 0
      %406 = vmatpush1.bf16.msra.mxu0 0
      %407 = vmatprep.mubr.bf16.mxu0 0
      %408 = vmatmul.mubr.bf16.gmra.mrb[0].mxu0 %v352
      %v409 = vpop.f32.mrb[0].mxu0
      %v410 = vadd.f32 0.0, %v409
      %v411 = vpop.f32.mrb[0].mxu0
      %v412 = vpop.f32.mrb[0].mxu0
      %v413 = vadd.f32 0.0, %v412
      %v414 = vpop.f32.mrb[0].mxu0
      %415 = vmatprep.mubr.bf16.mxu0 0
      %416 = vmatmul.mubr.bf16.gmra.mrb[0].mxu0 %v355
      %v417 = vpop.f32.mrb[0].mxu0
      %v418 = vadd.f32 0.0, %v417
      %v419 = vpop.f32.mrb[0].mxu0
      %v420 = vpop.f32.mrb[0].mxu0
      %v421 = vadd.f32 0.0, %v420
      %v422 = vpop.f32.mrb[0].mxu0
      %423 = vmatprep.mubr.bf16.mxu0 0
      %424 = vmatmul.mubr.bf16.gmra.mrb[0].mxu0 %v358
      %v425 = vpop.f32.mrb[0].mxu0
      %v426 = vadd.f32 0.0, %v425
      %v427 = vpop.f32.mrb[0].mxu0
      %v428 = vpop.f32.mrb[0].mxu0
      %v429 = vadd.f32 0.0, %v428
      %v430 = vpop.f32.mrb[0].mxu0
      %431 = vmatprep.mubr.bf16.mxu0 0
      %432 = vmatmul.mubr.bf16.gmra.mrb[0].mxu0 %v361
      %v433 = vpop.f32.mrb[0].mxu0
      %v434 = vadd.f32 0.0, %v433
      %v435 = vpop.f32.mrb[0].mxu0
      %v436 = vpop.f32.mrb[0].mxu0
      %v437 = vadd.f32 0.0, %v436
      %v438 = vpop.f32.mrb[0].mxu0
      %439 = vmatprep.mubr.bf16.mxu0 0
      %440 = vmatmul.mubr.bf16.gmra.mrb[0].mxu0 %v364
      %v441 = vpop.f32.mrb[0].mxu0
      %v442 = vadd.f32 0.0, %v441
      %v443 = vpop.f32.mrb[0].mxu0
      %v444 = vpop.f32.mrb[0].mxu0
      %v445 = vadd.f32 0.0, %v444
      %v446 = vpop.f32.mrb[0].mxu0
      %447 = vmatprep.mubr.bf16.mxu0 0
      %448 = vmatmul.mubr.bf16.gmra.mrb[0].mxu0 %v367
      %v449 = vpop.f32.mrb[0].mxu0
      %v450 = vadd.f32 0.0, %v449
      %v451 = vpop.f32.mrb[0].mxu0
      %v452 = vpop.f32.mrb[0].mxu0
      %v453 = vadd.f32 0.0, %v452
      %v454 = vpop.f32.mrb[0].mxu0
      %455 = vmatprep.mubr.bf16.mxu0 0
      %456 = vmatmul.mubr.bf16.gmra.mrb[0].mxu0 %v370
      %v457 = vpop.f32.mrb[0].mxu0
      %v458 = vadd.f32 0.0, %v457
      %v459 = vpop.f32.mrb[0].mxu0
      %v460 = vpop.f32.mrb[0].mxu0
      %v461 = vadd.f32 0.0, %v460
      %v462 = vpop.f32.mrb[0].mxu0
      %463 = vmatprep.mubr.bf16.mxu0 0
      %464 = vmatmul.mubr.bf16.gmra.mrb[0].mxu0 %v373
      %v465 = vpop.f32.mrb[0].mxu0
      %v466 = vadd.f32 0.0, %v465
      %v467 = vpop.f32.mrb[0].mxu0
      %v468 = vpop.f32.mrb[0].mxu0
      %v469 = vadd.f32 0.0, %v468
      %v470 = vpop.f32.mrb[0].mxu0
      %471 = vdwg.mxu0
      %v472 = vadd.f32 %v246, %v410
      %v473 = vadd.f32 %v247, %v413
      %v474 = vadd.f32 %v248, %v418
      %v475 = vadd.f32 %v249, %v421
      %v476 = vadd.f32 %v250, %v426
      %v477 = vadd.f32 %v251, %v429
      %v478 = vadd.f32 %v252, %v434
      %v479 = vadd.f32 %v253, %v437
      %v480 = vadd.f32 %v254, %v442
      %v481 = vadd.f32 %v255, %v445
      %v482 = vadd.f32 %v256, %v450
      %v483 = vadd.f32 %v257, %v453
      %v484 = vadd.f32 %v258, %v458
      %v485 = vadd.f32 %v259, %v461
      %v486 = vadd.f32 %v260, %v466
      %v487 = vadd.f32 %v261, %v469
      %488 = vst [vmem:[#allocation2] sm:$0xff] %v472
      %489 = vst [vmem:[#allocation2 + $0x8] sm:$0xff] %v473
      %490 = vst [vmem:[#allocation2 + $0x10] sm:$0xff] %v474
      %491 = vst [vmem:[#allocation2 + $0x18] sm:$0xff] %v475
      %492 = vst [vmem:[#allocation2 + $0x20] sm:$0xff] %v476
      %493 = vst [vmem:[#allocation2 + $0x28] sm:$0xff] %v477
      %494 = vst [vmem:[#allocation2 + $0x30] sm:$0xff] %v478
      %495 = vst [vmem:[#allocation2 + $0x38] sm:$0xff] %v479
      %496 = vst [vmem:[#allocation2 + $0x40] sm:$0xff] %v480
      %497 = vst [vmem:[#allocation2 + $0x48] sm:$0xff] %v481
      %498 = vst [vmem:[#allocation2 + $0x50] sm:$0xff] %v482
      %499 = vst [vmem:[#allocation2 + $0x58] sm:$0xff] %v483
      %500 = vst [vmem:[#allocation2 + $0x60] sm:$0xff] %v484
      %501 = vst [vmem:[#allocation2 + $0x68] sm:$0xff] %v485
      %502 = vst [vmem:[#allocation2 + $0x70] sm:$0xff] %v486
      %503 = vst [vmem:[#allocation2 + $0x78] sm:$0xff] %v487
      %p504 = scmp.eq.s32.totalorder %s20, 8
      // Predicated region
      $region33: #{generator_forward.11} parent=27 // pred_check
        %p505 = pneg %p504
      $region34: #{generator_forward.11} parent=27 // pred_check_branch
        %507 = sbr.rel (%p505) target = $region36
      $region35: #{generator_forward.11} parent=27 // pred_region
        %v508 = vld [vmem:[#allocation2] sm:$0xff]
        %v509 = vld [vmem:[#allocation2 + $0x8] sm:$0xff]
        %v510 = vld [vmem:[#allocation2 + $0x10] sm:$0xff]
        %v511 = vld [vmem:[#allocation2 + $0x18] sm:$0xff]
        %v512 = vld [vmem:[#allocation2 + $0x20] sm:$0xff]
        %v513 = vld [vmem:[#allocation2 + $0x28] sm:$0xff]
        %v514 = vld [vmem:[#allocation2 + $0x30] sm:$0xff]
        %v515 = vld [vmem:[#allocation2 + $0x38] sm:$0xff]
        %v516 = vld [vmem:[#allocation2 + $0x40] sm:$0xff]
        %v517 = vld [vmem:[#allocation2 + $0x48] sm:$0xff]
        %v518 = vld [vmem:[#allocation2 + $0x50] sm:$0xff]
        %v519 = vld [vmem:[#allocation2 + $0x58] sm:$0xff]
        %v520 = vld [vmem:[#allocation2 + $0x60] sm:$0xff]
        %v521 = vld [vmem:[#allocation2 + $0x68] sm:$0xff]
        %v522 = vld [vmem:[#allocation2 + $0x70] sm:$0xff]
        %v523 = vld [vmem:[#allocation2 + $0x78] sm:$0xff]
        %524 = vadd.xlane.f32.xlu0 %v508
        %v525 = vpop.xlane.xlu0 %524
        %526 = vadd.xlane.f32.xlu0 %v509
        %v527 = vpop.xlane.xlu0 %526
        %528 = vadd.xlane.f32.xlu0 %v510
        %v529 = vpop.xlane.xlu0 %528
        %530 = vadd.xlane.f32.xlu0 %v511
        %v531 = vpop.xlane.xlu0 %530
        %532 = vadd.xlane.f32.xlu0 %v512
        %v533 = vpop.xlane.xlu0 %532
        %534 = vadd.xlane.f32.xlu0 %v513
        %v535 = vpop.xlane.xlu0 %534
        %536 = vadd.xlane.f32.xlu0 %v514
        %v537 = vpop.xlane.xlu0 %536
        %538 = vadd.xlane.f32.xlu0 %v515
        %v539 = vpop.xlane.xlu0 %538
        %540 = vadd.xlane.f32.xlu0 %v516
        %v541 = vpop.xlane.xlu0 %540
        %542 = vadd.xlane.f32.xlu0 %v517
        %v543 = vpop.xlane.xlu0 %542
        %544 = vadd.xlane.f32.xlu0 %v518
        %v545 = vpop.xlane.xlu0 %544
        %546 = vadd.xlane.f32.xlu0 %v519
        %v547 = vpop.xlane.xlu0 %546
        %548 = vadd.xlane.f32.xlu0 %v520
        %v549 = vpop.xlane.xlu0 %548
        %550 = vadd.xlane.f32.xlu0 %v521
        %v551 = vpop.xlane.xlu0 %550
        %552 = vadd.xlane.f32.xlu0 %v522
        %v553 = vpop.xlane.xlu0 %552
        %554 = vadd.xlane.f32.xlu0 %v523
        %v555 = vpop.xlane.xlu0 %554
        %v556 = vmul.f32 %v508, %v508
        %v557 = vmul.f32 %v509, %v509
        %v558 = vmul.f32 %v510, %v510
        %v559 = vmul.f32 %v511, %v511
        %v560 = vmul.f32 %v512, %v512
        %v561 = vmul.f32 %v513, %v513
        %v562 = vmul.f32 %v514, %v514
        %v563 = vmul.f32 %v515, %v515
        %v564 = vmul.f32 %v516, %v516
        %v565 = vmul.f32 %v517, %v517
        %v566 = vmul.f32 %v518, %v518
        %v567 = vmul.f32 %v519, %v519
        %v568 = vmul.f32 %v520, %v520
        %v569 = vmul.f32 %v521, %v521
        %v570 = vmul.f32 %v522, %v522
        %v571 = vmul.f32 %v523, %v523
        %572 = vadd.xlane.f32.xlu0 %v556
        %v573 = vpop.xlane.xlu0 %572
        %574 = vadd.xlane.f32.xlu0 %v557
        %v575 = vpop.xlane.xlu0 %574
        %576 = vadd.xlane.f32.xlu0 %v558
        %v577 = vpop.xlane.xlu0 %576
        %578 = vadd.xlane.f32.xlu0 %v559
        %v579 = vpop.xlane.xlu0 %578
        %580 = vadd.xlane.f32.xlu0 %v560
        %v581 = vpop.xlane.xlu0 %580
        %582 = vadd.xlane.f32.xlu0 %v561
        %v583 = vpop.xlane.xlu0 %582
        %584 = vadd.xlane.f32.xlu0 %v562
        %v585 = vpop.xlane.xlu0 %584
        %586 = vadd.xlane.f32.xlu0 %v563
        %v587 = vpop.xlane.xlu0 %586
        %588 = vadd.xlane.f32.xlu0 %v564
        %v589 = vpop.xlane.xlu0 %588
        %590 = vadd.xlane.f32.xlu0 %v565
        %v591 = vpop.xlane.xlu0 %590
        %592 = vadd.xlane.f32.xlu0 %v566
        %v593 = vpop.xlane.xlu0 %592
        %594 = vadd.xlane.f32.xlu0 %v567
        %v595 = vpop.xlane.xlu0 %594
        %596 = vadd.xlane.f32.xlu0 %v568
        %v597 = vpop.xlane.xlu0 %596
        %598 = vadd.xlane.f32.xlu0 %v569
        %v599 = vpop.xlane.xlu0 %598
        %600 = vadd.xlane.f32.xlu0 %v570
        %v601 = vpop.xlane.xlu0 %600
        %602 = vadd.xlane.f32.xlu0 %v571
        %v603 = vpop.xlane.xlu0 %602
        %vm604 = vcmask 7168
        %v605 = vsel %vm604, %v525, %v573
        %v606 = vsel %vm604, %v527, %v575
        %v607 = vsel %vm604, %v529, %v577
        %v608 = vsel %vm604, %v531, %v579
        %v609 = vsel %vm604, %v533, %v581
        %v610 = vsel %vm604, %v535, %v583
        %v611 = vsel %vm604, %v537, %v585
        %v612 = vsel %vm604, %v539, %v587
        %v613 = vsel %vm604, %v541, %v589
        %v614 = vsel %vm604, %v543, %v591
        %v615 = vsel %vm604, %v545, %v593
        %v616 = vsel %vm604, %v547, %v595
        %v617 = vsel %vm604, %v549, %v597
        %v618 = vsel %vm604, %v551, %v599
        %v619 = vsel %vm604, %v553, %v601
        %v620 = vsel %vm604, %v555, %v603
        %vm621 = vcmask 15360
        %622 = vst.msk [vmem:[%s224] sm:$0xff] %vm621, %v605
        %623 = vst.msk [vmem:[%s224 + $0x8] sm:$0xff] %vm621, %v606
        %624 = vst.msk [vmem:[%s224 + $0x10] sm:$0xff] %vm621, %v607
        %625 = vst.msk [vmem:[%s224 + $0x18] sm:$0xff] %vm621, %v608
        %626 = vst.msk [vmem:[%s224 + $0x20] sm:$0xff] %vm621, %v609
        %627 = vst.msk [vmem:[%s224 + $0x28] sm:$0xff] %vm621, %v610
        %628 = vst.msk [vmem:[%s224 + $0x30] sm:$0xff] %vm621, %v611
        %629 = vst.msk [vmem:[%s224 + $0x38] sm:$0xff] %vm621, %v612
        %630 = vst.msk [vmem:[%s224 + $0x40] sm:$0xff] %vm621, %v613
        %631 = vst.msk [vmem:[%s224 + $0x48] sm:$0xff] %vm621, %v614
        %632 = vst.msk [vmem:[%s224 + $0x50] sm:$0xff] %vm621, %v615
        %633 = vst.msk [vmem:[%s224 + $0x58] sm:$0xff] %vm621, %v616
        %634 = vst.msk [vmem:[%s224 + $0x60] sm:$0xff] %vm621, %v617
        %635 = vst.msk [vmem:[%s224 + $0x68] sm:$0xff] %vm621, %v618
        %636 = vst.msk [vmem:[%s224 + $0x70] sm:$0xff] %vm621, %v619
        %637 = vst.msk [vmem:[%s224 + $0x78] sm:$0xff] %vm621, %v620
        %v638 = vpack.c.bf16 %v509, %v508
        %v639 = vpack.c.bf16 %v511, %v510
        %v640 = vpack.c.bf16 %v513, %v512
        %v641 = vpack.c.bf16 %v515, %v514
        %v642 = vpack.c.bf16 %v517, %v516
        %v643 = vpack.c.bf16 %v519, %v518
        %v644 = vpack.c.bf16 %v521, %v520
        %v645 = vpack.c.bf16 %v523, %v522
        %v654 = vunpack.c.l.b16 %v638
        %v655 = vunpack.c.h.b16 %v638
        %v656 = vunpack.c.l.b16 %v639
        %v657 = vunpack.c.h.b16 %v639
        %v658 = vunpack.c.l.b16 %v640
        %v659 = vunpack.c.h.b16 %v640
        %v660 = vunpack.c.l.b16 %v641
        %v661 = vunpack.c.h.b16 %v641
        %v662 = vunpack.c.l.b16 %v642
        %v663 = vunpack.c.h.b16 %v642
        %v664 = vunpack.c.l.b16 %v643
        %v665 = vunpack.c.h.b16 %v643
        %v666 = vunpack.c.l.b16 %v644
        %v667 = vunpack.c.h.b16 %v644
        %v668 = vunpack.c.l.b16 %v645
        %v669 = vunpack.c.h.b16 %v645
        %v670 = vpack.c.b16 %v654, %v654
        %v671 = vpack.c.b16 %v655, %v655
        %v672 = vpack.c.b16 %v656, %v656
        %v673 = vpack.c.b16 %v657, %v657
        %v674 = vpack.c.b16 %v658, %v658
        %v675 = vpack.c.b16 %v659, %v659
        %v676 = vpack.c.b16 %v660, %v660
        %v677 = vpack.c.b16 %v661, %v661
        %v678 = vpack.c.b16 %v662, %v662
        %v679 = vpack.c.b16 %v663, %v663
        %v680 = vpack.c.b16 %v664, %v664
        %v681 = vpack.c.b16 %v665, %v665
        %v682 = vpack.c.b16 %v666, %v666
        %v683 = vpack.c.b16 %v667, %v667
        %v684 = vpack.c.b16 %v668, %v668
        %v685 = vpack.c.b16 %v669, %v669
        %702 = vst [vmem:[%s219] sm:$0xf] %v670
        %703 = vst [vmem:[%s219 + $0x4] sm:$0xf] %v671
        %704 = vst [vmem:[%s219 + $0x8] sm:$0xf] %v672
        %705 = vst [vmem:[%s219 + $0xc] sm:$0xf] %v673
        %706 = vst [vmem:[%s219 + $0x10] sm:$0xf] %v674
        %707 = vst [vmem:[%s219 + $0x14] sm:$0xf] %v675
        %708 = vst [vmem:[%s219 + $0x18] sm:$0xf] %v676
        %709 = vst [vmem:[%s219 + $0x1c] sm:$0xf] %v677
        %710 = vst [vmem:[%s219 + $0x20] sm:$0xf] %v678
        %711 = vst [vmem:[%s219 + $0x24] sm:$0xf] %v679
        %712 = vst [vmem:[%s219 + $0x28] sm:$0xf] %v680
        %713 = vst [vmem:[%s219 + $0x2c] sm:$0xf] %v681
        %714 = vst [vmem:[%s219 + $0x30] sm:$0xf] %v682
        %715 = vst [vmem:[%s219 + $0x34] sm:$0xf] %v683
        %716 = vst [vmem:[%s219 + $0x38] sm:$0xf] %v684
        %717 = vst [vmem:[%s219 + $0x3c] sm:$0xf] %v685
      $region36: #{generator_forward.11} parent=27 // pred_fallthru
        _
      %p718 = scmp.lt.s32.totalorder %s19, 0
      %s719 = scalar_select %p718, %s19, 0
      %s720 = smul.addr %s719, 4
      %s721 = scalar_lea.vmem %s2, %s720
      %p722 = scmp.lt.s32.totalorder %s19, 0
      %s723 = scalar_select %p722, %s19, 0
      %s724 = smul.addr %s723, 16
      %s725 = smul.addr %s724, 8
      %s726 = scalar_lea.vmem %s3, %s725
      // Predicated region
      $region37: #{generator_forward.11} parent=27 // pred_check
        %p727 = pneg %p99
      $region38: #{generator_forward.11} parent=27 // pred_check_branch
        %729 = sbr.rel (%p727) target = $region40
      $region39: #{generator_forward.11} parent=27 // pred_region
        _
      $region40: #{generator_forward.11} parent=27 // pred_fallthru
        _
      // Predicated region
      $region41: #{generator_forward.11} parent=27 // pred_check
        %p730 = pneg %p125
      $region42: #{generator_forward.11} parent=27 // pred_check_branch
        %732 = sbr.rel (%p730) target = $region44
      $region43: #{generator_forward.11} parent=27 // pred_region
        _
      $region44: #{generator_forward.11} parent=27 // pred_fallthru
        _
      // Predicated region
      $region45: #{generator_forward.11} parent=27 // pred_check
        %p733 = pneg %p99
      $region46: #{generator_forward.11} parent=27 // pred_check_branch
        %735 = sbr.rel (%p733) target = $region48
      $region47: #{generator_forward.11} parent=27 // pred_region
        %p736 = scmp.lt.s32.totalorder %s19, 0
        %s737 = scalar_select %p736, %s19, 0
        %s738 = smul.addr %s737, 4
        %s739 = scalar_lea.vmem %s2, %s738
      $region48: #{generator_forward.11} parent=27 // pred_fallthru
        _
      // Predicated region
      $region49: #{generator_forward.11} parent=27 // pred_check
        %p740 = pneg %p125
      $region50: #{generator_forward.11} parent=27 // pred_check_branch
        %742 = sbr.rel (%p740) target = $region52
      $region51: #{generator_forward.11} parent=27 // pred_region
        %p743 = scmp.lt.s32.totalorder %s19, 0
        %s744 = scalar_select %p743, %s19, 0
        %s745 = smul.addr %s744, 16
        %s746 = smul.addr %s745, 8
        %s747 = scalar_lea.vmem %s3, %s746
      $region52: #{generator_forward.11} parent=27 // pred_fallthru
        _
    $region28: #{generator_forward.11} parent=5 // pred_fallthru
      _
    %p748 = scmp.le.s32.totalorder 2, %s10
    // Predicated region
    $region53: #{generator_forward.11} parent=5 // pred_check
      %p749 = pneg %p748
    $region54: #{generator_forward.11} parent=5 // pred_check_branch
      %751 = sbr.rel (%p749) target = $region56
    $region55: #{generator_forward.11} parent=5 // pred_region
      %s752 = ssub.s32 %s10, 2
    $region56: #{generator_forward.11} parent=5 // pred_fallthru
      _
  $region6: #{generator_forward.11} parent=0 // loop_footer
    %s14 = sadd.s32 1, %s10
  $region7: #{generator_forward.11} parent=0 // loop_footer_branch
    %9 = sbr.rel target = $region3
  $region8: #{generator_forward.11} parent=0 // loop_exit
    _

// kernel: generator_forward.12
$region0: #{generator_forward.12}
  #allocation0 [shape = 'u32[]', space=smem, size = 0x4, offset = 0x4, fixed_abs, tag = 'smem constant byte address 0x4 - core index']
  #allocation1 [shape = 'u32[144,128]{1,0:T(1,128)}', space=vmem, size = 0x12000, scoped, tag = 'internal scratch']
  %s0 = inlined_call_operand.vmem [shape: bf16[128,128], index: 0, kind: input, shape index: {}]
  %s1 = inlined_call_operand.vmem [shape: f32[128,1], index: 1, kind: input, shape index: {}]
  %s2 = inlined_call_operand.vmem [shape: f32[128,1], index: 2, kind: input, shape index: {}]
  %s3 = inlined_call_operand.vmem [shape: bf16[128,128], index: 3, kind: output, shape index: {}]
  %s4 = sld [smem:[#allocation0]]
  $region22: #{generator_forward.12} parent=0
    _
  %s6 = ssub.s32 1, %s4
  %s7 = scalar_select 0, %s6, %s4
  // Predicated region
  $region2: #{generator_forward.12} parent=0 // pred_check
    _
  $region3: #{generator_forward.12} parent=0 // pred_check_branch
    %9 = sbr.rel (0) target = $region5
  $region4: #{generator_forward.12} parent=0 // pred_region
    _
  $region5: #{generator_forward.12} parent=0 // pred_fallthru
    _
  // Predicated region
  $region6: #{generator_forward.12} parent=0 // pred_check
    _
  $region7: #{generator_forward.12} parent=0 // pred_check_branch
    %11 = sbr.rel (0) target = $region9
  $region8: #{generator_forward.12} parent=0 // pred_region
    _
  $region9: #{generator_forward.12} parent=0 // pred_fallthru
    _
  // Predicated region
  $region10: #{generator_forward.12} parent=0 // pred_check
    _
  $region11: #{generator_forward.12} parent=0 // pred_check_branch
    %13 = sbr.rel (0) target = $region13
  $region12: #{generator_forward.12} parent=0 // pred_region
    _
  $region13: #{generator_forward.12} parent=0 // pred_fallthru
    _
  %v14 = vld [vmem:[%s0] sm:$0xf]
  %v15 = vld [vmem:[%s0 + $0x4] sm:$0xf]
  %v16 = vld [vmem:[%s0 + $0x8] sm:$0xf]
  %v17 = vld [vmem:[%s0 + $0xc] sm:$0xf]
  %v18 = vld [vmem:[%s0 + $0x10] sm:$0xf]
  %v19 = vld [vmem:[%s0 + $0x14] sm:$0xf]
  %v20 = vld [vmem:[%s0 + $0x18] sm:$0xf]
  %v21 = vld [vmem:[%s0 + $0x1c] sm:$0xf]
  %v22 = vld [vmem:[%s0 + $0x20] sm:$0xf]
  %v23 = vld [vmem:[%s0 + $0x24] sm:$0xf]
  %v24 = vld [vmem:[%s0 + $0x28] sm:$0xf]
  %v25 = vld [vmem:[%s0 + $0x2c] sm:$0xf]
  %v26 = vld [vmem:[%s0 + $0x30] sm:$0xf]
  %v27 = vld [vmem:[%s0 + $0x34] sm:$0xf]
  %v28 = vld [vmem:[%s0 + $0x38] sm:$0xf]
  %v29 = vld [vmem:[%s0 + $0x3c] sm:$0xf]
  %v30 = vunpack.c.l.bf16 %v14
  %v31 = vunpack.c.l.bf16 %v15
  %v32 = vunpack.c.l.bf16 %v16
  %v33 = vunpack.c.l.bf16 %v17
  %v34 = vunpack.c.l.bf16 %v18
  %v35 = vunpack.c.l.bf16 %v19
  %v36 = vunpack.c.l.bf16 %v20
  %v37 = vunpack.c.l.bf16 %v21
  %v38 = vunpack.c.l.bf16 %v22
  %v39 = vunpack.c.l.bf16 %v23
  %v40 = vunpack.c.l.bf16 %v24
  %v41 = vunpack.c.l.bf16 %v25
  %v42 = vunpack.c.l.bf16 %v26
  %v43 = vunpack.c.l.bf16 %v27
  %v44 = vunpack.c.l.bf16 %v28
  %v45 = vunpack.c.l.bf16 %v29
  %v46 = vld [vmem:[%s1] sm:$0xff]
  %v47 = vld [vmem:[%s1 + $0x8] sm:$0xff]
  %v48 = vld [vmem:[%s1 + $0x10] sm:$0xff]
  %v49 = vld [vmem:[%s1 + $0x18] sm:$0xff]
  %v50 = vld [vmem:[%s1 + $0x20] sm:$0xff]
  %v51 = vld [vmem:[%s1 + $0x28] sm:$0xff]
  %v52 = vld [vmem:[%s1 + $0x30] sm:$0xff]
  %v53 = vld [vmem:[%s1 + $0x38] sm:$0xff]
  %v54 = vld [vmem:[%s1 + $0x40] sm:$0xff]
  %v55 = vld [vmem:[%s1 + $0x48] sm:$0xff]
  %v56 = vld [vmem:[%s1 + $0x50] sm:$0xff]
  %v57 = vld [vmem:[%s1 + $0x58] sm:$0xff]
  %v58 = vld [vmem:[%s1 + $0x60] sm:$0xff]
  %v59 = vld [vmem:[%s1 + $0x68] sm:$0xff]
  %v60 = vld [vmem:[%s1 + $0x70] sm:$0xff]
  %v61 = vld [vmem:[%s1 + $0x78] sm:$0xff]
  %63 = vset.pattern.permute.xlu0 0
  %64 = vperm.xlu0 %63, %v46
  %v65 = vpop.permute.xlu0 %64
  %68 = vset.pattern.permute.xlu0 0
  %69 = vperm.xlu0 %68, %v47
  %v70 = vpop.permute.xlu0 %69
  %73 = vset.pattern.permute.xlu0 0
  %74 = vperm.xlu0 %73, %v48
  %v75 = vpop.permute.xlu0 %74
  %78 = vset.pattern.permute.xlu0 0
  %79 = vperm.xlu0 %78, %v49
  %v80 = vpop.permute.xlu0 %79
  %83 = vset.pattern.permute.xlu0 0
  %84 = vperm.xlu0 %83, %v50
  %v85 = vpop.permute.xlu0 %84
  %88 = vset.pattern.permute.xlu0 0
  %89 = vperm.xlu0 %88, %v51
  %v90 = vpop.permute.xlu0 %89
  %93 = vset.pattern.permute.xlu0 0
  %94 = vperm.xlu0 %93, %v52
  %v95 = vpop.permute.xlu0 %94
  %98 = vset.pattern.permute.xlu0 0
  %99 = vperm.xlu0 %98, %v53
  %v100 = vpop.permute.xlu0 %99
  %103 = vset.pattern.permute.xlu0 0
  %104 = vperm.xlu0 %103, %v54
  %v105 = vpop.permute.xlu0 %104
  %108 = vset.pattern.permute.xlu0 0
  %109 = vperm.xlu0 %108, %v55
  %v110 = vpop.permute.xlu0 %109
  %113 = vset.pattern.permute.xlu0 0
  %114 = vperm.xlu0 %113, %v56
  %v115 = vpop.permute.xlu0 %114
  %118 = vset.pattern.permute.xlu0 0
  %119 = vperm.xlu0 %118, %v57
  %v120 = vpop.permute.xlu0 %119
  %123 = vset.pattern.permute.xlu0 0
  %124 = vperm.xlu0 %123, %v58
  %v125 = vpop.permute.xlu0 %124
  %128 = vset.pattern.permute.xlu0 0
  %129 = vperm.xlu0 %128, %v59
  %v130 = vpop.permute.xlu0 %129
  %133 = vset.pattern.permute.xlu0 0
  %134 = vperm.xlu0 %133, %v60
  %v135 = vpop.permute.xlu0 %134
  %138 = vset.pattern.permute.xlu0 0
  %139 = vperm.xlu0 %138, %v61
  %v140 = vpop.permute.xlu0 %139
  %v142 = vmul.f32 %v30, %v65
  %v143 = vmul.f32 %v31, %v70
  %v144 = vmul.f32 %v32, %v75
  %v145 = vmul.f32 %v33, %v80
  %v146 = vmul.f32 %v34, %v85
  %v147 = vmul.f32 %v35, %v90
  %v148 = vmul.f32 %v36, %v95
  %v149 = vmul.f32 %v37, %v100
  %v150 = vmul.f32 %v38, %v105
  %v151 = vmul.f32 %v39, %v110
  %v152 = vmul.f32 %v40, %v115
  %v153 = vmul.f32 %v41, %v120
  %v154 = vmul.f32 %v42, %v125
  %v155 = vmul.f32 %v43, %v130
  %v156 = vmul.f32 %v44, %v135
  %v157 = vmul.f32 %v45, %v140
  %v158 = vld [vmem:[%s2] sm:$0xff]
  %v159 = vld [vmem:[%s2 + $0x8] sm:$0xff]
  %v160 = vld [vmem:[%s2 + $0x10] sm:$0xff]
  %v161 = vld [vmem:[%s2 + $0x18] sm:$0xff]
  %v162 = vld [vmem:[%s2 + $0x20] sm:$0xff]
  %v163 = vld [vmem:[%s2 + $0x28] sm:$0xff]
  %v164 = vld [vmem:[%s2 + $0x30] sm:$0xff]
  %v165 = vld [vmem:[%s2 + $0x38] sm:$0xff]
  %v166 = vld [vmem:[%s2 + $0x40] sm:$0xff]
  %v167 = vld [vmem:[%s2 + $0x48] sm:$0xff]
  %v168 = vld [vmem:[%s2 + $0x50] sm:$0xff]
  %v169 = vld [vmem:[%s2 + $0x58] sm:$0xff]
  %v170 = vld [vmem:[%s2 + $0x60] sm:$0xff]
  %v171 = vld [vmem:[%s2 + $0x68] sm:$0xff]
  %v172 = vld [vmem:[%s2 + $0x70] sm:$0xff]
  %v173 = vld [vmem:[%s2 + $0x78] sm:$0xff]
  %175 = vset.pattern.permute.xlu0 0
  %176 = vperm.xlu0 %175, %v158
  %v177 = vpop.permute.xlu0 %176
  %180 = vset.pattern.permute.xlu0 0
  %181 = vperm.xlu0 %180, %v159
  %v182 = vpop.permute.xlu0 %181
  %185 = vset.pattern.permute.xlu0 0
  %186 = vperm.xlu0 %185, %v160
  %v187 = vpop.permute.xlu0 %186
  %190 = vset.pattern.permute.xlu0 0
  %191 = vperm.xlu0 %190, %v161
  %v192 = vpop.permute.xlu0 %191
  %195 = vset.pattern.permute.xlu0 0
  %196 = vperm.xlu0 %195, %v162
  %v197 = vpop.permute.xlu0 %196
  %200 = vset.pattern.permute.xlu0 0
  %201 = vperm.xlu0 %200, %v163
  %v202 = vpop.permute.xlu0 %201
  %205 = vset.pattern.permute.xlu0 0
  %206 = vperm.xlu0 %205, %v164
  %v207 = vpop.permute.xlu0 %206
  %210 = vset.pattern.permute.xlu0 0
  %211 = vperm.xlu0 %210, %v165
  %v212 = vpop.permute.xlu0 %211
  %215 = vset.pattern.permute.xlu0 0
  %216 = vperm.xlu0 %215, %v166
  %v217 = vpop.permute.xlu0 %216
  %220 = vset.pattern.permute.xlu0 0
  %221 = vperm.xlu0 %220, %v167
  %v222 = vpop.permute.xlu0 %221
  %225 = vset.pattern.permute.xlu0 0
  %226 = vperm.xlu0 %225, %v168
  %v227 = vpop.permute.xlu0 %226
  %230 = vset.pattern.permute.xlu0 0
  %231 = vperm.xlu0 %230, %v169
  %v232 = vpop.permute.xlu0 %231
  %235 = vset.pattern.permute.xlu0 0
  %236 = vperm.xlu0 %235, %v170
  %v237 = vpop.permute.xlu0 %236
  %240 = vset.pattern.permute.xlu0 0
  %241 = vperm.xlu0 %240, %v171
  %v242 = vpop.permute.xlu0 %241
  %245 = vset.pattern.permute.xlu0 0
  %246 = vperm.xlu0 %245, %v172
  %v247 = vpop.permute.xlu0 %246
  %250 = vset.pattern.permute.xlu0 0
  %251 = vperm.xlu0 %250, %v173
  %v252 = vpop.permute.xlu0 %251
  %v254 = vadd.f32 %v142, %v177
  %v255 = vadd.f32 %v143, %v182
  %v256 = vadd.f32 %v144, %v187
  %v257 = vadd.f32 %v145, %v192
  %v258 = vadd.f32 %v146, %v197
  %v259 = vadd.f32 %v147, %v202
  %v260 = vadd.f32 %v148, %v207
  %v261 = vadd.f32 %v149, %v212
  %v262 = vadd.f32 %v150, %v217
  %v263 = vadd.f32 %v151, %v222
  %v264 = vadd.f32 %v152, %v227
  %v265 = vadd.f32 %v153, %v232
  %v266 = vadd.f32 %v154, %v237
  %v267 = vadd.f32 %v155, %v242
  %v268 = vadd.f32 %v156, %v247
  %v269 = vadd.f32 %v157, %v252
  %v270 = vmax.f32 %v254, 0.0
  %v271 = vmax.f32 %v255, 0.0
  %v272 = vmax.f32 %v256, 0.0
  %v273 = vmax.f32 %v257, 0.0
  %v274 = vmax.f32 %v258, 0.0
  %v275 = vmax.f32 %v259, 0.0
  %v276 = vmax.f32 %v260, 0.0
  %v277 = vmax.f32 %v261, 0.0
  %v278 = vmax.f32 %v262, 0.0
  %v279 = vmax.f32 %v263, 0.0
  %v280 = vmax.f32 %v264, 0.0
  %v281 = vmax.f32 %v265, 0.0
  %v282 = vmax.f32 %v266, 0.0
  %v283 = vmax.f32 %v267, 0.0
  %v284 = vmax.f32 %v268, 0.0
  %v285 = vmax.f32 %v269, 0.0
  %v286 = vpack.c.bf16 %v271, %v270
  %v287 = vpack.c.bf16 %v273, %v272
  %v288 = vpack.c.bf16 %v275, %v274
  %v289 = vpack.c.bf16 %v277, %v276
  %v290 = vpack.c.bf16 %v279, %v278
  %v291 = vpack.c.bf16 %v281, %v280
  %v292 = vpack.c.bf16 %v283, %v282
  %v293 = vpack.c.bf16 %v285, %v284
  %v302 = vunpack.c.l.b16 %v286
  %v303 = vunpack.c.h.b16 %v286
  %v304 = vunpack.c.l.b16 %v287
  %v305 = vunpack.c.h.b16 %v287
  %v306 = vunpack.c.l.b16 %v288
  %v307 = vunpack.c.h.b16 %v288
  %v308 = vunpack.c.l.b16 %v289
  %v309 = vunpack.c.h.b16 %v289
  %v310 = vunpack.c.l.b16 %v290
  %v311 = vunpack.c.h.b16 %v290
  %v312 = vunpack.c.l.b16 %v291
  %v313 = vunpack.c.h.b16 %v291
  %v314 = vunpack.c.l.b16 %v292
  %v315 = vunpack.c.h.b16 %v292
  %v316 = vunpack.c.l.b16 %v293
  %v317 = vunpack.c.h.b16 %v293
  %v318 = vpack.c.b16 %v302, %v302
  %v319 = vpack.c.b16 %v303, %v303
  %v320 = vpack.c.b16 %v304, %v304
  %v321 = vpack.c.b16 %v305, %v305
  %v322 = vpack.c.b16 %v306, %v306
  %v323 = vpack.c.b16 %v307, %v307
  %v324 = vpack.c.b16 %v308, %v308
  %v325 = vpack.c.b16 %v309, %v309
  %v326 = vpack.c.b16 %v310, %v310
  %v327 = vpack.c.b16 %v311, %v311
  %v328 = vpack.c.b16 %v312, %v312
  %v329 = vpack.c.b16 %v313, %v313
  %v330 = vpack.c.b16 %v314, %v314
  %v331 = vpack.c.b16 %v315, %v315
  %v332 = vpack.c.b16 %v316, %v316
  %v333 = vpack.c.b16 %v317, %v317
  %350 = vst [vmem:[%s3] sm:$0xf] %v318
  %351 = vst [vmem:[%s3 + $0x4] sm:$0xf] %v319
  %352 = vst [vmem:[%s3 + $0x8] sm:$0xf] %v320
  %353 = vst [vmem:[%s3 + $0xc] sm:$0xf] %v321
  %354 = vst [vmem:[%s3 + $0x10] sm:$0xf] %v322
  %355 = vst [vmem:[%s3 + $0x14] sm:$0xf] %v323
  %356 = vst [vmem:[%s3 + $0x18] sm:$0xf] %v324
  %357 = vst [vmem:[%s3 + $0x1c] sm:$0xf] %v325
  %358 = vst [vmem:[%s3 + $0x20] sm:$0xf] %v326
  %359 = vst [vmem:[%s3 + $0x24] sm:$0xf] %v327
  %360 = vst [vmem:[%s3 + $0x28] sm:$0xf] %v328
  %361 = vst [vmem:[%s3 + $0x2c] sm:$0xf] %v329
  %362 = vst [vmem:[%s3 + $0x30] sm:$0xf] %v330
  %363 = vst [vmem:[%s3 + $0x34] sm:$0xf] %v331
  %364 = vst [vmem:[%s3 + $0x38] sm:$0xf] %v332
  %365 = vst [vmem:[%s3 + $0x3c] sm:$0xf] %v333
  // Predicated region
  $region14: #{generator_forward.12} parent=0 // pred_check
    _
  $region15: #{generator_forward.12} parent=0 // pred_check_branch
    %367 = sbr.rel (0) target = $region17
  $region16: #{generator_forward.12} parent=0 // pred_region
    _
  $region17: #{generator_forward.12} parent=0 // pred_fallthru
    _
  // Predicated region
  $region18: #{generator_forward.12} parent=0 // pred_check
    _
  $region19: #{generator_forward.12} parent=0 // pred_check_branch
    %369 = sbr.rel (0) target = $region21
  $region20: #{generator_forward.12} parent=0 // pred_region
    _
  $region21: #{generator_forward.12} parent=0 // pred_fallthru
    _

// kernel: tile.48
$region0: #{tile.48}
  #allocation0 [shape = 's32[1]{0}', space=sflag, size = 0x4, scoped, tag = 'scoped memory for tile.48']
  %s0 = inlined_call_operand.vmem [shape: f32[16], index: 0, kind: input, shape index: {}]
  %s1 = inlined_call_operand.vmem [shape: f32[4,16], index: 1, kind: output, shape index: {}]
  // Predicated region
  $region2: #{tile.48} parent=0 // pred_check
    _
  $region3: #{tile.48} parent=0 // pred_check_branch
    %3 = sbr.rel (0) target = $region5
  $region4: #{tile.48} parent=0 // pred_region
    _
  $region5: #{tile.48} parent=0 // pred_fallthru
    _
  %v4 = vld [vmem:[%s0] ss:$0 sm:$0xff]
  %5 = vst [vmem:[%s1] sm:$0xf] %v4

// kernel: tile.2
$region0: #{tile.2}
  %s0 = inlined_call_operand.vmem [shape: f32[4,16], index: 0, kind: input, shape index: {}]
  %s1 = inlined_call_operand.vmem [shape: f32[64,1], index: 1, kind: output, shape index: {}]
  $region1: #{tile.2} parent=0
    #allocation0 [shape = 'u8[4096]{0}', space=vmem, size = 0x1000, scoped, tag = 'scoped mem for input reshape']
    %s3 = sshllo.u32 0, 4
    %v4 = vld [vmem:[%s0] sm:%s3]
    %5 = vst [vmem:[#allocation0] sm:%s3] %v4
    %v6 = vld [vmem:[#allocation0] sm:$0xf]
    %vm7 = vcmask 7168
    %8 = vst.msk [vmem:[%s1] ss:$16 sm:$0x3] %vm7, %v6
    %9 = vst.msk [vmem:[%s1] ss:$16 sm:$0xc] %vm7, %v6
    %v10 = vld [vmem:[#allocation0] sm:$0xf]
    %11 = vrot.lane.b32.xlu0 %v10, 127
    %v12 = vpop.permute.xlu0 %11
    %vm13 = vcmask 7168
    %s14 = scalar_lea.vmem %s1, 1
    %15 = vst.msk [vmem:[%s14] ss:$16 sm:$0x3] %vm13, %v12
    %s16 = scalar_lea.vmem %s1, 1
    %17 = vst.msk [vmem:[%s16] ss:$16 sm:$0xc] %vm13, %v12
    %v18 = vld [vmem:[#allocation0] sm:$0xf]
    %19 = vrot.lane.b32.xlu0 %v18, 126
    %v20 = vpop.permute.xlu0 %19
    %vm21 = vcmask 7168
    %s22 = scalar_lea.vmem %s1, 2
    %23 = vst.msk [vmem:[%s22] ss:$16 sm:$0x3] %vm21, %v20
    %s24 = scalar_lea.vmem %s1, 2
    %25 = vst.msk [vmem:[%s24] ss:$16 sm:$0xc] %vm21, %v20
    %v26 = vld [vmem:[#allocation0] sm:$0xf]
    %27 = vrot.lane.b32.xlu0 %v26, 125
    %v28 = vpop.permute.xlu0 %27
    %vm29 = vcmask 7168
    %s30 = scalar_lea.vmem %s1, 3
    %31 = vst.msk [vmem:[%s30] ss:$16 sm:$0x3] %vm29, %v28
    %s32 = scalar_lea.vmem %s1, 3
    %33 = vst.msk [vmem:[%s32] ss:$16 sm:$0xc] %vm29, %v28
    %v34 = vld [vmem:[#allocation0] sm:$0xf]
    %35 = vrot.lane.b32.xlu0 %v34, 124
    %v36 = vpop.permute.xlu0 %35
    %vm37 = vcmask 7168
    %s38 = scalar_lea.vmem %s1, 4
    %39 = vst.msk [vmem:[%s38] ss:$16 sm:$0x3] %vm37, %v36
    %s40 = scalar_lea.vmem %s1, 4
    %41 = vst.msk [vmem:[%s40] ss:$16 sm:$0xc] %vm37, %v36
    %v42 = vld [vmem:[#allocation0] sm:$0xf]
    %43 = vrot.lane.b32.xlu0 %v42, 123
    %v44 = vpop.permute.xlu0 %43
    %vm45 = vcmask 7168
    %s46 = scalar_lea.vmem %s1, 5
    %47 = vst.msk [vmem:[%s46] ss:$16 sm:$0x3] %vm45, %v44
    %s48 = scalar_lea.vmem %s1, 5
    %49 = vst.msk [vmem:[%s48] ss:$16 sm:$0xc] %vm45, %v44
    %v50 = vld [vmem:[#allocation0] sm:$0xf]
    %51 = vrot.lane.b32.xlu0 %v50, 122
    %v52 = vpop.permute.xlu0 %51
    %vm53 = vcmask 7168
    %s54 = scalar_lea.vmem %s1, 6
    %55 = vst.msk [vmem:[%s54] ss:$16 sm:$0x3] %vm53, %v52
    %s56 = scalar_lea.vmem %s1, 6
    %57 = vst.msk [vmem:[%s56] ss:$16 sm:$0xc] %vm53, %v52
    %v58 = vld [vmem:[#allocation0] sm:$0xf]
    %59 = vrot.lane.b32.xlu0 %v58, 121
    %v60 = vpop.permute.xlu0 %59
    %vm61 = vcmask 7168
    %s62 = scalar_lea.vmem %s1, 7
    %63 = vst.msk [vmem:[%s62] ss:$16 sm:$0x3] %vm61, %v60
    %s64 = scalar_lea.vmem %s1, 7
    %65 = vst.msk [vmem:[%s64] ss:$16 sm:$0xc] %vm61, %v60
    %v66 = vld [vmem:[#allocation0] sm:$0xf]
    %67 = vrot.lane.b32.xlu0 %v66, 120
    %v68 = vpop.permute.xlu0 %67
    %vm69 = vcmask 7168
    %s70 = scalar_lea.vmem %s1, 8
    %71 = vst.msk [vmem:[%s70] ss:$16 sm:$0x3] %vm69, %v68
    %s72 = scalar_lea.vmem %s1, 8
    %73 = vst.msk [vmem:[%s72] ss:$16 sm:$0xc] %vm69, %v68
    %v74 = vld [vmem:[#allocation0] sm:$0xf]
    %75 = vrot.lane.b32.xlu0 %v74, 119
    %v76 = vpop.permute.xlu0 %75
    %vm77 = vcmask 7168
    %s78 = scalar_lea.vmem %s1, 9
    %79 = vst.msk [vmem:[%s78] ss:$16 sm:$0x3] %vm77, %v76
    %s80 = scalar_lea.vmem %s1, 9
    %81 = vst.msk [vmem:[%s80] ss:$16 sm:$0xc] %vm77, %v76
    %v82 = vld [vmem:[#allocation0] sm:$0xf]
    %83 = vrot.lane.b32.xlu0 %v82, 118
    %v84 = vpop.permute.xlu0 %83
    %vm85 = vcmask 7168
    %s86 = scalar_lea.vmem %s1, 10
    %87 = vst.msk [vmem:[%s86] ss:$16 sm:$0x3] %vm85, %v84
    %s88 = scalar_lea.vmem %s1, 10
    %89 = vst.msk [vmem:[%s88] ss:$16 sm:$0xc] %vm85, %v84
    %v90 = vld [vmem:[#allocation0] sm:$0xf]
    %91 = vrot.lane.b32.xlu0 %v90, 117
    %v92 = vpop.permute.xlu0 %91
    %vm93 = vcmask 7168
    %s94 = scalar_lea.vmem %s1, 11
    %95 = vst.msk [vmem:[%s94] ss:$16 sm:$0x3] %vm93, %v92
    %s96 = scalar_lea.vmem %s1, 11
    %97 = vst.msk [vmem:[%s96] ss:$16 sm:$0xc] %vm93, %v92
    %v98 = vld [vmem:[#allocation0] sm:$0xf]
    %99 = vrot.lane.b32.xlu0 %v98, 116
    %v100 = vpop.permute.xlu0 %99
    %vm101 = vcmask 7168
    %s102 = scalar_lea.vmem %s1, 12
    %103 = vst.msk [vmem:[%s102] ss:$16 sm:$0x3] %vm101, %v100
    %s104 = scalar_lea.vmem %s1, 12
    %105 = vst.msk [vmem:[%s104] ss:$16 sm:$0xc] %vm101, %v100
    %v106 = vld [vmem:[#allocation0] sm:$0xf]
    %107 = vrot.lane.b32.xlu0 %v106, 115
    %v108 = vpop.permute.xlu0 %107
    %vm109 = vcmask 7168
    %s110 = scalar_lea.vmem %s1, 13
    %111 = vst.msk [vmem:[%s110] ss:$16 sm:$0x3] %vm109, %v108
    %s112 = scalar_lea.vmem %s1, 13
    %113 = vst.msk [vmem:[%s112] ss:$16 sm:$0xc] %vm109, %v108
    %v114 = vld [vmem:[#allocation0] sm:$0xf]
    %115 = vrot.lane.b32.xlu0 %v114, 114
    %v116 = vpop.permute.xlu0 %115
    %vm117 = vcmask 7168
    %s118 = scalar_lea.vmem %s1, 14
    %119 = vst.msk [vmem:[%s118] ss:$16 sm:$0x3] %vm117, %v116
    %s120 = scalar_lea.vmem %s1, 14
    %121 = vst.msk [vmem:[%s120] ss:$16 sm:$0xc] %vm117, %v116
    %v122 = vld [vmem:[#allocation0] sm:$0xf]
    %123 = vrot.lane.b32.xlu0 %v122, 113
    %v124 = vpop.permute.xlu0 %123
    %vm125 = vcmask 7168
    %s126 = scalar_lea.vmem %s1, 15
    %127 = vst.msk [vmem:[%s126] ss:$16 sm:$0x3] %vm125, %v124
    %s128 = scalar_lea.vmem %s1, 15
    %129 = vst.msk [vmem:[%s128] ss:$16 sm:$0xc] %vm125, %v124

// kernel: generator_forward.13
$region0: #{generator_forward.13}
  #allocation0 [shape = 'u32[]', space=smem, size = 0x4, offset = 0x4, fixed_abs, tag = 'smem constant byte address 0x4 - core index']
  #allocation1 [shape = 'u32[144,128]{1,0:T(1,128)}', space=vmem, size = 0x12000, scoped, tag = 'internal scratch']
  #allocation2 [shape = 'f32[64,128]{1,0:T(8,128)}', space=vmem, size = 0x8000, scoped, tag = 'scratch operand']
  %s0 = inlined_call_operand.vmem [shape: bf16[9,64,32], index: 0, kind: input, shape index: {}]
  %s1 = inlined_call_operand.vmem [shape: bf16[9,32,128], index: 1, kind: input, shape index: {}]
  %s2 = inlined_call_operand.vmem [shape: bf16[64,128], index: 2, kind: output, shape index: {0}]
  %s3 = inlined_call_operand.vmem [shape: f32[1,64,2], index: 3, kind: output, shape index: {1}]
  %4 = xla_tuple %s2, %s3
  %s5 = sld [smem:[#allocation0]]
  $region57: #{generator_forward.13} parent=0
    _
  %s7 = ssub.s32 1, %s5
  %s8 = scalar_select 0, %s7, %s5
  loop: start=0, step=1, limit=11
  $region2: #{generator_forward.13} parent=0 // loop_pre_header
    _
  $region3: #{generator_forward.13} parent=0 // loop_header
    %s10 = sphi 0, %s14
    %p11 = scmp.ge.s32.totalorder %s10, 11
    %s17 = sphi 0, %s29
    %s18 = sphi 0, %s25
    %s19 = sphi 0, %s17
    %s20 = sphi 0, %s18
    %s21 = sphi 0, %s19
    %s22 = sphi 0, %s20
    %s32 = sphi 0, %s34
    %s35 = sphi 0, %s32
    %s36 = sphi 0, %s35
    %s52 = sphi 0, %s36
    %s60 = sphi 0, %s62
    %s63 = sphi 0, %s60
    %s64 = sphi 0, %s63
    %s80 = sphi 0, %s64
    %s86 = sphi 0, %s88
    %s89 = sphi 0, %s86
    %s90 = sphi 0, %s89
    %s106 = sphi 0, %s90
    %s112 = sphi 0, %s114
    %s115 = sphi 0, %s112
    %s116 = sphi 0, %s115
    %s132 = sphi 0, %s116
  $region4: #{generator_forward.13} parent=0 // loop_header_branch
    %13 = sbr.rel (%p11) target = $region8
  $region5: #{generator_forward.13} parent=0 // loop_body
    %s15 = ssub.s32 %s10, 1
    %s16 = ssub.s32 %s10, 2
    %s23 = sadd.s32 1, %s18
    %p24 = scmp.ge.s32.totalorder %s23, 9
    %s25 = scalar_select %p24, 0, %s23
    %s26 = sadd.s32 1, %s17
    %s27 = scalar_select %p24, %s26, %s17
    %p28 = scmp.ge.s32.totalorder %s27, 1
    %s29 = scalar_select %p28, 0, %s27
    %s30 = ssub.s32 %s18, %s25
    %p31 = scmp.eq.s32.totalorder %s30, 0
    %s33 = sadd.s32 %s32, 1
    %s34 = scalar_select %p31, %s32, %s33
    %p37 = pneg %p31
    %p38 = scmp.eq.s32.totalorder %s10, 8
    %p39 = por %p37, %p38
    %p40 = scmp.ne.s32.totalorder %s32, %s35
    %p41 = scmp.eq.s32.totalorder %s10, 0
    %p42 = por %p40, %p41
    %p43 = scmp.ne.s32.totalorder %s32, %s35
    %p44 = scmp.eq.s32.totalorder %s15, 8
    %p45 = por %p43, %p44
    %p46 = scmp.ne.s32.totalorder %s35, %s36
    %p47 = scmp.eq.s32.totalorder %s15, 0
    %p48 = por %p46, %p47
    %p49 = scmp.ne.s32.totalorder %s35, %s36
    %p50 = scmp.eq.s32.totalorder %s16, 8
    %p51 = por %p49, %p50
    %p53 = scmp.ne.s32.totalorder %s36, %s52
    %p54 = scmp.eq.s32.totalorder %s16, 0
    %p55 = por %p53, %p54
    %s56 = ssub.s32 %s18, %s25
    %s57 = ssub.s32 %s17, %s29
    %s58 = sor.u32 %s56, %s57
    %p59 = scmp.eq.s32.totalorder %s58, 0
    %s61 = sadd.s32 %s60, 1
    %s62 = scalar_select %p59, %s60, %s61
    %p65 = pneg %p59
    %p66 = scmp.eq.s32.totalorder %s10, 8
    %p67 = por %p65, %p66
    %p68 = scmp.ne.s32.totalorder %s60, %s63
    %p69 = scmp.eq.s32.totalorder %s10, 0
    %p70 = por %p68, %p69
    %p71 = scmp.ne.s32.totalorder %s60, %s63
    %p72 = scmp.eq.s32.totalorder %s15, 8
    %p73 = por %p71, %p72
    %p74 = scmp.ne.s32.totalorder %s63, %s64
    %p75 = scmp.eq.s32.totalorder %s15, 0
    %p76 = por %p74, %p75
    %p77 = scmp.ne.s32.totalorder %s63, %s64
    %p78 = scmp.eq.s32.totalorder %s16, 8
    %p79 = por %p77, %p78
    %p81 = scmp.ne.s32.totalorder %s64, %s80
    %p82 = scmp.eq.s32.totalorder %s16, 0
    %p83 = por %p81, %p82
    %s84 = ssub.s32 %s17, %s29
    %p85 = scmp.eq.s32.totalorder %s84, 0
    %s87 = sadd.s32 %s86, 1
    %s88 = scalar_select %p85, %s86, %s87
    %p91 = pneg %p85
    %p92 = scmp.eq.s32.totalorder %s10, 8
    %p93 = por %p91, %p92
    %p94 = scmp.ne.s32.totalorder %s86, %s89
    %p95 = scmp.eq.s32.totalorder %s10, 0
    %p96 = por %p94, %p95
    %p97 = scmp.ne.s32.totalorder %s86, %s89
    %p98 = scmp.eq.s32.totalorder %s15, 8
    %p99 = por %p97, %p98
    %p100 = scmp.ne.s32.totalorder %s89, %s90
    %p101 = scmp.eq.s32.totalorder %s15, 0
    %p102 = por %p100, %p101
    %p103 = scmp.ne.s32.totalorder %s89, %s90
    %p104 = scmp.eq.s32.totalorder %s16, 8
    %p105 = por %p103, %p104
    %p107 = scmp.ne.s32.totalorder %s90, %s106
    %p108 = scmp.eq.s32.totalorder %s16, 0
    %p109 = por %p107, %p108
    %s110 = ssub.s32 %s17, %s29
    %p111 = scmp.eq.s32.totalorder %s110, 0
    %s113 = sadd.s32 %s112, 1
    %s114 = scalar_select %p111, %s112, %s113
    %p117 = pneg %p111
    %p118 = scmp.eq.s32.totalorder %s10, 8
    %p119 = por %p117, %p118
    %p120 = scmp.ne.s32.totalorder %s112, %s115
    %p121 = scmp.eq.s32.totalorder %s10, 0
    %p122 = por %p120, %p121
    %p123 = scmp.ne.s32.totalorder %s112, %s115
    %p124 = scmp.eq.s32.totalorder %s15, 8
    %p125 = por %p123, %p124
    %p126 = scmp.ne.s32.totalorder %s115, %s116
    %p127 = scmp.eq.s32.totalorder %s15, 0
    %p128 = por %p126, %p127
    %p129 = scmp.ne.s32.totalorder %s115, %s116
    %p130 = scmp.eq.s32.totalorder %s16, 8
    %p131 = por %p129, %p130
    %p133 = scmp.ne.s32.totalorder %s116, %s132
    %p134 = scmp.eq.s32.totalorder %s16, 0
    %p135 = por %p133, %p134
    %p136 = scmp.le.s32.totalorder 1, %s10
    %p137 = scmp.lt.s32.totalorder %s10, 10
    %p138 = pnand %p136, %p137
    %p139 = pneg %p138
    // Predicated region
    $region9: #{generator_forward.13} parent=5 // pred_check
      _
    $region10: #{generator_forward.13} parent=5 // pred_check_branch
      %141 = sbr.rel (%p138) target = $region12
    $region11: #{generator_forward.13} parent=5 // pred_region
      %s142 = ssub.s32 %s10, 1
    $region12: #{generator_forward.13} parent=5 // pred_fallthru
      _
    %p143 = scmp.lt.s32.totalorder %s10, 9
    // Predicated region
    $region13: #{generator_forward.13} parent=5 // pred_check
      %p144 = pneg %p143
    $region14: #{generator_forward.13} parent=5 // pred_check_branch
      %146 = sbr.rel (%p144) target = $region16
    $region15: #{generator_forward.13} parent=5 // pred_region
      // Predicated region
      $region17: #{generator_forward.13} parent=15 // pred_check
        %p147 = pneg %p42
      $region18: #{generator_forward.13} parent=15 // pred_check_branch
        %149 = sbr.rel (%p147) target = $region20
      $region19: #{generator_forward.13} parent=15 // pred_region
        %p150 = scmp.lt.s32.totalorder %s18, 8
        %s151 = scalar_select %p150, %s18, 8
        %s152 = smul.addr %s151, 8
        %s153 = smul.addr %s152, 4
        %s154 = scalar_lea.vmem %s0, %s153
      $region20: #{generator_forward.13} parent=15 // pred_fallthru
        _
      // Predicated region
      $region21: #{generator_forward.13} parent=15 // pred_check
        %p155 = pneg %p70
      $region22: #{generator_forward.13} parent=15 // pred_check_branch
        %157 = sbr.rel (%p155) target = $region24
      $region23: #{generator_forward.13} parent=15 // pred_region
        %p158 = scmp.lt.s32.totalorder %s18, 8
        %s159 = scalar_select %p158, %s18, 8
        %p160 = scmp.lt.s32.totalorder %s17, 0
        %s161 = scalar_select %p160, %s17, 0
        %s162 = smul.addr %s159, 4
        %s163 = sadd.s32 %s161, %s162
        %s164 = smul.addr %s163, 4
        %s165 = scalar_lea.vmem %s1, %s164
      $region24: #{generator_forward.13} parent=15 // pred_fallthru
        _
    $region16: #{generator_forward.13} parent=5 // pred_fallthru
      _
    %p166 = scmp.le.s32.totalorder 1, %s10
    %p167 = scmp.lt.s32.totalorder %s10, 10
    %p168 = pnand %p166, %p167
    %p169 = pneg %p168
    // Predicated region
    $region25: #{generator_forward.13} parent=5 // pred_check
      _
    $region26: #{generator_forward.13} parent=5 // pred_check_branch
      %171 = sbr.rel (%p168) target = $region28
    $region27: #{generator_forward.13} parent=5 // pred_region
      %s172 = ssub.s32 %s10, 1
      %p173 = scmp.lt.s32.totalorder %s20, 8
      %s174 = scalar_select %p173, %s20, 8
      %s175 = smul.addr %s174, 8
      %s176 = smul.addr %s175, 4
      %s177 = scalar_lea.vmem %s0, %s176
      %p178 = pneg %p48
      %p179 = pneg %p45
      %p180 = scmp.lt.s32.totalorder %s20, 8
      %s181 = scalar_select %p180, %s20, 8
      %p182 = scmp.lt.s32.totalorder %s19, 0
      %s183 = scalar_select %p182, %s19, 0
      %s184 = smul.addr %s181, 4
      %s185 = sadd.s32 %s183, %s184
      %s186 = smul.addr %s185, 4
      %s187 = scalar_lea.vmem %s1, %s186
      %p188 = pneg %p76
      %p189 = pneg %p73
      %p190 = pneg %p102
      %p191 = pneg %p99
      %p192 = scmp.lt.s32.totalorder %s19, 0
      %s193 = scalar_select %p192, %s19, 0
      %s194 = smul.addr %s193, 4
      %s195 = scalar_lea.vmem %s2, %s194
      %p196 = pneg %p128
      %p197 = pneg %p125
      %p198 = scmp.lt.s32.totalorder %s19, 0
      %s199 = scalar_select %p198, %s19, 0
      %s200 = smul.addr %s199, 8
      %s201 = smul.addr %s200, 8
      %s202 = scalar_lea.vmem %s3, %s201
      %p203 = scmp.lt.s32.totalorder %s20, 8
      %s204 = scalar_select %p203, %s20, 8
      %s205 = smul.addr %s204, 8
      %s206 = smul.addr %s205, 4
      %s207 = scalar_lea.vmem %s0, %s206
      %p208 = scmp.lt.s32.totalorder %s20, 8
      %s209 = scalar_select %p208, %s20, 8
      %p210 = scmp.lt.s32.totalorder %s19, 0
      %s211 = scalar_select %p210, %s19, 0
      %s212 = smul.addr %s209, 4
      %s213 = sadd.s32 %s211, %s212
      %s214 = smul.addr %s213, 4
      %s215 = scalar_lea.vmem %s1, %s214
      %p216 = scmp.lt.s32.totalorder %s19, 0
      %s217 = scalar_select %p216, %s19, 0
      %s218 = smul.addr %s217, 4
      %s219 = scalar_lea.vmem %s2, %s218
      %p220 = scmp.lt.s32.totalorder %s19, 0
      %s221 = scalar_select %p220, %s19, 0
      %s222 = smul.addr %s221, 8
      %s223 = smul.addr %s222, 8
      %s224 = scalar_lea.vmem %s3, %s223
      %p226 = scmp.eq.s32.totalorder %s20, 0
      // Predicated region
      $region29: #{generator_forward.13} parent=27 // pred_check
        %p227 = pneg %p226
      $region30: #{generator_forward.13} parent=27 // pred_check_branch
        %229 = sbr.rel (%p227) target = $region32
      $region31: #{generator_forward.13} parent=27 // pred_region
        %230 = vst [vmem:[#allocation2] sm:$0xff] 0.0
        %231 = vst [vmem:[#allocation2 + $0x8] sm:$0xff] 0.0
        %232 = vst [vmem:[#allocation2 + $0x10] sm:$0xff] 0.0
        %233 = vst [vmem:[#allocation2 + $0x18] sm:$0xff] 0.0
        %234 = vst [vmem:[#allocation2 + $0x20] sm:$0xff] 0.0
        %235 = vst [vmem:[#allocation2 + $0x28] sm:$0xff] 0.0
        %236 = vst [vmem:[#allocation2 + $0x30] sm:$0xff] 0.0
        %237 = vst [vmem:[#allocation2 + $0x38] sm:$0xff] 0.0
      $region32: #{generator_forward.13} parent=27 // pred_fallthru
        _
      %v238 = vld [vmem:[#allocation2] sm:$0xff]
      %v239 = vld [vmem:[#allocation2 + $0x8] sm:$0xff]
      %v240 = vld [vmem:[#allocation2 + $0x10] sm:$0xff]
      %v241 = vld [vmem:[#allocation2 + $0x18] sm:$0xff]
      %v242 = vld [vmem:[#allocation2 + $0x20] sm:$0xff]
      %v243 = vld [vmem:[#allocation2 + $0x28] sm:$0xff]
      %v244 = vld [vmem:[#allocation2 + $0x30] sm:$0xff]
      %v245 = vld [vmem:[#allocation2 + $0x38] sm:$0xff]
      %v246 = vld [vmem:[%s207] sm:$0xf]
      %v247 = vld [vmem:[%s207 + $0x4] sm:$0xf]
      %v248 = vld [vmem:[%s207 + $0x8] sm:$0xf]
      %v249 = vld [vmem:[%s207 + $0xc] sm:$0xf]
      %v250 = vld [vmem:[%s207 + $0x10] sm:$0xf]
      %v251 = vld [vmem:[%s207 + $0x14] sm:$0xf]
      %v252 = vld [vmem:[%s207 + $0x18] sm:$0xf]
      %v253 = vld [vmem:[%s207 + $0x1c] sm:$0xf]
      %v254 = vld [vmem:[%s215] sm:$0xf]
      %v255 = vld [vmem:[%s215 + $0x4] sm:$0xf]
      %v256 = vld [vmem:[%s215 + $0x8] sm:$0xf]
      %v257 = vld [vmem:[%s215 + $0xc] sm:$0xf]
      %v266 = vunpack.c.l.b16 %v246
      %v267 = vunpack.c.l.b16 %v247
      %v268 = vunpack.c.l.b16 %v248
      %v269 = vunpack.c.l.b16 %v249
      %v270 = vunpack.c.l.b16 %v250
      %v271 = vunpack.c.l.b16 %v251
      %v272 = vunpack.c.l.b16 %v252
      %v273 = vunpack.c.l.b16 %v253
      %v274 = vpack.c.b16 %v267, %v266
      %v275 = vpack.c.b16 %v269, %v268
      %v276 = vpack.c.b16 %v271, %v270
      %v277 = vpack.c.b16 %v273, %v272
      %v282 = vunpack.c.l.b16 %v254
      %v283 = vunpack.c.l.b16 %v255
      %v284 = vunpack.c.l.b16 %v256
      %v285 = vunpack.c.l.b16 %v257
      %v286 = vpack.c.b16 %v283, %v282
      %v287 = vpack.c.b16 %v285, %v284
      %vm290 = vcmask 261120
      %v292 = vsel %vm290, %v274, 0
      %v295 = vsel %vm290, %v275, 0
      %v298 = vsel %vm290, %v276, 0
      %v301 = vsel %vm290, %v277, 0
      %303 = vmatprep.subr.bf16.mxu0 0
      %304 = vmatpush1.bf16.msra.mxu0 %v286
      %305 = vmatprep.subr.bf16.mxu0 0
      %306 = vmatpush1.bf16.msra.mxu0 %v287
      %307 = vmatprep.subr.bf16.mxu0 0
      %308 = vmatpush1.bf16.msra.mxu0 0
      %309 = vmatprep.subr.bf16.mxu0 0
      %310 = vmatpush1.bf16.msra.mxu0 0
      %311 = vmatprep.subr.bf16.mxu0 0
      %312 = vmatpush1.bf16.msra.mxu0 0
      %313 = vmatprep.subr.bf16.mxu0 0
      %314 = vmatpush1.bf16.msra.mxu0 0
      %315 = vmatprep.subr.bf16.mxu0 0
      %316 = vmatpush1.bf16.msra.mxu0 0
      %317 = vmatprep.subr.bf16.mxu0 0
      %318 = vmatpush1.bf16.msra.mxu0 0
      %319 = vmatprep.subr.bf16.mxu0 0
      %320 = vmatpush1.bf16.msra.mxu0 0
      %321 = vmatprep.subr.bf16.mxu0 0
      %322 = vmatpush1.bf16.msra.mxu0 0
      %323 = vmatprep.subr.bf16.mxu0 0
      %324 = vmatpush1.bf16.msra.mxu0 0
      %325 = vmatprep.subr.bf16.mxu0 0
      %326 = vmatpush1.bf16.msra.mxu0 0
      %327 = vmatprep.subr.bf16.mxu0 0
      %328 = vmatpush1.bf16.msra.mxu0 0
      %329 = vmatprep.subr.bf16.mxu0 0
      %330 = vmatpush1.bf16.msra.mxu0 0
      %331 = vmatprep.subr.bf16.mxu0 0
      %332 = vmatpush1.bf16.msra.mxu0 0
      %333 = vmatprep.subr.bf16.mxu0 0
      %334 = vmatpush1.bf16.msra.mxu0 0
      %335 = vmatprep.mubr.bf16.mxu0 0
      %336 = vmatmul.mubr.bf16.gmra.mrb[0].mxu0 %v292
      %v337 = vpop.f32.mrb[0].mxu0
      %v338 = vadd.f32 0.0, %v337
      %v339 = vpop.f32.mrb[0].mxu0
      %v340 = vpop.f32.mrb[0].mxu0
      %v341 = vadd.f32 0.0, %v340
      %v342 = vpop.f32.mrb[0].mxu0
      %343 = vmatprep.mubr.bf16.mxu0 0
      %344 = vmatmul.mubr.bf16.gmra.mrb[0].mxu0 %v295
      %v345 = vpop.f32.mrb[0].mxu0
      %v346 = vadd.f32 0.0, %v345
      %v347 = vpop.f32.mrb[0].mxu0
      %v348 = vpop.f32.mrb[0].mxu0
      %v349 = vadd.f32 0.0, %v348
      %v350 = vpop.f32.mrb[0].mxu0
      %351 = vmatprep.mubr.bf16.mxu0 0
      %352 = vmatmul.mubr.bf16.gmra.mrb[0].mxu0 %v298
      %v353 = vpop.f32.mrb[0].mxu0
      %v354 = vadd.f32 0.0, %v353
      %v355 = vpop.f32.mrb[0].mxu0
      %v356 = vpop.f32.mrb[0].mxu0
      %v357 = vadd.f32 0.0, %v356
      %v358 = vpop.f32.mrb[0].mxu0
      %359 = vmatprep.mubr.bf16.mxu0 0
      %360 = vmatmul.mubr.bf16.gmra.mrb[0].mxu0 %v301
      %v361 = vpop.f32.mrb[0].mxu0
      %v362 = vadd.f32 0.0, %v361
      %v363 = vpop.f32.mrb[0].mxu0
      %v364 = vpop.f32.mrb[0].mxu0
      %v365 = vadd.f32 0.0, %v364
      %v366 = vpop.f32.mrb[0].mxu0
      %367 = vdwg.mxu0
      %v368 = vadd.f32 %v238, %v338
      %v369 = vadd.f32 %v239, %v341
      %v370 = vadd.f32 %v240, %v346
      %v371 = vadd.f32 %v241, %v349
      %v372 = vadd.f32 %v242, %v354
      %v373 = vadd.f32 %v243, %v357
      %v374 = vadd.f32 %v244, %v362
      %v375 = vadd.f32 %v245, %v365
      %376 = vst [vmem:[#allocation2] sm:$0xff] %v368
      %377 = vst [vmem:[#allocation2 + $0x8] sm:$0xff] %v369
      %378 = vst [vmem:[#allocation2 + $0x10] sm:$0xff] %v370
      %379 = vst [vmem:[#allocation2 + $0x18] sm:$0xff] %v371
      %380 = vst [vmem:[#allocation2 + $0x20] sm:$0xff] %v372
      %381 = vst [vmem:[#allocation2 + $0x28] sm:$0xff] %v373
      %382 = vst [vmem:[#allocation2 + $0x30] sm:$0xff] %v374
      %383 = vst [vmem:[#allocation2 + $0x38] sm:$0xff] %v375
      %p384 = scmp.eq.s32.totalorder %s20, 8
      // Predicated region
      $region33: #{generator_forward.13} parent=27 // pred_check
        %p385 = pneg %p384
      $region34: #{generator_forward.13} parent=27 // pred_check_branch
        %387 = sbr.rel (%p385) target = $region36
      $region35: #{generator_forward.13} parent=27 // pred_region
        %v388 = vld [vmem:[#allocation2] sm:$0xff]
        %v389 = vld [vmem:[#allocation2 + $0x8] sm:$0xff]
        %v390 = vld [vmem:[#allocation2 + $0x10] sm:$0xff]
        %v391 = vld [vmem:[#allocation2 + $0x18] sm:$0xff]
        %v392 = vld [vmem:[#allocation2 + $0x20] sm:$0xff]
        %v393 = vld [vmem:[#allocation2 + $0x28] sm:$0xff]
        %v394 = vld [vmem:[#allocation2 + $0x30] sm:$0xff]
        %v395 = vld [vmem:[#allocation2 + $0x38] sm:$0xff]
        %396 = vadd.xlane.f32.xlu0 %v388
        %v397 = vpop.xlane.xlu0 %396
        %398 = vadd.xlane.f32.xlu0 %v389
        %v399 = vpop.xlane.xlu0 %398
        %400 = vadd.xlane.f32.xlu0 %v390
        %v401 = vpop.xlane.xlu0 %400
        %402 = vadd.xlane.f32.xlu0 %v391
        %v403 = vpop.xlane.xlu0 %402
        %404 = vadd.xlane.f32.xlu0 %v392
        %v405 = vpop.xlane.xlu0 %404
        %406 = vadd.xlane.f32.xlu0 %v393
        %v407 = vpop.xlane.xlu0 %406
        %408 = vadd.xlane.f32.xlu0 %v394
        %v409 = vpop.xlane.xlu0 %408
        %410 = vadd.xlane.f32.xlu0 %v395
        %v411 = vpop.xlane.xlu0 %410
        %v412 = vmul.f32 %v388, %v388
        %v413 = vmul.f32 %v389, %v389
        %v414 = vmul.f32 %v390, %v390
        %v415 = vmul.f32 %v391, %v391
        %v416 = vmul.f32 %v392, %v392
        %v417 = vmul.f32 %v393, %v393
        %v418 = vmul.f32 %v394, %v394
        %v419 = vmul.f32 %v395, %v395
        %420 = vadd.xlane.f32.xlu0 %v412
        %v421 = vpop.xlane.xlu0 %420
        %422 = vadd.xlane.f32.xlu0 %v413
        %v423 = vpop.xlane.xlu0 %422
        %424 = vadd.xlane.f32.xlu0 %v414
        %v425 = vpop.xlane.xlu0 %424
        %426 = vadd.xlane.f32.xlu0 %v415
        %v427 = vpop.xlane.xlu0 %426
        %428 = vadd.xlane.f32.xlu0 %v416
        %v429 = vpop.xlane.xlu0 %428
        %430 = vadd.xlane.f32.xlu0 %v417
        %v431 = vpop.xlane.xlu0 %430
        %432 = vadd.xlane.f32.xlu0 %v418
        %v433 = vpop.xlane.xlu0 %432
        %434 = vadd.xlane.f32.xlu0 %v419
        %v435 = vpop.xlane.xlu0 %434
        %vm436 = vcmask 7168
        %v437 = vsel %vm436, %v397, %v421
        %v438 = vsel %vm436, %v399, %v423
        %v439 = vsel %vm436, %v401, %v425
        %v440 = vsel %vm436, %v403, %v427
        %v441 = vsel %vm436, %v405, %v429
        %v442 = vsel %vm436, %v407, %v431
        %v443 = vsel %vm436, %v409, %v433
        %v444 = vsel %vm436, %v411, %v435
        %vm445 = vcmask 15360
        %446 = vst.msk [vmem:[%s224] sm:$0xff] %vm445, %v437
        %447 = vst.msk [vmem:[%s224 + $0x8] sm:$0xff] %vm445, %v438
        %448 = vst.msk [vmem:[%s224 + $0x10] sm:$0xff] %vm445, %v439
        %449 = vst.msk [vmem:[%s224 + $0x18] sm:$0xff] %vm445, %v440
        %450 = vst.msk [vmem:[%s224 + $0x20] sm:$0xff] %vm445, %v441
        %451 = vst.msk [vmem:[%s224 + $0x28] sm:$0xff] %vm445, %v442
        %452 = vst.msk [vmem:[%s224 + $0x30] sm:$0xff] %vm445, %v443
        %453 = vst.msk [vmem:[%s224 + $0x38] sm:$0xff] %vm445, %v444
        %v454 = vpack.c.bf16 %v389, %v388
        %v455 = vpack.c.bf16 %v391, %v390
        %v456 = vpack.c.bf16 %v393, %v392
        %v457 = vpack.c.bf16 %v395, %v394
        %v462 = vunpack.c.l.b16 %v454
        %v463 = vunpack.c.h.b16 %v454
        %v464 = vunpack.c.l.b16 %v455
        %v465 = vunpack.c.h.b16 %v455
        %v466 = vunpack.c.l.b16 %v456
        %v467 = vunpack.c.h.b16 %v456
        %v468 = vunpack.c.l.b16 %v457
        %v469 = vunpack.c.h.b16 %v457
        %v470 = vpack.c.b16 %v462, %v462
        %v471 = vpack.c.b16 %v463, %v463
        %v472 = vpack.c.b16 %v464, %v464
        %v473 = vpack.c.b16 %v465, %v465
        %v474 = vpack.c.b16 %v466, %v466
        %v475 = vpack.c.b16 %v467, %v467
        %v476 = vpack.c.b16 %v468, %v468
        %v477 = vpack.c.b16 %v469, %v469
        %486 = vst [vmem:[%s219] sm:$0xf] %v470
        %487 = vst [vmem:[%s219 + $0x4] sm:$0xf] %v471
        %488 = vst [vmem:[%s219 + $0x8] sm:$0xf] %v472
        %489 = vst [vmem:[%s219 + $0xc] sm:$0xf] %v473
        %490 = vst [vmem:[%s219 + $0x10] sm:$0xf] %v474
        %491 = vst [vmem:[%s219 + $0x14] sm:$0xf] %v475
        %492 = vst [vmem:[%s219 + $0x18] sm:$0xf] %v476
        %493 = vst [vmem:[%s219 + $0x1c] sm:$0xf] %v477
      $region36: #{generator_forward.13} parent=27 // pred_fallthru
        _
      %p494 = scmp.lt.s32.totalorder %s19, 0
      %s495 = scalar_select %p494, %s19, 0
      %s496 = smul.addr %s495, 4
      %s497 = scalar_lea.vmem %s2, %s496
      %p498 = scmp.lt.s32.totalorder %s19, 0
      %s499 = scalar_select %p498, %s19, 0
      %s500 = smul.addr %s499, 8
      %s501 = smul.addr %s500, 8
      %s502 = scalar_lea.vmem %s3, %s501
      // Predicated region
      $region37: #{generator_forward.13} parent=27 // pred_check
        %p503 = pneg %p99
      $region38: #{generator_forward.13} parent=27 // pred_check_branch
        %505 = sbr.rel (%p503) target = $region40
      $region39: #{generator_forward.13} parent=27 // pred_region
        _
      $region40: #{generator_forward.13} parent=27 // pred_fallthru
        _
      // Predicated region
      $region41: #{generator_forward.13} parent=27 // pred_check
        %p506 = pneg %p125
      $region42: #{generator_forward.13} parent=27 // pred_check_branch
        %508 = sbr.rel (%p506) target = $region44
      $region43: #{generator_forward.13} parent=27 // pred_region
        _
      $region44: #{generator_forward.13} parent=27 // pred_fallthru
        _
      // Predicated region
      $region45: #{generator_forward.13} parent=27 // pred_check
        %p509 = pneg %p99
      $region46: #{generator_forward.13} parent=27 // pred_check_branch
        %511 = sbr.rel (%p509) target = $region48
      $region47: #{generator_forward.13} parent=27 // pred_region
        %p512 = scmp.lt.s32.totalorder %s19, 0
        %s513 = scalar_select %p512, %s19, 0
        %s514 = smul.addr %s513, 4
        %s515 = scalar_lea.vmem %s2, %s514
      $region48: #{generator_forward.13} parent=27 // pred_fallthru
        _
      // Predicated region
      $region49: #{generator_forward.13} parent=27 // pred_check
        %p516 = pneg %p125
      $region50: #{generator_forward.13} parent=27 // pred_check_branch
        %518 = sbr.rel (%p516) target = $region52
      $region51: #{generator_forward.13} parent=27 // pred_region
        %p519 = scmp.lt.s32.totalorder %s19, 0
        %s520 = scalar_select %p519, %s19, 0
        %s521 = smul.addr %s520, 8
        %s522 = smul.addr %s521, 8
        %s523 = scalar_lea.vmem %s3, %s522
      $region52: #{generator_forward.13} parent=27 // pred_fallthru
        _
    $region28: #{generator_forward.13} parent=5 // pred_fallthru
      _
    %p524 = scmp.le.s32.totalorder 2, %s10
    // Predicated region
    $region53: #{generator_forward.13} parent=5 // pred_check
      %p525 = pneg %p524
    $region54: #{generator_forward.13} parent=5 // pred_check_branch
      %527 = sbr.rel (%p525) target = $region56
    $region55: #{generator_forward.13} parent=5 // pred_region
      %s528 = ssub.s32 %s10, 2
    $region56: #{generator_forward.13} parent=5 // pred_fallthru
      _
  $region6: #{generator_forward.13} parent=0 // loop_footer
    %s14 = sadd.s32 1, %s10
  $region7: #{generator_forward.13} parent=0 // loop_footer_branch
    %9 = sbr.rel target = $region3
  $region8: #{generator_forward.13} parent=0 // loop_exit
    _

// kernel: generator_forward.14
$region0: #{generator_forward.14}
  #allocation0 [shape = 'u32[]', space=smem, size = 0x4, offset = 0x4, fixed_abs, tag = 'smem constant byte address 0x4 - core index']
  #allocation1 [shape = 'u32[144,128]{1,0:T(1,128)}', space=vmem, size = 0x12000, scoped, tag = 'internal scratch']
  %s0 = inlined_call_operand.vmem [shape: bf16[64,128], index: 0, kind: input, shape index: {}]
  %s1 = inlined_call_operand.vmem [shape: f32[64,1], index: 1, kind: input, shape index: {}]
  %s2 = inlined_call_operand.vmem [shape: f32[64,1], index: 2, kind: input, shape index: {}]
  %s3 = inlined_call_operand.vmem [shape: bf16[64,128], index: 3, kind: output, shape index: {}]
  %s4 = sld [smem:[#allocation0]]
  $region22: #{generator_forward.14} parent=0
    _
  %s6 = ssub.s32 1, %s4
  %s7 = scalar_select 0, %s6, %s4
  // Predicated region
  $region2: #{generator_forward.14} parent=0 // pred_check
    _
  $region3: #{generator_forward.14} parent=0 // pred_check_branch
    %9 = sbr.rel (0) target = $region5
  $region4: #{generator_forward.14} parent=0 // pred_region
    _
  $region5: #{generator_forward.14} parent=0 // pred_fallthru
    _
  // Predicated region
  $region6: #{generator_forward.14} parent=0 // pred_check
    _
  $region7: #{generator_forward.14} parent=0 // pred_check_branch
    %11 = sbr.rel (0) target = $region9
  $region8: #{generator_forward.14} parent=0 // pred_region
    _
  $region9: #{generator_forward.14} parent=0 // pred_fallthru
    _
  // Predicated region
  $region10: #{generator_forward.14} parent=0 // pred_check
    _
  $region11: #{generator_forward.14} parent=0 // pred_check_branch
    %13 = sbr.rel (0) target = $region13
  $region12: #{generator_forward.14} parent=0 // pred_region
    _
  $region13: #{generator_forward.14} parent=0 // pred_fallthru
    _
  %v14 = vld [vmem:[%s0] sm:$0xf]
  %v15 = vld [vmem:[%s0 + $0x4] sm:$0xf]
  %v16 = vld [vmem:[%s0 + $0x8] sm:$0xf]
  %v17 = vld [vmem:[%s0 + $0xc] sm:$0xf]
  %v18 = vld [vmem:[%s0 + $0x10] sm:$0xf]
  %v19 = vld [vmem:[%s0 + $0x14] sm:$0xf]
  %v20 = vld [vmem:[%s0 + $0x18] sm:$0xf]
  %v21 = vld [vmem:[%s0 + $0x1c] sm:$0xf]
  %v22 = vunpack.c.l.bf16 %v14
  %v23 = vunpack.c.l.bf16 %v15
  %v24 = vunpack.c.l.bf16 %v16
  %v25 = vunpack.c.l.bf16 %v17
  %v26 = vunpack.c.l.bf16 %v18
  %v27 = vunpack.c.l.bf16 %v19
  %v28 = vunpack.c.l.bf16 %v20
  %v29 = vunpack.c.l.bf16 %v21
  %v30 = vld [vmem:[%s1] sm:$0xff]
  %v31 = vld [vmem:[%s1 + $0x8] sm:$0xff]
  %v32 = vld [vmem:[%s1 + $0x10] sm:$0xff]
  %v33 = vld [vmem:[%s1 + $0x18] sm:$0xff]
  %v34 = vld [vmem:[%s1 + $0x20] sm:$0xff]
  %v35 = vld [vmem:[%s1 + $0x28] sm:$0xff]
  %v36 = vld [vmem:[%s1 + $0x30] sm:$0xff]
  %v37 = vld [vmem:[%s1 + $0x38] sm:$0xff]
  %39 = vset.pattern.permute.xlu0 0
  %40 = vperm.xlu0 %39, %v30
  %v41 = vpop.permute.xlu0 %40
  %44 = vset.pattern.permute.xlu0 0
  %45 = vperm.xlu0 %44, %v31
  %v46 = vpop.permute.xlu0 %45
  %49 = vset.pattern.permute.xlu0 0
  %50 = vperm.xlu0 %49, %v32
  %v51 = vpop.permute.xlu0 %50
  %54 = vset.pattern.permute.xlu0 0
  %55 = vperm.xlu0 %54, %v33
  %v56 = vpop.permute.xlu0 %55
  %59 = vset.pattern.permute.xlu0 0
  %60 = vperm.xlu0 %59, %v34
  %v61 = vpop.permute.xlu0 %60
  %64 = vset.pattern.permute.xlu0 0
  %65 = vperm.xlu0 %64, %v35
  %v66 = vpop.permute.xlu0 %65
  %69 = vset.pattern.permute.xlu0 0
  %70 = vperm.xlu0 %69, %v36
  %v71 = vpop.permute.xlu0 %70
  %74 = vset.pattern.permute.xlu0 0
  %75 = vperm.xlu0 %74, %v37
  %v76 = vpop.permute.xlu0 %75
  %v78 = vmul.f32 %v22, %v41
  %v79 = vmul.f32 %v23, %v46
  %v80 = vmul.f32 %v24, %v51
  %v81 = vmul.f32 %v25, %v56
  %v82 = vmul.f32 %v26, %v61
  %v83 = vmul.f32 %v27, %v66
  %v84 = vmul.f32 %v28, %v71
  %v85 = vmul.f32 %v29, %v76
  %v86 = vld [vmem:[%s2] sm:$0xff]
  %v87 = vld [vmem:[%s2 + $0x8] sm:$0xff]
  %v88 = vld [vmem:[%s2 + $0x10] sm:$0xff]
  %v89 = vld [vmem:[%s2 + $0x18] sm:$0xff]
  %v90 = vld [vmem:[%s2 + $0x20] sm:$0xff]
  %v91 = vld [vmem:[%s2 + $0x28] sm:$0xff]
  %v92 = vld [vmem:[%s2 + $0x30] sm:$0xff]
  %v93 = vld [vmem:[%s2 + $0x38] sm:$0xff]
  %95 = vset.pattern.permute.xlu0 0
  %96 = vperm.xlu0 %95, %v86
  %v97 = vpop.permute.xlu0 %96
  %100 = vset.pattern.permute.xlu0 0
  %101 = vperm.xlu0 %100, %v87
  %v102 = vpop.permute.xlu0 %101
  %105 = vset.pattern.permute.xlu0 0
  %106 = vperm.xlu0 %105, %v88
  %v107 = vpop.permute.xlu0 %106
  %110 = vset.pattern.permute.xlu0 0
  %111 = vperm.xlu0 %110, %v89
  %v112 = vpop.permute.xlu0 %111
  %115 = vset.pattern.permute.xlu0 0
  %116 = vperm.xlu0 %115, %v90
  %v117 = vpop.permute.xlu0 %116
  %120 = vset.pattern.permute.xlu0 0
  %121 = vperm.xlu0 %120, %v91
  %v122 = vpop.permute.xlu0 %121
  %125 = vset.pattern.permute.xlu0 0
  %126 = vperm.xlu0 %125, %v92
  %v127 = vpop.permute.xlu0 %126
  %130 = vset.pattern.permute.xlu0 0
  %131 = vperm.xlu0 %130, %v93
  %v132 = vpop.permute.xlu0 %131
  %v134 = vadd.f32 %v78, %v97
  %v135 = vadd.f32 %v79, %v102
  %v136 = vadd.f32 %v80, %v107
  %v137 = vadd.f32 %v81, %v112
  %v138 = vadd.f32 %v82, %v117
  %v139 = vadd.f32 %v83, %v122
  %v140 = vadd.f32 %v84, %v127
  %v141 = vadd.f32 %v85, %v132
  %v142 = vmax.f32 %v134, 0.0
  %v143 = vmax.f32 %v135, 0.0
  %v144 = vmax.f32 %v136, 0.0
  %v145 = vmax.f32 %v137, 0.0
  %v146 = vmax.f32 %v138, 0.0
  %v147 = vmax.f32 %v139, 0.0
  %v148 = vmax.f32 %v140, 0.0
  %v149 = vmax.f32 %v141, 0.0
  %v150 = vpack.c.bf16 %v143, %v142
  %v151 = vpack.c.bf16 %v145, %v144
  %v152 = vpack.c.bf16 %v147, %v146
  %v153 = vpack.c.bf16 %v149, %v148
  %v158 = vunpack.c.l.b16 %v150
  %v159 = vunpack.c.h.b16 %v150
  %v160 = vunpack.c.l.b16 %v151
  %v161 = vunpack.c.h.b16 %v151
  %v162 = vunpack.c.l.b16 %v152
  %v163 = vunpack.c.h.b16 %v152
  %v164 = vunpack.c.l.b16 %v153
  %v165 = vunpack.c.h.b16 %v153
  %v166 = vpack.c.b16 %v158, %v158
  %v167 = vpack.c.b16 %v159, %v159
  %v168 = vpack.c.b16 %v160, %v160
  %v169 = vpack.c.b16 %v161, %v161
  %v170 = vpack.c.b16 %v162, %v162
  %v171 = vpack.c.b16 %v163, %v163
  %v172 = vpack.c.b16 %v164, %v164
  %v173 = vpack.c.b16 %v165, %v165
  %182 = vst [vmem:[%s3] sm:$0xf] %v166
  %183 = vst [vmem:[%s3 + $0x4] sm:$0xf] %v167
  %184 = vst [vmem:[%s3 + $0x8] sm:$0xf] %v168
  %185 = vst [vmem:[%s3 + $0xc] sm:$0xf] %v169
  %186 = vst [vmem:[%s3 + $0x10] sm:$0xf] %v170
  %187 = vst [vmem:[%s3 + $0x14] sm:$0xf] %v171
  %188 = vst [vmem:[%s3 + $0x18] sm:$0xf] %v172
  %189 = vst [vmem:[%s3 + $0x1c] sm:$0xf] %v173
  // Predicated region
  $region14: #{generator_forward.14} parent=0 // pred_check
    _
  $region15: #{generator_forward.14} parent=0 // pred_check_branch
    %191 = sbr.rel (0) target = $region17
  $region16: #{generator_forward.14} parent=0 // pred_region
    _
  $region17: #{generator_forward.14} parent=0 // pred_fallthru
    _
  // Predicated region
  $region18: #{generator_forward.14} parent=0 // pred_check
    _
  $region19: #{generator_forward.14} parent=0 // pred_check_branch
    %193 = sbr.rel (0) target = $region21
  $region20: #{generator_forward.14} parent=0 // pred_region
    _
  $region21: #{generator_forward.14} parent=0 // pred_fallthru
    _

// kernel: tile.58
$region0: #{tile.58}
  #allocation0 [shape = 's32[1]{0}', space=sflag, size = 0x4, scoped, tag = 'scoped memory for tile.58']
  %s0 = inlined_call_operand.vmem [shape: f32[8], index: 0, kind: input, shape index: {}]
  %s1 = inlined_call_operand.vmem [shape: f32[4,8], index: 1, kind: output, shape index: {}]
  // Predicated region
  $region2: #{tile.58} parent=0 // pred_check
    _
  $region3: #{tile.58} parent=0 // pred_check_branch
    %3 = sbr.rel (0) target = $region5
  $region4: #{tile.58} parent=0 // pred_region
    _
  $region5: #{tile.58} parent=0 // pred_fallthru
    _
  %v4 = vld [vmem:[%s0] ss:$0 sm:$0xff]
  %5 = vst [vmem:[%s1] sm:$0xf] %v4

// kernel: tile.4
$region0: #{tile.4}
  %s0 = inlined_call_operand.vmem [shape: f32[4,8], index: 0, kind: input, shape index: {}]
  %s1 = inlined_call_operand.vmem [shape: f32[32,1], index: 1, kind: output, shape index: {}]
  $region1: #{tile.4} parent=0
    #allocation0 [shape = 'u8[4096]{0}', space=vmem, size = 0x1000, scoped, tag = 'scoped mem for input reshape']
    %s3 = sshllo.u32 0, 4
    %v4 = vld [vmem:[%s0] sm:%s3]
    %5 = vst [vmem:[#allocation0] sm:%s3] %v4
    %v6 = vld [vmem:[#allocation0] sm:$0xf]
    %vm7 = vcmask 7168
    %8 = vst.msk [vmem:[%s1] ss:$8 sm:$0xf] %vm7, %v6
    %v9 = vld [vmem:[#allocation0] sm:$0xf]
    %10 = vrot.lane.b32.xlu0 %v9, 127
    %v11 = vpop.permute.xlu0 %10
    %vm12 = vcmask 7168
    %s13 = scalar_lea.vmem %s1, 1
    %14 = vst.msk [vmem:[%s13] ss:$8 sm:$0xf] %vm12, %v11
    %v15 = vld [vmem:[#allocation0] sm:$0xf]
    %16 = vrot.lane.b32.xlu0 %v15, 126
    %v17 = vpop.permute.xlu0 %16
    %vm18 = vcmask 7168
    %s19 = scalar_lea.vmem %s1, 2
    %20 = vst.msk [vmem:[%s19] ss:$8 sm:$0xf] %vm18, %v17
    %v21 = vld [vmem:[#allocation0] sm:$0xf]
    %22 = vrot.lane.b32.xlu0 %v21, 125
    %v23 = vpop.permute.xlu0 %22
    %vm24 = vcmask 7168
    %s25 = scalar_lea.vmem %s1, 3
    %26 = vst.msk [vmem:[%s25] ss:$8 sm:$0xf] %vm24, %v23
    %v27 = vld [vmem:[#allocation0] sm:$0xf]
    %28 = vrot.lane.b32.xlu0 %v27, 124
    %v29 = vpop.permute.xlu0 %28
    %vm30 = vcmask 7168
    %s31 = scalar_lea.vmem %s1, 4
    %32 = vst.msk [vmem:[%s31] ss:$8 sm:$0xf] %vm30, %v29
    %v33 = vld [vmem:[#allocation0] sm:$0xf]
    %34 = vrot.lane.b32.xlu0 %v33, 123
    %v35 = vpop.permute.xlu0 %34
    %vm36 = vcmask 7168
    %s37 = scalar_lea.vmem %s1, 5
    %38 = vst.msk [vmem:[%s37] ss:$8 sm:$0xf] %vm36, %v35
    %v39 = vld [vmem:[#allocation0] sm:$0xf]
    %40 = vrot.lane.b32.xlu0 %v39, 122
    %v41 = vpop.permute.xlu0 %40
    %vm42 = vcmask 7168
    %s43 = scalar_lea.vmem %s1, 6
    %44 = vst.msk [vmem:[%s43] ss:$8 sm:$0xf] %vm42, %v41
    %v45 = vld [vmem:[#allocation0] sm:$0xf]
    %46 = vrot.lane.b32.xlu0 %v45, 121
    %v47 = vpop.permute.xlu0 %46
    %vm48 = vcmask 7168
    %s49 = scalar_lea.vmem %s1, 7
    %50 = vst.msk [vmem:[%s49] ss:$8 sm:$0xf] %vm48, %v47

// kernel: generator_forward.15
$region0: #{generator_forward.15}
  #allocation0 [shape = 'u32[]', space=smem, size = 0x4, offset = 0x4, fixed_abs, tag = 'smem constant byte address 0x4 - core index']
  #allocation1 [shape = 'u32[144,128]{1,0:T(1,128)}', space=vmem, size = 0x12000, scoped, tag = 'internal scratch']
  #allocation2 [shape = 'f32[32,512]{1,0:T(8,128)}', space=vmem, size = 0x10000, scoped, tag = 'scratch operand']
  %s0 = inlined_call_operand.vmem [shape: bf16[9,32,16], index: 0, kind: input, shape index: {}]
  %s1 = inlined_call_operand.vmem [shape: bf16[9,16,512], index: 1, kind: input, shape index: {}]
  %s2 = inlined_call_operand.vmem [shape: bf16[32,512], index: 2, kind: output, shape index: {0}]
  %s3 = inlined_call_operand.vmem [shape: f32[1,32,2], index: 3, kind: output, shape index: {1}]
  %4 = xla_tuple %s2, %s3
  %s5 = sld [smem:[#allocation0]]
  $region57: #{generator_forward.15} parent=0
    _
  %s7 = ssub.s32 1, %s5
  %s8 = scalar_select 0, %s7, %s5
  loop: start=0, step=1, limit=11
  $region2: #{generator_forward.15} parent=0 // loop_pre_header
    _
  $region3: #{generator_forward.15} parent=0 // loop_header
    %s10 = sphi 0, %s14
    %p11 = scmp.ge.s32.totalorder %s10, 11
    %s17 = sphi 0, %s29
    %s18 = sphi 0, %s25
    %s19 = sphi 0, %s17
    %s20 = sphi 0, %s18
    %s21 = sphi 0, %s19
    %s22 = sphi 0, %s20
    %s32 = sphi 0, %s34
    %s35 = sphi 0, %s32
    %s36 = sphi 0, %s35
    %s52 = sphi 0, %s36
    %s60 = sphi 0, %s62
    %s63 = sphi 0, %s60
    %s64 = sphi 0, %s63
    %s80 = sphi 0, %s64
    %s86 = sphi 0, %s88
    %s89 = sphi 0, %s86
    %s90 = sphi 0, %s89
    %s106 = sphi 0, %s90
    %s112 = sphi 0, %s114
    %s115 = sphi 0, %s112
    %s116 = sphi 0, %s115
    %s132 = sphi 0, %s116
  $region4: #{generator_forward.15} parent=0 // loop_header_branch
    %13 = sbr.rel (%p11) target = $region8
  $region5: #{generator_forward.15} parent=0 // loop_body
    %s15 = ssub.s32 %s10, 1
    %s16 = ssub.s32 %s10, 2
    %s23 = sadd.s32 1, %s18
    %p24 = scmp.ge.s32.totalorder %s23, 9
    %s25 = scalar_select %p24, 0, %s23
    %s26 = sadd.s32 1, %s17
    %s27 = scalar_select %p24, %s26, %s17
    %p28 = scmp.ge.s32.totalorder %s27, 1
    %s29 = scalar_select %p28, 0, %s27
    %s30 = ssub.s32 %s18, %s25
    %p31 = scmp.eq.s32.totalorder %s30, 0
    %s33 = sadd.s32 %s32, 1
    %s34 = scalar_select %p31, %s32, %s33
    %p37 = pneg %p31
    %p38 = scmp.eq.s32.totalorder %s10, 8
    %p39 = por %p37, %p38
    %p40 = scmp.ne.s32.totalorder %s32, %s35
    %p41 = scmp.eq.s32.totalorder %s10, 0
    %p42 = por %p40, %p41
    %p43 = scmp.ne.s32.totalorder %s32, %s35
    %p44 = scmp.eq.s32.totalorder %s15, 8
    %p45 = por %p43, %p44
    %p46 = scmp.ne.s32.totalorder %s35, %s36
    %p47 = scmp.eq.s32.totalorder %s15, 0
    %p48 = por %p46, %p47
    %p49 = scmp.ne.s32.totalorder %s35, %s36
    %p50 = scmp.eq.s32.totalorder %s16, 8
    %p51 = por %p49, %p50
    %p53 = scmp.ne.s32.totalorder %s36, %s52
    %p54 = scmp.eq.s32.totalorder %s16, 0
    %p55 = por %p53, %p54
    %s56 = ssub.s32 %s18, %s25
    %s57 = ssub.s32 %s17, %s29
    %s58 = sor.u32 %s56, %s57
    %p59 = scmp.eq.s32.totalorder %s58, 0
    %s61 = sadd.s32 %s60, 1
    %s62 = scalar_select %p59, %s60, %s61
    %p65 = pneg %p59
    %p66 = scmp.eq.s32.totalorder %s10, 8
    %p67 = por %p65, %p66
    %p68 = scmp.ne.s32.totalorder %s60, %s63
    %p69 = scmp.eq.s32.totalorder %s10, 0
    %p70 = por %p68, %p69
    %p71 = scmp.ne.s32.totalorder %s60, %s63
    %p72 = scmp.eq.s32.totalorder %s15, 8
    %p73 = por %p71, %p72
    %p74 = scmp.ne.s32.totalorder %s63, %s64
    %p75 = scmp.eq.s32.totalorder %s15, 0
    %p76 = por %p74, %p75
    %p77 = scmp.ne.s32.totalorder %s63, %s64
    %p78 = scmp.eq.s32.totalorder %s16, 8
    %p79 = por %p77, %p78
    %p81 = scmp.ne.s32.totalorder %s64, %s80
    %p82 = scmp.eq.s32.totalorder %s16, 0
    %p83 = por %p81, %p82
    %s84 = ssub.s32 %s17, %s29
    %p85 = scmp.eq.s32.totalorder %s84, 0
    %s87 = sadd.s32 %s86, 1
    %s88 = scalar_select %p85, %s86, %s87
    %p91 = pneg %p85
    %p92 = scmp.eq.s32.totalorder %s10, 8
    %p93 = por %p91, %p92
    %p94 = scmp.ne.s32.totalorder %s86, %s89
    %p95 = scmp.eq.s32.totalorder %s10, 0
    %p96 = por %p94, %p95
    %p97 = scmp.ne.s32.totalorder %s86, %s89
    %p98 = scmp.eq.s32.totalorder %s15, 8
    %p99 = por %p97, %p98
    %p100 = scmp.ne.s32.totalorder %s89, %s90
    %p101 = scmp.eq.s32.totalorder %s15, 0
    %p102 = por %p100, %p101
    %p103 = scmp.ne.s32.totalorder %s89, %s90
    %p104 = scmp.eq.s32.totalorder %s16, 8
    %p105 = por %p103, %p104
    %p107 = scmp.ne.s32.totalorder %s90, %s106
    %p108 = scmp.eq.s32.totalorder %s16, 0
    %p109 = por %p107, %p108
    %s110 = ssub.s32 %s17, %s29
    %p111 = scmp.eq.s32.totalorder %s110, 0
    %s113 = sadd.s32 %s112, 1
    %s114 = scalar_select %p111, %s112, %s113
    %p117 = pneg %p111
    %p118 = scmp.eq.s32.totalorder %s10, 8
    %p119 = por %p117, %p118
    %p120 = scmp.ne.s32.totalorder %s112, %s115
    %p121 = scmp.eq.s32.totalorder %s10, 0
    %p122 = por %p120, %p121
    %p123 = scmp.ne.s32.totalorder %s112, %s115
    %p124 = scmp.eq.s32.totalorder %s15, 8
    %p125 = por %p123, %p124
    %p126 = scmp.ne.s32.totalorder %s115, %s116
    %p127 = scmp.eq.s32.totalorder %s15, 0
    %p128 = por %p126, %p127
    %p129 = scmp.ne.s32.totalorder %s115, %s116
    %p130 = scmp.eq.s32.totalorder %s16, 8
    %p131 = por %p129, %p130
    %p133 = scmp.ne.s32.totalorder %s116, %s132
    %p134 = scmp.eq.s32.totalorder %s16, 0
    %p135 = por %p133, %p134
    %p136 = scmp.le.s32.totalorder 1, %s10
    %p137 = scmp.lt.s32.totalorder %s10, 10
    %p138 = pnand %p136, %p137
    %p139 = pneg %p138
    // Predicated region
    $region9: #{generator_forward.15} parent=5 // pred_check
      _
    $region10: #{generator_forward.15} parent=5 // pred_check_branch
      %141 = sbr.rel (%p138) target = $region12
    $region11: #{generator_forward.15} parent=5 // pred_region
      %s142 = ssub.s32 %s10, 1
    $region12: #{generator_forward.15} parent=5 // pred_fallthru
      _
    %p143 = scmp.lt.s32.totalorder %s10, 9
    // Predicated region
    $region13: #{generator_forward.15} parent=5 // pred_check
      %p144 = pneg %p143
    $region14: #{generator_forward.15} parent=5 // pred_check_branch
      %146 = sbr.rel (%p144) target = $region16
    $region15: #{generator_forward.15} parent=5 // pred_region
      // Predicated region
      $region17: #{generator_forward.15} parent=15 // pred_check
        %p147 = pneg %p42
      $region18: #{generator_forward.15} parent=15 // pred_check_branch
        %149 = sbr.rel (%p147) target = $region20
      $region19: #{generator_forward.15} parent=15 // pred_region
        %p150 = scmp.lt.s32.totalorder %s18, 8
        %s151 = scalar_select %p150, %s18, 8
        %s152 = smul.addr %s151, 4
        %s153 = smul.addr %s152, 4
        %s154 = scalar_lea.vmem %s0, %s153
      $region20: #{generator_forward.15} parent=15 // pred_fallthru
        _
      // Predicated region
      $region21: #{generator_forward.15} parent=15 // pred_check
        %p155 = pneg %p70
      $region22: #{generator_forward.15} parent=15 // pred_check_branch
        %157 = sbr.rel (%p155) target = $region24
      $region23: #{generator_forward.15} parent=15 // pred_region
        %s158 = smul.u32 4, %s17
        %p159 = scmp.lt.s32.totalorder %s18, 8
        %s160 = scalar_select %p159, %s18, 8
        %p161 = scmp.lt.s32.totalorder %s158, 3
        %s162 = scalar_select %p161, %s158, 3
        %s163 = smul.addr %s160, 8
        %s164 = sadd.s32 %s162, %s163
        %s165 = smul.addr %s164, 4
        %s166 = scalar_lea.vmem %s1, %s165
        %s167 = smul.u32 4, %s17
      $region24: #{generator_forward.15} parent=15 // pred_fallthru
        _
    $region16: #{generator_forward.15} parent=5 // pred_fallthru
      _
    %p168 = scmp.le.s32.totalorder 1, %s10
    %p169 = scmp.lt.s32.totalorder %s10, 10
    %p170 = pnand %p168, %p169
    %p171 = pneg %p170
    // Predicated region
    $region25: #{generator_forward.15} parent=5 // pred_check
      _
    $region26: #{generator_forward.15} parent=5 // pred_check_branch
      %173 = sbr.rel (%p170) target = $region28
    $region27: #{generator_forward.15} parent=5 // pred_region
      %s174 = ssub.s32 %s10, 1
      %p175 = scmp.lt.s32.totalorder %s20, 8
      %s176 = scalar_select %p175, %s20, 8
      %s177 = smul.addr %s176, 4
      %s178 = smul.addr %s177, 4
      %s179 = scalar_lea.vmem %s0, %s178
      %p180 = pneg %p48
      %p181 = pneg %p45
      %s182 = smul.u32 4, %s19
      %p183 = scmp.lt.s32.totalorder %s20, 8
      %s184 = scalar_select %p183, %s20, 8
      %p185 = scmp.lt.s32.totalorder %s182, 3
      %s186 = scalar_select %p185, %s182, 3
      %s187 = smul.addr %s184, 8
      %s188 = sadd.s32 %s186, %s187
      %s189 = smul.addr %s188, 4
      %s190 = scalar_lea.vmem %s1, %s189
      %p191 = pneg %p76
      %p192 = pneg %p73
      %p193 = pneg %p102
      %p194 = pneg %p99
      %s195 = smul.u32 4, %s19
      %p196 = scmp.lt.s32.totalorder %s195, 3
      %s197 = scalar_select %p196, %s195, 3
      %s198 = smul.addr %s197, 4
      %s199 = scalar_lea.vmem %s2, %s198
      %p200 = pneg %p128
      %p201 = pneg %p125
      %p202 = scmp.lt.s32.totalorder %s19, 0
      %s203 = scalar_select %p202, %s19, 0
      %s204 = smul.addr %s203, 4
      %s205 = smul.addr %s204, 8
      %s206 = scalar_lea.vmem %s3, %s205
      %p207 = scmp.lt.s32.totalorder %s20, 8
      %s208 = scalar_select %p207, %s20, 8
      %s209 = smul.addr %s208, 4
      %s210 = smul.addr %s209, 4
      %s211 = scalar_lea.vmem %s0, %s210
      %s212 = smul.u32 4, %s19
      %p213 = scmp.lt.s32.totalorder %s20, 8
      %s214 = scalar_select %p213, %s20, 8
      %p215 = scmp.lt.s32.totalorder %s212, 3
      %s216 = scalar_select %p215, %s212, 3
      %s217 = smul.addr %s214, 8
      %s218 = sadd.s32 %s216, %s217
      %s219 = smul.addr %s218, 4
      %s220 = scalar_lea.vmem %s1, %s219
      %s221 = smul.u32 4, %s19
      %s222 = smul.u32 4, %s19
      %p223 = scmp.lt.s32.totalorder %s222, 3
      %s224 = scalar_select %p223, %s222, 3
      %s225 = smul.addr %s224, 4
      %s226 = scalar_lea.vmem %s2, %s225
      %s227 = smul.u32 4, %s19
      %p228 = scmp.lt.s32.totalorder %s19, 0
      %s229 = scalar_select %p228, %s19, 0
      %s230 = smul.addr %s229, 4
      %s231 = smul.addr %s230, 8
      %s232 = scalar_lea.vmem %s3, %s231
      %p234 = scmp.eq.s32.totalorder %s20, 0
      // Predicated region
      $region29: #{generator_forward.15} parent=27 // pred_check
        %p235 = pneg %p234
      $region30: #{generator_forward.15} parent=27 // pred_check_branch
        %237 = sbr.rel (%p235) target = $region32
      $region31: #{generator_forward.15} parent=27 // pred_region
        %238 = vst [vmem:[#allocation2] sm:$0xff] 0.0
        %239 = vst [vmem:[#allocation2 + $0x8] sm:$0xff] 0.0
        %240 = vst [vmem:[#allocation2 + $0x10] sm:$0xff] 0.0
        %241 = vst [vmem:[#allocation2 + $0x18] sm:$0xff] 0.0
        %242 = vst [vmem:[#allocation2 + $0x20] sm:$0xff] 0.0
        %243 = vst [vmem:[#allocation2 + $0x28] sm:$0xff] 0.0
        %244 = vst [vmem:[#allocation2 + $0x30] sm:$0xff] 0.0
        %245 = vst [vmem:[#allocation2 + $0x38] sm:$0xff] 0.0
        %246 = vst [vmem:[#allocation2 + $0x40] sm:$0xff] 0.0
        %247 = vst [vmem:[#allocation2 + $0x48] sm:$0xff] 0.0
        %248 = vst [vmem:[#allocation2 + $0x50] sm:$0xff] 0.0
        %249 = vst [vmem:[#allocation2 + $0x58] sm:$0xff] 0.0
        %250 = vst [vmem:[#allocation2 + $0x60] sm:$0xff] 0.0
        %251 = vst [vmem:[#allocation2 + $0x68] sm:$0xff] 0.0
        %252 = vst [vmem:[#allocation2 + $0x70] sm:$0xff] 0.0
        %253 = vst [vmem:[#allocation2 + $0x78] sm:$0xff] 0.0
      $region32: #{generator_forward.15} parent=27 // pred_fallthru
        _
      %v254 = vld [vmem:[#allocation2] sm:$0xff]
      %v255 = vld [vmem:[#allocation2 + $0x8] sm:$0xff]
      %v256 = vld [vmem:[#allocation2 + $0x10] sm:$0xff]
      %v257 = vld [vmem:[#allocation2 + $0x18] sm:$0xff]
      %v258 = vld [vmem:[#allocation2 + $0x20] sm:$0xff]
      %v259 = vld [vmem:[#allocation2 + $0x28] sm:$0xff]
      %v260 = vld [vmem:[#allocation2 + $0x30] sm:$0xff]
      %v261 = vld [vmem:[#allocation2 + $0x38] sm:$0xff]
      %v262 = vld [vmem:[#allocation2 + $0x40] sm:$0xff]
      %v263 = vld [vmem:[#allocation2 + $0x48] sm:$0xff]
      %v264 = vld [vmem:[#allocation2 + $0x50] sm:$0xff]
      %v265 = vld [vmem:[#allocation2 + $0x58] sm:$0xff]
      %v266 = vld [vmem:[#allocation2 + $0x60] sm:$0xff]
      %v267 = vld [vmem:[#allocation2 + $0x68] sm:$0xff]
      %v268 = vld [vmem:[#allocation2 + $0x70] sm:$0xff]
      %v269 = vld [vmem:[#allocation2 + $0x78] sm:$0xff]
      %v270 = vld [vmem:[%s211] sm:$0xf]
      %v271 = vld [vmem:[%s211 + $0x4] sm:$0xf]
      %v272 = vld [vmem:[%s211 + $0x8] sm:$0xf]
      %v273 = vld [vmem:[%s211 + $0xc] sm:$0xf]
      %v274 = vld [vmem:[%s220] sm:$0xff]
      %v275 = vld [vmem:[%s220 + $0x8] sm:$0xff]
      %v276 = vld [vmem:[%s220 + $0x10] sm:$0xff]
      %v277 = vld [vmem:[%s220 + $0x18] sm:$0xff]
      %v282 = vunpack.c.l.b16 %v270
      %v283 = vunpack.c.l.b16 %v271
      %v284 = vunpack.c.l.b16 %v272
      %v285 = vunpack.c.l.b16 %v273
      %v286 = vpack.c.b16 %v283, %v282
      %v287 = vpack.c.b16 %v285, %v284
      %v292 = vunpack.c.l.b16 %v274
      %v293 = vunpack.c.h.b16 %v274
      %v294 = vunpack.c.l.b16 %v275
      %v295 = vunpack.c.h.b16 %v275
      %v296 = vunpack.c.l.b16 %v276
      %v297 = vunpack.c.h.b16 %v276
      %v298 = vunpack.c.l.b16 %v277
      %v299 = vunpack.c.h.b16 %v277
      %v300 = vpack.c.b16 %v296, %v292
      %v301 = vpack.c.b16 %v297, %v293
      %v302 = vpack.c.b16 %v298, %v294
      %v303 = vpack.c.b16 %v299, %v295
      %vm308 = vcmask 130048
      %v310 = vsel %vm308, %v286, 0
      %v313 = vsel %vm308, %v287, 0
      %315 = vmatprep.subr.bf16.mxu0 %v301
      %316 = vmatpush1.bf16.msra.mxu0 %v300
      %317 = vmatprep.subr.bf16.mxu0 0
      %318 = vmatpush1.bf16.msra.mxu0 0
      %319 = vmatprep.subr.bf16.mxu0 0
      %320 = vmatpush1.bf16.msra.mxu0 0
      %321 = vmatprep.subr.bf16.mxu0 0
      %322 = vmatpush1.bf16.msra.mxu0 0
      %323 = vmatprep.subr.bf16.mxu0 0
      %324 = vmatpush1.bf16.msra.mxu0 0
      %325 = vmatprep.subr.bf16.mxu0 0
      %326 = vmatpush1.bf16.msra.mxu0 0
      %327 = vmatprep.subr.bf16.mxu0 0
      %328 = vmatpush1.bf16.msra.mxu0 0
      %329 = vmatprep.subr.bf16.mxu0 0
      %330 = vmatpush1.bf16.msra.mxu0 0
      %331 = vmatprep.subr.bf16.mxu0 0
      %332 = vmatpush1.bf16.msra.mxu0 0
      %333 = vmatprep.subr.bf16.mxu0 0
      %334 = vmatpush1.bf16.msra.mxu0 0
      %335 = vmatprep.subr.bf16.mxu0 0
      %336 = vmatpush1.bf16.msra.mxu0 0
      %337 = vmatprep.subr.bf16.mxu0 0
      %338 = vmatpush1.bf16.msra.mxu0 0
      %339 = vmatprep.subr.bf16.mxu0 0
      %340 = vmatpush1.bf16.msra.mxu0 0
      %341 = vmatprep.subr.bf16.mxu0 0
      %342 = vmatpush1.bf16.msra.mxu0 0
      %343 = vmatprep.subr.bf16.mxu0 0
      %344 = vmatpush1.bf16.msra.mxu0 0
      %345 = vmatprep.subr.bf16.mxu0 0
      %346 = vmatpush1.bf16.msra.mxu0 0
      %347 = vmatprep.mubr.bf16.mxu0 0
      %348 = vmatmul.mubr.bf16.gmra.mrb[0].mxu0 %v310
      %v349 = vpop.f32.mrb[0].mxu0
      %v350 = vadd.f32 0.0, %v349
      %v351 = vpop.f32.mrb[0].mxu0
      %v352 = vadd.f32 0.0, %v351
      %v353 = vpop.f32.mrb[0].mxu0
      %v354 = vadd.f32 0.0, %v353
      %v355 = vpop.f32.mrb[0].mxu0
      %v356 = vadd.f32 0.0, %v355
      %357 = vmatprep.mubr.bf16.mxu0 0
      %358 = vmatmul.mubr.bf16.gmra.mrb[0].mxu0 %v313
      %v359 = vpop.f32.mrb[0].mxu0
      %v360 = vadd.f32 0.0, %v359
      %v361 = vpop.f32.mrb[0].mxu0
      %v362 = vadd.f32 0.0, %v361
      %v363 = vpop.f32.mrb[0].mxu0
      %v364 = vadd.f32 0.0, %v363
      %v365 = vpop.f32.mrb[0].mxu0
      %v366 = vadd.f32 0.0, %v365
      %367 = vdwg.mxu0
      %368 = vmatprep.subr.bf16.mxu0 %v303
      %369 = vmatpush1.bf16.msra.mxu0 %v302
      %370 = vmatprep.subr.bf16.mxu0 0
      %371 = vmatpush1.bf16.msra.mxu0 0
      %372 = vmatprep.subr.bf16.mxu0 0
      %373 = vmatpush1.bf16.msra.mxu0 0
      %374 = vmatprep.subr.bf16.mxu0 0
      %375 = vmatpush1.bf16.msra.mxu0 0
      %376 = vmatprep.subr.bf16.mxu0 0
      %377 = vmatpush1.bf16.msra.mxu0 0
      %378 = vmatprep.subr.bf16.mxu0 0
      %379 = vmatpush1.bf16.msra.mxu0 0
      %380 = vmatprep.subr.bf16.mxu0 0
      %381 = vmatpush1.bf16.msra.mxu0 0
      %382 = vmatprep.subr.bf16.mxu0 0
      %383 = vmatpush1.bf16.msra.mxu0 0
      %384 = vmatprep.subr.bf16.mxu0 0
      %385 = vmatpush1.bf16.msra.mxu0 0
      %386 = vmatprep.subr.bf16.mxu0 0
      %387 = vmatpush1.bf16.msra.mxu0 0
      %388 = vmatprep.subr.bf16.mxu0 0
      %389 = vmatpush1.bf16.msra.mxu0 0
      %390 = vmatprep.subr.bf16.mxu0 0
      %391 = vmatpush1.bf16.msra.mxu0 0
      %392 = vmatprep.subr.bf16.mxu0 0
      %393 = vmatpush1.bf16.msra.mxu0 0
      %394 = vmatprep.subr.bf16.mxu0 0
      %395 = vmatpush1.bf16.msra.mxu0 0
      %396 = vmatprep.subr.bf16.mxu0 0
      %397 = vmatpush1.bf16.msra.mxu0 0
      %398 = vmatprep.subr.bf16.mxu0 0
      %399 = vmatpush1.bf16.msra.mxu0 0
      %400 = vmatprep.mubr.bf16.mxu0 0
      %401 = vmatmul.mubr.bf16.gmra.mrb[0].mxu0 %v310
      %v402 = vpop.f32.mrb[0].mxu0
      %v403 = vadd.f32 0.0, %v402
      %v404 = vpop.f32.mrb[0].mxu0
      %v405 = vadd.f32 0.0, %v404
      %v406 = vpop.f32.mrb[0].mxu0
      %v407 = vadd.f32 0.0, %v406
      %v408 = vpop.f32.mrb[0].mxu0
      %v409 = vadd.f32 0.0, %v408
      %410 = vmatprep.mubr.bf16.mxu0 0
      %411 = vmatmul.mubr.bf16.gmra.mrb[0].mxu0 %v313
      %v412 = vpop.f32.mrb[0].mxu0
      %v413 = vadd.f32 0.0, %v412
      %v414 = vpop.f32.mrb[0].mxu0
      %v415 = vadd.f32 0.0, %v414
      %v416 = vpop.f32.mrb[0].mxu0
      %v417 = vadd.f32 0.0, %v416
      %v418 = vpop.f32.mrb[0].mxu0
      %v419 = vadd.f32 0.0, %v418
      %420 = vdwg.mxu0
      %v421 = vadd.f32 %v254, %v350
      %v422 = vadd.f32 %v255, %v352
      %v423 = vadd.f32 %v256, %v403
      %v424 = vadd.f32 %v257, %v405
      %v425 = vadd.f32 %v258, %v354
      %v426 = vadd.f32 %v259, %v356
      %v427 = vadd.f32 %v260, %v407
      %v428 = vadd.f32 %v261, %v409
      %v429 = vadd.f32 %v262, %v360
      %v430 = vadd.f32 %v263, %v362
      %v431 = vadd.f32 %v264, %v413
      %v432 = vadd.f32 %v265, %v415
      %v433 = vadd.f32 %v266, %v364
      %v434 = vadd.f32 %v267, %v366
      %v435 = vadd.f32 %v268, %v417
      %v436 = vadd.f32 %v269, %v419
      %437 = vst [vmem:[#allocation2] sm:$0xff] %v421
      %438 = vst [vmem:[#allocation2 + $0x8] sm:$0xff] %v422
      %439 = vst [vmem:[#allocation2 + $0x10] sm:$0xff] %v423
      %440 = vst [vmem:[#allocation2 + $0x18] sm:$0xff] %v424
      %441 = vst [vmem:[#allocation2 + $0x20] sm:$0xff] %v425
      %442 = vst [vmem:[#allocation2 + $0x28] sm:$0xff] %v426
      %443 = vst [vmem:[#allocation2 + $0x30] sm:$0xff] %v427
      %444 = vst [vmem:[#allocation2 + $0x38] sm:$0xff] %v428
      %445 = vst [vmem:[#allocation2 + $0x40] sm:$0xff] %v429
      %446 = vst [vmem:[#allocation2 + $0x48] sm:$0xff] %v430
      %447 = vst [vmem:[#allocation2 + $0x50] sm:$0xff] %v431
      %448 = vst [vmem:[#allocation2 + $0x58] sm:$0xff] %v432
      %449 = vst [vmem:[#allocation2 + $0x60] sm:$0xff] %v433
      %450 = vst [vmem:[#allocation2 + $0x68] sm:$0xff] %v434
      %451 = vst [vmem:[#allocation2 + $0x70] sm:$0xff] %v435
      %452 = vst [vmem:[#allocation2 + $0x78] sm:$0xff] %v436
      %p453 = scmp.eq.s32.totalorder %s20, 8
      // Predicated region
      $region33: #{generator_forward.15} parent=27 // pred_check
        %p454 = pneg %p453
      $region34: #{generator_forward.15} parent=27 // pred_check_branch
        %456 = sbr.rel (%p454) target = $region36
      $region35: #{generator_forward.15} parent=27 // pred_region
        %v457 = vld [vmem:[#allocation2] sm:$0xff]
        %v458 = vld [vmem:[#allocation2 + $0x8] sm:$0xff]
        %v459 = vld [vmem:[#allocation2 + $0x10] sm:$0xff]
        %v460 = vld [vmem:[#allocation2 + $0x18] sm:$0xff]
        %v461 = vld [vmem:[#allocation2 + $0x20] sm:$0xff]
        %v462 = vld [vmem:[#allocation2 + $0x28] sm:$0xff]
        %v463 = vld [vmem:[#allocation2 + $0x30] sm:$0xff]
        %v464 = vld [vmem:[#allocation2 + $0x38] sm:$0xff]
        %v465 = vld [vmem:[#allocation2 + $0x40] sm:$0xff]
        %v466 = vld [vmem:[#allocation2 + $0x48] sm:$0xff]
        %v467 = vld [vmem:[#allocation2 + $0x50] sm:$0xff]
        %v468 = vld [vmem:[#allocation2 + $0x58] sm:$0xff]
        %v469 = vld [vmem:[#allocation2 + $0x60] sm:$0xff]
        %v470 = vld [vmem:[#allocation2 + $0x68] sm:$0xff]
        %v471 = vld [vmem:[#allocation2 + $0x70] sm:$0xff]
        %v472 = vld [vmem:[#allocation2 + $0x78] sm:$0xff]
        %v473 = vadd.f32 %v457, %v458
        %v474 = vadd.f32 %v473, %v459
        %v475 = vadd.f32 %v474, %v460
        %476 = vadd.xlane.f32.xlu0 %v475
        %v477 = vpop.xlane.xlu0 %476
        %v478 = vadd.f32 %v461, %v462
        %v479 = vadd.f32 %v478, %v463
        %v480 = vadd.f32 %v479, %v464
        %481 = vadd.xlane.f32.xlu0 %v480
        %v482 = vpop.xlane.xlu0 %481
        %v483 = vadd.f32 %v465, %v466
        %v484 = vadd.f32 %v483, %v467
        %v485 = vadd.f32 %v484, %v468
        %486 = vadd.xlane.f32.xlu0 %v485
        %v487 = vpop.xlane.xlu0 %486
        %v488 = vadd.f32 %v469, %v470
        %v489 = vadd.f32 %v488, %v471
        %v490 = vadd.f32 %v489, %v472
        %491 = vadd.xlane.f32.xlu0 %v490
        %v492 = vpop.xlane.xlu0 %491
        %v493 = vmul.f32 %v457, %v457
        %v494 = vmul.f32 %v458, %v458
        %v495 = vmul.f32 %v459, %v459
        %v496 = vmul.f32 %v460, %v460
        %v497 = vmul.f32 %v461, %v461
        %v498 = vmul.f32 %v462, %v462
        %v499 = vmul.f32 %v463, %v463
        %v500 = vmul.f32 %v464, %v464
        %v501 = vmul.f32 %v465, %v465
        %v502 = vmul.f32 %v466, %v466
        %v503 = vmul.f32 %v467, %v467
        %v504 = vmul.f32 %v468, %v468
        %v505 = vmul.f32 %v469, %v469
        %v506 = vmul.f32 %v470, %v470
        %v507 = vmul.f32 %v471, %v471
        %v508 = vmul.f32 %v472, %v472
        %v509 = vadd.f32 %v493, %v494
        %v510 = vadd.f32 %v509, %v495
        %v511 = vadd.f32 %v510, %v496
        %512 = vadd.xlane.f32.xlu0 %v511
        %v513 = vpop.xlane.xlu0 %512
        %v514 = vadd.f32 %v497, %v498
        %v515 = vadd.f32 %v514, %v499
        %v516 = vadd.f32 %v515, %v500
        %517 = vadd.xlane.f32.xlu0 %v516
        %v518 = vpop.xlane.xlu0 %517
        %v519 = vadd.f32 %v501, %v502
        %v520 = vadd.f32 %v519, %v503
        %v521 = vadd.f32 %v520, %v504
        %522 = vadd.xlane.f32.xlu0 %v521
        %v523 = vpop.xlane.xlu0 %522
        %v524 = vadd.f32 %v505, %v506
        %v525 = vadd.f32 %v524, %v507
        %v526 = vadd.f32 %v525, %v508
        %527 = vadd.xlane.f32.xlu0 %v526
        %v528 = vpop.xlane.xlu0 %527
        %vm529 = vcmask 7168
        %v530 = vsel %vm529, %v477, %v513
        %v531 = vsel %vm529, %v482, %v518
        %v532 = vsel %vm529, %v487, %v523
        %v533 = vsel %vm529, %v492, %v528
        %vm534 = vcmask 15360
        %535 = vst.msk [vmem:[%s232] sm:$0xff] %vm534, %v530
        %536 = vst.msk [vmem:[%s232 + $0x8] sm:$0xff] %vm534, %v531
        %537 = vst.msk [vmem:[%s232 + $0x10] sm:$0xff] %vm534, %v532
        %538 = vst.msk [vmem:[%s232 + $0x18] sm:$0xff] %vm534, %v533
        %v539 = vpack.c.bf16 %v461, %v457
        %v540 = vpack.c.bf16 %v462, %v458
        %v541 = vpack.c.bf16 %v463, %v459
        %v542 = vpack.c.bf16 %v464, %v460
        %v543 = vpack.c.bf16 %v469, %v465
        %v544 = vpack.c.bf16 %v470, %v466
        %v545 = vpack.c.bf16 %v471, %v467
        %v546 = vpack.c.bf16 %v472, %v468
        %v555 = vunpack.c.l.b16 %v539
        %v556 = vunpack.c.l.b16 %v540
        %v557 = vunpack.c.l.b16 %v541
        %v558 = vunpack.c.l.b16 %v542
        %v559 = vunpack.c.h.b16 %v539
        %v560 = vunpack.c.h.b16 %v540
        %v561 = vunpack.c.h.b16 %v541
        %v562 = vunpack.c.h.b16 %v542
        %v563 = vunpack.c.l.b16 %v543
        %v564 = vunpack.c.l.b16 %v544
        %v565 = vunpack.c.l.b16 %v545
        %v566 = vunpack.c.l.b16 %v546
        %v567 = vunpack.c.h.b16 %v543
        %v568 = vunpack.c.h.b16 %v544
        %v569 = vunpack.c.h.b16 %v545
        %v570 = vunpack.c.h.b16 %v546
        %v571 = vpack.c.b16 %v556, %v555
        %v572 = vpack.c.b16 %v558, %v557
        %v573 = vpack.c.b16 %v560, %v559
        %v574 = vpack.c.b16 %v562, %v561
        %v575 = vpack.c.b16 %v564, %v563
        %v576 = vpack.c.b16 %v566, %v565
        %v577 = vpack.c.b16 %v568, %v567
        %v578 = vpack.c.b16 %v570, %v569
        %587 = vst [vmem:[%s226] sm:$0xff] %v571
        %588 = vst [vmem:[%s226 + $0x8] sm:$0xff] %v572
        %589 = vst [vmem:[%s226 + $0x10] sm:$0xff] %v573
        %590 = vst [vmem:[%s226 + $0x18] sm:$0xff] %v574
        %591 = vst [vmem:[%s226 + $0x20] sm:$0xff] %v575
        %592 = vst [vmem:[%s226 + $0x28] sm:$0xff] %v576
        %593 = vst [vmem:[%s226 + $0x30] sm:$0xff] %v577
        %594 = vst [vmem:[%s226 + $0x38] sm:$0xff] %v578
      $region36: #{generator_forward.15} parent=27 // pred_fallthru
        _
      %s595 = smul.u32 4, %s19
      %p596 = scmp.lt.s32.totalorder %s595, 3
      %s597 = scalar_select %p596, %s595, 3
      %s598 = smul.addr %s597, 4
      %s599 = scalar_lea.vmem %s2, %s598
      %p600 = scmp.lt.s32.totalorder %s19, 0
      %s601 = scalar_select %p600, %s19, 0
      %s602 = smul.addr %s601, 4
      %s603 = smul.addr %s602, 8
      %s604 = scalar_lea.vmem %s3, %s603
      // Predicated region
      $region37: #{generator_forward.15} parent=27 // pred_check
        %p605 = pneg %p99
      $region38: #{generator_forward.15} parent=27 // pred_check_branch
        %607 = sbr.rel (%p605) target = $region40
      $region39: #{generator_forward.15} parent=27 // pred_region
        %s608 = smul.u32 4, %s19
      $region40: #{generator_forward.15} parent=27 // pred_fallthru
        _
      // Predicated region
      $region41: #{generator_forward.15} parent=27 // pred_check
        %p609 = pneg %p125
      $region42: #{generator_forward.15} parent=27 // pred_check_branch
        %611 = sbr.rel (%p609) target = $region44
      $region43: #{generator_forward.15} parent=27 // pred_region
        _
      $region44: #{generator_forward.15} parent=27 // pred_fallthru
        _
      // Predicated region
      $region45: #{generator_forward.15} parent=27 // pred_check
        %p612 = pneg %p99
      $region46: #{generator_forward.15} parent=27 // pred_check_branch
        %614 = sbr.rel (%p612) target = $region48
      $region47: #{generator_forward.15} parent=27 // pred_region
        %s615 = smul.u32 4, %s19
        %p616 = scmp.lt.s32.totalorder %s615, 3
        %s617 = scalar_select %p616, %s615, 3
        %s618 = smul.addr %s617, 4
        %s619 = scalar_lea.vmem %s2, %s618
      $region48: #{generator_forward.15} parent=27 // pred_fallthru
        _
      // Predicated region
      $region49: #{generator_forward.15} parent=27 // pred_check
        %p620 = pneg %p125
      $region50: #{generator_forward.15} parent=27 // pred_check_branch
        %622 = sbr.rel (%p620) target = $region52
      $region51: #{generator_forward.15} parent=27 // pred_region
        %p623 = scmp.lt.s32.totalorder %s19, 0
        %s624 = scalar_select %p623, %s19, 0
        %s625 = smul.addr %s624, 4
        %s626 = smul.addr %s625, 8
        %s627 = scalar_lea.vmem %s3, %s626
      $region52: #{generator_forward.15} parent=27 // pred_fallthru
        _
    $region28: #{generator_forward.15} parent=5 // pred_fallthru
      _
    %p628 = scmp.le.s32.totalorder 2, %s10
    // Predicated region
    $region53: #{generator_forward.15} parent=5 // pred_check
      %p629 = pneg %p628
    $region54: #{generator_forward.15} parent=5 // pred_check_branch
      %631 = sbr.rel (%p629) target = $region56
    $region55: #{generator_forward.15} parent=5 // pred_region
      %s632 = ssub.s32 %s10, 2
    $region56: #{generator_forward.15} parent=5 // pred_fallthru
      _
  $region6: #{generator_forward.15} parent=0 // loop_footer
    %s14 = sadd.s32 1, %s10
  $region7: #{generator_forward.15} parent=0 // loop_footer_branch
    %9 = sbr.rel target = $region3
  $region8: #{generator_forward.15} parent=0 // loop_exit
    _

// kernel: generator_forward.16
$region0: #{generator_forward.16}
  #allocation0 [shape = 'u32[]', space=smem, size = 0x4, offset = 0x4, fixed_abs, tag = 'smem constant byte address 0x4 - core index']
  #allocation1 [shape = 'u32[144,128]{1,0:T(1,128)}', space=vmem, size = 0x12000, scoped, tag = 'internal scratch']
  %s0 = inlined_call_operand.vmem [shape: bf16[32,512], index: 0, kind: input, shape index: {}]
  %s1 = inlined_call_operand.vmem [shape: f32[32,1], index: 1, kind: input, shape index: {}]
  %s2 = inlined_call_operand.vmem [shape: f32[32,1], index: 2, kind: input, shape index: {}]
  %s3 = inlined_call_operand.vmem [shape: bf16[32,512], index: 3, kind: output, shape index: {}]
  %s4 = sld [smem:[#allocation0]]
  $region22: #{generator_forward.16} parent=0
    _
  %s6 = ssub.s32 1, %s4
  %s7 = scalar_select 0, %s6, %s4
  // Predicated region
  $region2: #{generator_forward.16} parent=0 // pred_check
    _
  $region3: #{generator_forward.16} parent=0 // pred_check_branch
    %9 = sbr.rel (0) target = $region5
  $region4: #{generator_forward.16} parent=0 // pred_region
    _
  $region5: #{generator_forward.16} parent=0 // pred_fallthru
    _
  // Predicated region
  $region6: #{generator_forward.16} parent=0 // pred_check
    _
  $region7: #{generator_forward.16} parent=0 // pred_check_branch
    %11 = sbr.rel (0) target = $region9
  $region8: #{generator_forward.16} parent=0 // pred_region
    _
  $region9: #{generator_forward.16} parent=0 // pred_fallthru
    _
  // Predicated region
  $region10: #{generator_forward.16} parent=0 // pred_check
    _
  $region11: #{generator_forward.16} parent=0 // pred_check_branch
    %13 = sbr.rel (0) target = $region13
  $region12: #{generator_forward.16} parent=0 // pred_region
    _
  $region13: #{generator_forward.16} parent=0 // pred_fallthru
    _
  %v14 = vld [vmem:[%s0] sm:$0xff]
  %v15 = vld [vmem:[%s0 + $0x8] sm:$0xff]
  %v16 = vld [vmem:[%s0 + $0x10] sm:$0xff]
  %v17 = vld [vmem:[%s0 + $0x18] sm:$0xff]
  %v18 = vld [vmem:[%s0 + $0x20] sm:$0xff]
  %v19 = vld [vmem:[%s0 + $0x28] sm:$0xff]
  %v20 = vld [vmem:[%s0 + $0x30] sm:$0xff]
  %v21 = vld [vmem:[%s0 + $0x38] sm:$0xff]
  %v22 = vunpack.c.l.bf16 %v14
  %v23 = vunpack.c.h.bf16 %v14
  %v24 = vunpack.c.l.bf16 %v15
  %v25 = vunpack.c.h.bf16 %v15
  %v26 = vunpack.c.l.bf16 %v16
  %v27 = vunpack.c.h.bf16 %v16
  %v28 = vunpack.c.l.bf16 %v17
  %v29 = vunpack.c.h.bf16 %v17
  %v30 = vunpack.c.l.bf16 %v18
  %v31 = vunpack.c.h.bf16 %v18
  %v32 = vunpack.c.l.bf16 %v19
  %v33 = vunpack.c.h.bf16 %v19
  %v34 = vunpack.c.l.bf16 %v20
  %v35 = vunpack.c.h.bf16 %v20
  %v36 = vunpack.c.l.bf16 %v21
  %v37 = vunpack.c.h.bf16 %v21
  %v38 = vld [vmem:[%s1] sm:$0xff]
  %v39 = vld [vmem:[%s1 + $0x8] sm:$0xff]
  %v40 = vld [vmem:[%s1 + $0x10] sm:$0xff]
  %v41 = vld [vmem:[%s1 + $0x18] sm:$0xff]
  %43 = vset.pattern.permute.xlu0 0
  %44 = vperm.xlu0 %43, %v38
  %v45 = vpop.permute.xlu0 %44
  %48 = vset.pattern.permute.xlu0 0
  %49 = vperm.xlu0 %48, %v39
  %v50 = vpop.permute.xlu0 %49
  %53 = vset.pattern.permute.xlu0 0
  %54 = vperm.xlu0 %53, %v40
  %v55 = vpop.permute.xlu0 %54
  %58 = vset.pattern.permute.xlu0 0
  %59 = vperm.xlu0 %58, %v41
  %v60 = vpop.permute.xlu0 %59
  %v62 = vmul.f32 %v22, %v45
  %v63 = vmul.f32 %v23, %v45
  %v64 = vmul.f32 %v24, %v45
  %v65 = vmul.f32 %v25, %v45
  %v66 = vmul.f32 %v26, %v50
  %v67 = vmul.f32 %v27, %v50
  %v68 = vmul.f32 %v28, %v50
  %v69 = vmul.f32 %v29, %v50
  %v70 = vmul.f32 %v30, %v55
  %v71 = vmul.f32 %v31, %v55
  %v72 = vmul.f32 %v32, %v55
  %v73 = vmul.f32 %v33, %v55
  %v74 = vmul.f32 %v34, %v60
  %v75 = vmul.f32 %v35, %v60
  %v76 = vmul.f32 %v36, %v60
  %v77 = vmul.f32 %v37, %v60
  %v78 = vld [vmem:[%s2] sm:$0xff]
  %v79 = vld [vmem:[%s2 + $0x8] sm:$0xff]
  %v80 = vld [vmem:[%s2 + $0x10] sm:$0xff]
  %v81 = vld [vmem:[%s2 + $0x18] sm:$0xff]
  %83 = vset.pattern.permute.xlu0 0
  %84 = vperm.xlu0 %83, %v78
  %v85 = vpop.permute.xlu0 %84
  %88 = vset.pattern.permute.xlu0 0
  %89 = vperm.xlu0 %88, %v79
  %v90 = vpop.permute.xlu0 %89
  %93 = vset.pattern.permute.xlu0 0
  %94 = vperm.xlu0 %93, %v80
  %v95 = vpop.permute.xlu0 %94
  %98 = vset.pattern.permute.xlu0 0
  %99 = vperm.xlu0 %98, %v81
  %v100 = vpop.permute.xlu0 %99
  %v102 = vadd.f32 %v62, %v85
  %v103 = vadd.f32 %v63, %v85
  %v104 = vadd.f32 %v64, %v85
  %v105 = vadd.f32 %v65, %v85
  %v106 = vadd.f32 %v66, %v90
  %v107 = vadd.f32 %v67, %v90
  %v108 = vadd.f32 %v68, %v90
  %v109 = vadd.f32 %v69, %v90
  %v110 = vadd.f32 %v70, %v95
  %v111 = vadd.f32 %v71, %v95
  %v112 = vadd.f32 %v72, %v95
  %v113 = vadd.f32 %v73, %v95
  %v114 = vadd.f32 %v74, %v100
  %v115 = vadd.f32 %v75, %v100
  %v116 = vadd.f32 %v76, %v100
  %v117 = vadd.f32 %v77, %v100
  %v118 = vmax.f32 %v102, 0.0
  %v119 = vmax.f32 %v103, 0.0
  %v120 = vmax.f32 %v104, 0.0
  %v121 = vmax.f32 %v105, 0.0
  %v122 = vmax.f32 %v106, 0.0
  %v123 = vmax.f32 %v107, 0.0
  %v124 = vmax.f32 %v108, 0.0
  %v125 = vmax.f32 %v109, 0.0
  %v126 = vmax.f32 %v110, 0.0
  %v127 = vmax.f32 %v111, 0.0
  %v128 = vmax.f32 %v112, 0.0
  %v129 = vmax.f32 %v113, 0.0
  %v130 = vmax.f32 %v114, 0.0
  %v131 = vmax.f32 %v115, 0.0
  %v132 = vmax.f32 %v116, 0.0
  %v133 = vmax.f32 %v117, 0.0
  %v134 = vpack.c.bf16 %v122, %v118
  %v135 = vpack.c.bf16 %v123, %v119
  %v136 = vpack.c.bf16 %v124, %v120
  %v137 = vpack.c.bf16 %v125, %v121
  %v138 = vpack.c.bf16 %v130, %v126
  %v139 = vpack.c.bf16 %v131, %v127
  %v140 = vpack.c.bf16 %v132, %v128
  %v141 = vpack.c.bf16 %v133, %v129
  %v150 = vunpack.c.l.b16 %v134
  %v151 = vunpack.c.l.b16 %v135
  %v152 = vunpack.c.l.b16 %v136
  %v153 = vunpack.c.l.b16 %v137
  %v154 = vunpack.c.h.b16 %v134
  %v155 = vunpack.c.h.b16 %v135
  %v156 = vunpack.c.h.b16 %v136
  %v157 = vunpack.c.h.b16 %v137
  %v158 = vunpack.c.l.b16 %v138
  %v159 = vunpack.c.l.b16 %v139
  %v160 = vunpack.c.l.b16 %v140
  %v161 = vunpack.c.l.b16 %v141
  %v162 = vunpack.c.h.b16 %v138
  %v163 = vunpack.c.h.b16 %v139
  %v164 = vunpack.c.h.b16 %v140
  %v165 = vunpack.c.h.b16 %v141
  %v166 = vpack.c.b16 %v151, %v150
  %v167 = vpack.c.b16 %v153, %v152
  %v168 = vpack.c.b16 %v155, %v154
  %v169 = vpack.c.b16 %v157, %v156
  %v170 = vpack.c.b16 %v159, %v158
  %v171 = vpack.c.b16 %v161, %v160
  %v172 = vpack.c.b16 %v163, %v162
  %v173 = vpack.c.b16 %v165, %v164
  %182 = vst [vmem:[%s3] sm:$0xff] %v166
  %183 = vst [vmem:[%s3 + $0x8] sm:$0xff] %v167
  %184 = vst [vmem:[%s3 + $0x10] sm:$0xff] %v168
  %185 = vst [vmem:[%s3 + $0x18] sm:$0xff] %v169
  %186 = vst [vmem:[%s3 + $0x20] sm:$0xff] %v170
  %187 = vst [vmem:[%s3 + $0x28] sm:$0xff] %v171
  %188 = vst [vmem:[%s3 + $0x30] sm:$0xff] %v172
  %189 = vst [vmem:[%s3 + $0x38] sm:$0xff] %v173
  // Predicated region
  $region14: #{generator_forward.16} parent=0 // pred_check
    _
  $region15: #{generator_forward.16} parent=0 // pred_check_branch
    %191 = sbr.rel (0) target = $region17
  $region16: #{generator_forward.16} parent=0 // pred_region
    _
  $region17: #{generator_forward.16} parent=0 // pred_fallthru
    _
  // Predicated region
  $region18: #{generator_forward.16} parent=0 // pred_check
    _
  $region19: #{generator_forward.16} parent=0 // pred_check_branch
    %193 = sbr.rel (0) target = $region21
  $region20: #{generator_forward.16} parent=0 // pred_region
    _
  $region21: #{generator_forward.16} parent=0 // pred_fallthru
    _

// kernel: generator_forward.17
$region0: #{generator_forward.17}
  #allocation0 [shape = 'u32[]', space=smem, size = 0x4, offset = 0x4, fixed_abs, tag = 'smem constant byte address 0x4 - core index']
  #allocation1 [shape = 'u32[144,128]{1,0:T(1,128)}', space=vmem, size = 0x12000, scoped, tag = 'internal scratch']
  #allocation2 [shape = 'f32[12,1024]{1,0:T(8,128)}', space=vmem, size = 0x10000, scoped, tag = 'scratch operand']
  %s0 = inlined_call_operand.vmem [shape: bf16[9,12,8], index: 0, kind: input, shape index: {}]
  %s1 = inlined_call_operand.vmem [shape: bf16[9,8,2048], index: 1, kind: input, shape index: {}]
  %s2 = inlined_call_operand.vmem [shape: f32[12,2048], index: 2, kind: output, shape index: {0}]
  %s3 = inlined_call_operand.hbm [shape: f32[2,12,2], index: 3, kind: output, shape index: {1}]
  %4 = xla_tuple %s2, %s3
  %s5 = sld [smem:[#allocation0]]
  $region76: #{generator_forward.17} parent=0
    _
  %s7 = ssub.s32 1, %s5
  %s8 = scalar_select 0, %s7, %s5
  $region1: #{generator_forward.17} parent=0
    #allocation3 [shape = 'u8[131072]{0}', space=vmem, size = 0x20000, scoped, tag = 'output window, operand 0']
    #allocation4 [shape = 'u8[16384]{0}', space=vmem, size = 0x4000, scoped, tag = 'output window, operand 1']
    #allocation5 [shape = 's32[2]{0}', space=sflag, size = 0x8, scoped, tag = 'scoped memory for generator_forward.17']
    %9 = vsyncpa [#allocation5], 0
    %s10 = scalar_lea.sflag [#allocation5], 1
    %11 = vsyncpa %s10, 0
    loop: start=0, step=1, limit=20
    $region2: #{generator_forward.17} parent=1 // loop_pre_header
      _
    $region3: #{generator_forward.17} parent=1 // loop_header
      %s13 = sphi 0, %s17
      %p14 = scmp.ge.s32.totalorder %s13, 20
      %s20 = sphi 0, %s32
      %s21 = sphi 0, %s28
      %s22 = sphi 0, %s20
      %s23 = sphi 0, %s21
      %s24 = sphi 0, %s22
      %s25 = sphi 0, %s23
      %s35 = sphi 0, %s37
      %s38 = sphi 0, %s35
      %s39 = sphi 0, %s38
      %s55 = sphi 0, %s39
      %s63 = sphi 0, %s65
      %s66 = sphi 0, %s63
      %s67 = sphi 0, %s66
      %s83 = sphi 0, %s67
      %s89 = sphi 0, %s91
      %s92 = sphi 0, %s89
      %s93 = sphi 0, %s92
      %s109 = sphi 0, %s93
      %s115 = sphi 0, %s117
      %s118 = sphi 0, %s115
      %s119 = sphi 0, %s118
      %s135 = sphi 0, %s119
    $region4: #{generator_forward.17} parent=1 // loop_header_branch
      %16 = sbr.rel (%p14) target = $region8
    $region5: #{generator_forward.17} parent=1 // loop_body
      %s18 = ssub.s32 %s13, 1
      %s19 = ssub.s32 %s13, 2
      %s26 = sadd.s32 1, %s21
      %p27 = scmp.ge.s32.totalorder %s26, 9
      %s28 = scalar_select %p27, 0, %s26
      %s29 = sadd.s32 1, %s20
      %s30 = scalar_select %p27, %s29, %s20
      %p31 = scmp.ge.s32.totalorder %s30, 2
      %s32 = scalar_select %p31, 0, %s30
      %s33 = ssub.s32 %s21, %s28
      %p34 = scmp.eq.s32.totalorder %s33, 0
      %s36 = sadd.s32 %s35, 1
      %s37 = scalar_select %p34, %s35, %s36
      %p40 = pneg %p34
      %p41 = scmp.eq.s32.totalorder %s13, 17
      %p42 = por %p40, %p41
      %p43 = scmp.ne.s32.totalorder %s35, %s38
      %p44 = scmp.eq.s32.totalorder %s13, 0
      %p45 = por %p43, %p44
      %p46 = scmp.ne.s32.totalorder %s35, %s38
      %p47 = scmp.eq.s32.totalorder %s18, 17
      %p48 = por %p46, %p47
      %p49 = scmp.ne.s32.totalorder %s38, %s39
      %p50 = scmp.eq.s32.totalorder %s18, 0
      %p51 = por %p49, %p50
      %p52 = scmp.ne.s32.totalorder %s38, %s39
      %p53 = scmp.eq.s32.totalorder %s19, 17
      %p54 = por %p52, %p53
      %p56 = scmp.ne.s32.totalorder %s39, %s55
      %p57 = scmp.eq.s32.totalorder %s19, 0
      %p58 = por %p56, %p57
      %s59 = ssub.s32 %s21, %s28
      %s60 = ssub.s32 %s20, %s32
      %s61 = sor.u32 %s59, %s60
      %p62 = scmp.eq.s32.totalorder %s61, 0
      %s64 = sadd.s32 %s63, 1
      %s65 = scalar_select %p62, %s63, %s64
      %p68 = pneg %p62
      %p69 = scmp.eq.s32.totalorder %s13, 17
      %p70 = por %p68, %p69
      %p71 = scmp.ne.s32.totalorder %s63, %s66
      %p72 = scmp.eq.s32.totalorder %s13, 0
      %p73 = por %p71, %p72
      %p74 = scmp.ne.s32.totalorder %s63, %s66
      %p75 = scmp.eq.s32.totalorder %s18, 17
      %p76 = por %p74, %p75
      %p77 = scmp.ne.s32.totalorder %s66, %s67
      %p78 = scmp.eq.s32.totalorder %s18, 0
      %p79 = por %p77, %p78
      %p80 = scmp.ne.s32.totalorder %s66, %s67
      %p81 = scmp.eq.s32.totalorder %s19, 17
      %p82 = por %p80, %p81
      %p84 = scmp.ne.s32.totalorder %s67, %s83
      %p85 = scmp.eq.s32.totalorder %s19, 0
      %p86 = por %p84, %p85
      %s87 = ssub.s32 %s20, %s32
      %p88 = scmp.eq.s32.totalorder %s87, 0
      %s90 = sadd.s32 %s89, 1
      %s91 = scalar_select %p88, %s89, %s90
      %p94 = pneg %p88
      %p95 = scmp.eq.s32.totalorder %s13, 17
      %p96 = por %p94, %p95
      %p97 = scmp.ne.s32.totalorder %s89, %s92
      %p98 = scmp.eq.s32.totalorder %s13, 0
      %p99 = por %p97, %p98
      %p100 = scmp.ne.s32.totalorder %s89, %s92
      %p101 = scmp.eq.s32.totalorder %s18, 17
      %p102 = por %p100, %p101
      %p103 = scmp.ne.s32.totalorder %s92, %s93
      %p104 = scmp.eq.s32.totalorder %s18, 0
      %p105 = por %p103, %p104
      %p106 = scmp.ne.s32.totalorder %s92, %s93
      %p107 = scmp.eq.s32.totalorder %s19, 17
      %p108 = por %p106, %p107
      %p110 = scmp.ne.s32.totalorder %s93, %s109
      %p111 = scmp.eq.s32.totalorder %s19, 0
      %p112 = por %p110, %p111
      %s113 = ssub.s32 %s20, %s32
      %p114 = scmp.eq.s32.totalorder %s113, 0
      %s116 = sadd.s32 %s115, 1
      %s117 = scalar_select %p114, %s115, %s116
      %p120 = pneg %p114
      %p121 = scmp.eq.s32.totalorder %s13, 17
      %p122 = por %p120, %p121
      %p123 = scmp.ne.s32.totalorder %s115, %s118
      %p124 = scmp.eq.s32.totalorder %s13, 0
      %p125 = por %p123, %p124
      %p126 = scmp.ne.s32.totalorder %s115, %s118
      %p127 = scmp.eq.s32.totalorder %s18, 17
      %p128 = por %p126, %p127
      %p129 = scmp.ne.s32.totalorder %s118, %s119
      %p130 = scmp.eq.s32.totalorder %s18, 0
      %p131 = por %p129, %p130
      %p132 = scmp.ne.s32.totalorder %s118, %s119
      %p133 = scmp.eq.s32.totalorder %s19, 17
      %p134 = por %p132, %p133
      %p136 = scmp.ne.s32.totalorder %s119, %s135
      %p137 = scmp.eq.s32.totalorder %s19, 0
      %p138 = por %p136, %p137
      %p139 = scmp.le.s32.totalorder 1, %s13
      %p140 = scmp.lt.s32.totalorder %s13, 19
      %p141 = pnand %p139, %p140
      %p142 = pneg %p141
      // Predicated region
      $region9: #{generator_forward.17} parent=5 // pred_check
        _
      $region10: #{generator_forward.17} parent=5 // pred_check_branch
        %144 = sbr.rel (%p141) target = $region12
      $region11: #{generator_forward.17} parent=5 // pred_region
        %s145 = ssub.s32 %s13, 1
      $region12: #{generator_forward.17} parent=5 // pred_fallthru
        _
      %p146 = scmp.lt.s32.totalorder %s13, 18
      // Predicated region
      $region13: #{generator_forward.17} parent=5 // pred_check
        %p147 = pneg %p146
      $region14: #{generator_forward.17} parent=5 // pred_check_branch
        %149 = sbr.rel (%p147) target = $region16
      $region15: #{generator_forward.17} parent=5 // pred_region
        // Predicated region
        $region17: #{generator_forward.17} parent=15 // pred_check
          %p150 = pneg %p45
        $region18: #{generator_forward.17} parent=15 // pred_check_branch
          %152 = sbr.rel (%p150) target = $region20
        $region19: #{generator_forward.17} parent=15 // pred_region
          %p153 = scmp.lt.s32.totalorder %s21, 8
          %s154 = scalar_select %p153, %s21, 8
          %s155 = smul.addr %s154, 2
          %s156 = smul.addr %s155, 4
          %s157 = scalar_lea.vmem %s0, %s156
        $region20: #{generator_forward.17} parent=15 // pred_fallthru
          _
        // Predicated region
        $region21: #{generator_forward.17} parent=15 // pred_check
          %p158 = pneg %p73
        $region22: #{generator_forward.17} parent=15 // pred_check_branch
          %160 = sbr.rel (%p158) target = $region24
        $region23: #{generator_forward.17} parent=15 // pred_region
          %s161 = smul.u32 8, %s20
          %p162 = scmp.lt.s32.totalorder %s21, 8
          %s163 = scalar_select %p162, %s21, 8
          %p164 = scmp.lt.s32.totalorder %s161, 15
          %s165 = scalar_select %p164, %s161, 15
          %s166 = smul.addr %s163, 16
          %s167 = sadd.s32 %s165, %s166
          %s168 = smul.addr %s167, 4
          %s169 = scalar_lea.vmem %s1, %s168
          %s170 = smul.u32 8, %s20
        $region24: #{generator_forward.17} parent=15 // pred_fallthru
          _
      $region16: #{generator_forward.17} parent=5 // pred_fallthru
        _
      %p171 = scmp.le.s32.totalorder 1, %s13
      %p172 = scmp.lt.s32.totalorder %s13, 19
      %p173 = pnand %p171, %p172
      %p174 = pneg %p173
      // Predicated region
      $region25: #{generator_forward.17} parent=5 // pred_check
        _
      $region26: #{generator_forward.17} parent=5 // pred_check_branch
        %176 = sbr.rel (%p173) target = $region28
      $region27: #{generator_forward.17} parent=5 // pred_region
        %s177 = ssub.s32 %s13, 1
        %p178 = scmp.lt.s32.totalorder %s23, 8
        %s179 = scalar_select %p178, %s23, 8
        %s180 = smul.addr %s179, 2
        %s181 = smul.addr %s180, 4
        %s182 = scalar_lea.vmem %s0, %s181
        %p183 = pneg %p51
        %p184 = pneg %p48
        %s185 = smul.u32 8, %s22
        %p186 = scmp.lt.s32.totalorder %s23, 8
        %s187 = scalar_select %p186, %s23, 8
        %p188 = scmp.lt.s32.totalorder %s185, 15
        %s189 = scalar_select %p188, %s185, 15
        %s190 = smul.addr %s187, 16
        %s191 = sadd.s32 %s189, %s190
        %s192 = smul.addr %s191, 4
        %s193 = scalar_lea.vmem %s1, %s192
        %p194 = pneg %p79
        %p195 = pneg %p76
        %p196 = pneg %p105
        %p197 = pneg %p102
        %s198 = sand.u32 %s92, 1
        %s199 = sand.u32 %s92, 1
        %s200 = smul.addr %s199, 128
        %s201 = scalar_lea.vmem [#allocation3], %s200
        %p202 = pneg %p131
        %p203 = pneg %p128
        %s204 = sand.u32 %s118, 1
        %s205 = scalar_lea.sflag [#allocation5], %s204
        %s206 = sand.u32 %s118, 1
        %s207 = smul.addr %s206, 16
        %s208 = scalar_lea.vmem [#allocation4], %s207
        %p209 = scmp.lt.s32.totalorder %s23, 8
        %s210 = scalar_select %p209, %s23, 8
        %s211 = smul.addr %s210, 2
        %s212 = smul.addr %s211, 4
        %s213 = scalar_lea.vmem %s0, %s212
        %s214 = smul.u32 8, %s22
        %p215 = scmp.lt.s32.totalorder %s23, 8
        %s216 = scalar_select %p215, %s23, 8
        %p217 = scmp.lt.s32.totalorder %s214, 15
        %s218 = scalar_select %p217, %s214, 15
        %s219 = smul.addr %s216, 16
        %s220 = sadd.s32 %s218, %s219
        %s221 = smul.addr %s220, 4
        %s222 = scalar_lea.vmem %s1, %s221
        %s223 = smul.u32 8, %s22
        %s224 = smul.u32 8, %s22
        %p226 = scmp.eq.s32.totalorder %s23, 0
        // Predicated region
        $region29: #{generator_forward.17} parent=27 // pred_check
          %p227 = pneg %p226
        $region30: #{generator_forward.17} parent=27 // pred_check_branch
          %229 = sbr.rel (%p227) target = $region32
        $region31: #{generator_forward.17} parent=27 // pred_region
          %230 = vst [vmem:[#allocation2] sm:$0xff] 0.0
          %231 = vst [vmem:[#allocation2 + $0x8] sm:$0xff] 0.0
          %232 = vst [vmem:[#allocation2 + $0x10] sm:$0xff] 0.0
          %233 = vst [vmem:[#allocation2 + $0x18] sm:$0xff] 0.0
          %234 = vst [vmem:[#allocation2 + $0x20] sm:$0xff] 0.0
          %235 = vst [vmem:[#allocation2 + $0x28] sm:$0xff] 0.0
          %236 = vst [vmem:[#allocation2 + $0x30] sm:$0xff] 0.0
          %237 = vst [vmem:[#allocation2 + $0x38] sm:$0xff] 0.0
          %238 = vst [vmem:[#allocation2 + $0x40] sm:$0xf] 0.0
          %239 = vst [vmem:[#allocation2 + $0x48] sm:$0xf] 0.0
          %240 = vst [vmem:[#allocation2 + $0x50] sm:$0xf] 0.0
          %241 = vst [vmem:[#allocation2 + $0x58] sm:$0xf] 0.0
          %242 = vst [vmem:[#allocation2 + $0x60] sm:$0xf] 0.0
          %243 = vst [vmem:[#allocation2 + $0x68] sm:$0xf] 0.0
          %244 = vst [vmem:[#allocation2 + $0x70] sm:$0xf] 0.0
          %245 = vst [vmem:[#allocation2 + $0x78] sm:$0xf] 0.0
        $region32: #{generator_forward.17} parent=27 // pred_fallthru
          _
        %v246 = vld [vmem:[#allocation2] sm:$0xff]
        %v247 = vld [vmem:[#allocation2 + $0x8] sm:$0xff]
        %v248 = vld [vmem:[#allocation2 + $0x10] sm:$0xff]
        %v249 = vld [vmem:[#allocation2 + $0x18] sm:$0xff]
        %v250 = vld [vmem:[#allocation2 + $0x20] sm:$0xff]
        %v251 = vld [vmem:[#allocation2 + $0x28] sm:$0xff]
        %v252 = vld [vmem:[#allocation2 + $0x30] sm:$0xff]
        %v253 = vld [vmem:[#allocation2 + $0x38] sm:$0xff]
        %v254 = vld [vmem:[#allocation2 + $0x40] sm:$0xf]
        %v255 = vld [vmem:[#allocation2 + $0x48] sm:$0xf]
        %v256 = vld [vmem:[#allocation2 + $0x50] sm:$0xf]
        %v257 = vld [vmem:[#allocation2 + $0x58] sm:$0xf]
        %v258 = vld [vmem:[#allocation2 + $0x60] sm:$0xf]
        %v259 = vld [vmem:[#allocation2 + $0x68] sm:$0xf]
        %v260 = vld [vmem:[#allocation2 + $0x70] sm:$0xf]
        %v261 = vld [vmem:[#allocation2 + $0x78] sm:$0xf]
        %v262 = vld [vmem:[%s213] sm:$0xf]
        %v263 = vld [vmem:[%s213 + $0x4] sm:$0x3]
        %v264 = vld [vmem:[%s222] sm:$0xff]
        %v265 = vld [vmem:[%s222 + $0x8] sm:$0xff]
        %v266 = vld [vmem:[%s222 + $0x10] sm:$0xff]
        %v267 = vld [vmem:[%s222 + $0x18] sm:$0xff]
        %v270 = vunpack.c.l.b16 %v262
        %v271 = vunpack.c.l.b16 %v263
        %v272 = vpack.c.b16 %v271, %v270
        %v277 = vunpack.c.l.b16 %v264
        %v278 = vunpack.c.h.b16 %v264
        %v279 = vunpack.c.l.b16 %v265
        %v280 = vunpack.c.h.b16 %v265
        %v281 = vunpack.c.l.b16 %v266
        %v282 = vunpack.c.h.b16 %v266
        %v283 = vunpack.c.l.b16 %v267
        %v284 = vunpack.c.h.b16 %v267
        %v285 = vpack.c.b16 %v277, %v277
        %v286 = vpack.c.b16 %v278, %v278
        %v287 = vpack.c.b16 %v279, %v279
        %v288 = vpack.c.b16 %v280, %v280
        %v289 = vpack.c.b16 %v281, %v281
        %v290 = vpack.c.b16 %v282, %v282
        %v291 = vpack.c.b16 %v283, %v283
        %v292 = vpack.c.b16 %v284, %v284
        %vm293 = vcmask 64512
        %v295 = vsel %vm293, %v272, 0
        %vm297 = vcmask 1043456
        %v299 = vsel %vm297, %v285, 0
        %v302 = vsel %vm297, %v286, 0
        %v305 = vsel %vm297, %v287, 0
        %v308 = vsel %vm297, %v288, 0
        %v311 = vsel %vm297, %v289, 0
        %v314 = vsel %vm297, %v290, 0
        %v317 = vsel %vm297, %v291, 0
        %v320 = vsel %vm297, %v292, 0
        %322 = vmatprep.subr.bf16.mxu0 %v302
        %323 = vmatpush1.bf16.msra.mxu0 %v299
        %324 = vmatprep.subr.bf16.mxu0 0
        %325 = vmatpush1.bf16.msra.mxu0 0
        %326 = vmatprep.subr.bf16.mxu0 0
        %327 = vmatpush1.bf16.msra.mxu0 0
        %328 = vmatprep.subr.bf16.mxu0 0
        %329 = vmatpush1.bf16.msra.mxu0 0
        %330 = vmatprep.subr.bf16.mxu0 0
        %331 = vmatpush1.bf16.msra.mxu0 0
        %332 = vmatprep.subr.bf16.mxu0 0
        %333 = vmatpush1.bf16.msra.mxu0 0
        %334 = vmatprep.subr.bf16.mxu0 0
        %335 = vmatpush1.bf16.msra.mxu0 0
        %336 = vmatprep.subr.bf16.mxu0 0
        %337 = vmatpush1.bf16.msra.mxu0 0
        %338 = vmatprep.subr.bf16.mxu0 0
        %339 = vmatpush1.bf16.msra.mxu0 0
        %340 = vmatprep.subr.bf16.mxu0 0
        %341 = vmatpush1.bf16.msra.mxu0 0
        %342 = vmatprep.subr.bf16.mxu0 0
        %343 = vmatpush1.bf16.msra.mxu0 0
        %344 = vmatprep.subr.bf16.mxu0 0
        %345 = vmatpush1.bf16.msra.mxu0 0
        %346 = vmatprep.subr.bf16.mxu0 0
        %347 = vmatpush1.bf16.msra.mxu0 0
        %348 = vmatprep.subr.bf16.mxu0 0
        %349 = vmatpush1.bf16.msra.mxu0 0
        %350 = vmatprep.subr.bf16.mxu0 0
        %351 = vmatpush1.bf16.msra.mxu0 0
        %352 = vmatprep.subr.bf16.mxu0 0
        %353 = vmatpush1.bf16.msra.mxu0 0
        %354 = vmatprep.mubr.bf16.mxu0 0
        %355 = vmatmul.mubr.bf16.gmra.mrb[0].mxu0 %v295
        %v356 = vpop.f32.mrb[0].mxu0
        %v357 = vadd.f32 0.0, %v356
        %v358 = vpop.f32.mrb[0].mxu0
        %v359 = vadd.f32 0.0, %v358
        %v360 = vpop.f32.mrb[0].mxu0
        %v361 = vadd.f32 0.0, %v360
        %v362 = vpop.f32.mrb[0].mxu0
        %v363 = vadd.f32 0.0, %v362
        %364 = vdwg.mxu0
        %365 = vmatprep.subr.bf16.mxu0 %v308
        %366 = vmatpush1.bf16.msra.mxu0 %v305
        %367 = vmatprep.subr.bf16.mxu0 0
        %368 = vmatpush1.bf16.msra.mxu0 0
        %369 = vmatprep.subr.bf16.mxu0 0
        %370 = vmatpush1.bf16.msra.mxu0 0
        %371 = vmatprep.subr.bf16.mxu0 0
        %372 = vmatpush1.bf16.msra.mxu0 0
        %373 = vmatprep.subr.bf16.mxu0 0
        %374 = vmatpush1.bf16.msra.mxu0 0
        %375 = vmatprep.subr.bf16.mxu0 0
        %376 = vmatpush1.bf16.msra.mxu0 0
        %377 = vmatprep.subr.bf16.mxu0 0
        %378 = vmatpush1.bf16.msra.mxu0 0
        %379 = vmatprep.subr.bf16.mxu0 0
        %380 = vmatpush1.bf16.msra.mxu0 0
        %381 = vmatprep.subr.bf16.mxu0 0
        %382 = vmatpush1.bf16.msra.mxu0 0
        %383 = vmatprep.subr.bf16.mxu0 0
        %384 = vmatpush1.bf16.msra.mxu0 0
        %385 = vmatprep.subr.bf16.mxu0 0
        %386 = vmatpush1.bf16.msra.mxu0 0
        %387 = vmatprep.subr.bf16.mxu0 0
        %388 = vmatpush1.bf16.msra.mxu0 0
        %389 = vmatprep.subr.bf16.mxu0 0
        %390 = vmatpush1.bf16.msra.mxu0 0
        %391 = vmatprep.subr.bf16.mxu0 0
        %392 = vmatpush1.bf16.msra.mxu0 0
        %393 = vmatprep.subr.bf16.mxu0 0
        %394 = vmatpush1.bf16.msra.mxu0 0
        %395 = vmatprep.subr.bf16.mxu0 0
        %396 = vmatpush1.bf16.msra.mxu0 0
        %397 = vmatprep.mubr.bf16.mxu0 0
        %398 = vmatmul.mubr.bf16.gmra.mrb[0].mxu0 %v295
        %v399 = vpop.f32.mrb[0].mxu0
        %v400 = vadd.f32 0.0, %v399
        %v401 = vpop.f32.mrb[0].mxu0
        %v402 = vadd.f32 0.0, %v401
        %v403 = vpop.f32.mrb[0].mxu0
        %v404 = vadd.f32 0.0, %v403
        %v405 = vpop.f32.mrb[0].mxu0
        %v406 = vadd.f32 0.0, %v405
        %407 = vdwg.mxu0
        %408 = vmatprep.subr.bf16.mxu0 %v314
        %409 = vmatpush1.bf16.msra.mxu0 %v311
        %410 = vmatprep.subr.bf16.mxu0 0
        %411 = vmatpush1.bf16.msra.mxu0 0
        %412 = vmatprep.subr.bf16.mxu0 0
        %413 = vmatpush1.bf16.msra.mxu0 0
        %414 = vmatprep.subr.bf16.mxu0 0
        %415 = vmatpush1.bf16.msra.mxu0 0
        %416 = vmatprep.subr.bf16.mxu0 0
        %417 = vmatpush1.bf16.msra.mxu0 0
        %418 = vmatprep.subr.bf16.mxu0 0
        %419 = vmatpush1.bf16.msra.mxu0 0
        %420 = vmatprep.subr.bf16.mxu0 0
        %421 = vmatpush1.bf16.msra.mxu0 0
        %422 = vmatprep.subr.bf16.mxu0 0
        %423 = vmatpush1.bf16.msra.mxu0 0
        %424 = vmatprep.subr.bf16.mxu0 0
        %425 = vmatpush1.bf16.msra.mxu0 0
        %426 = vmatprep.subr.bf16.mxu0 0
        %427 = vmatpush1.bf16.msra.mxu0 0
        %428 = vmatprep.subr.bf16.mxu0 0
        %429 = vmatpush1.bf16.msra.mxu0 0
        %430 = vmatprep.subr.bf16.mxu0 0
        %431 = vmatpush1.bf16.msra.mxu0 0
        %432 = vmatprep.subr.bf16.mxu0 0
        %433 = vmatpush1.bf16.msra.mxu0 0
        %434 = vmatprep.subr.bf16.mxu0 0
        %435 = vmatpush1.bf16.msra.mxu0 0
        %436 = vmatprep.subr.bf16.mxu0 0
        %437 = vmatpush1.bf16.msra.mxu0 0
        %438 = vmatprep.subr.bf16.mxu0 0
        %439 = vmatpush1.bf16.msra.mxu0 0
        %440 = vmatprep.mubr.bf16.mxu0 0
        %441 = vmatmul.mubr.bf16.gmra.mrb[0].mxu0 %v295
        %v442 = vpop.f32.mrb[0].mxu0
        %v443 = vadd.f32 0.0, %v442
        %v444 = vpop.f32.mrb[0].mxu0
        %v445 = vadd.f32 0.0, %v444
        %v446 = vpop.f32.mrb[0].mxu0
        %v447 = vadd.f32 0.0, %v446
        %v448 = vpop.f32.mrb[0].mxu0
        %v449 = vadd.f32 0.0, %v448
        %450 = vdwg.mxu0
        %451 = vmatprep.subr.bf16.mxu0 %v320
        %452 = vmatpush1.bf16.msra.mxu0 %v317
        %453 = vmatprep.subr.bf16.mxu0 0
        %454 = vmatpush1.bf16.msra.mxu0 0
        %455 = vmatprep.subr.bf16.mxu0 0
        %456 = vmatpush1.bf16.msra.mxu0 0
        %457 = vmatprep.subr.bf16.mxu0 0
        %458 = vmatpush1.bf16.msra.mxu0 0
        %459 = vmatprep.subr.bf16.mxu0 0
        %460 = vmatpush1.bf16.msra.mxu0 0
        %461 = vmatprep.subr.bf16.mxu0 0
        %462 = vmatpush1.bf16.msra.mxu0 0
        %463 = vmatprep.subr.bf16.mxu0 0
        %464 = vmatpush1.bf16.msra.mxu0 0
        %465 = vmatprep.subr.bf16.mxu0 0
        %466 = vmatpush1.bf16.msra.mxu0 0
        %467 = vmatprep.subr.bf16.mxu0 0
        %468 = vmatpush1.bf16.msra.mxu0 0
        %469 = vmatprep.subr.bf16.mxu0 0
        %470 = vmatpush1.bf16.msra.mxu0 0
        %471 = vmatprep.subr.bf16.mxu0 0
        %472 = vmatpush1.bf16.msra.mxu0 0
        %473 = vmatprep.subr.bf16.mxu0 0
        %474 = vmatpush1.bf16.msra.mxu0 0
        %475 = vmatprep.subr.bf16.mxu0 0
        %476 = vmatpush1.bf16.msra.mxu0 0
        %477 = vmatprep.subr.bf16.mxu0 0
        %478 = vmatpush1.bf16.msra.mxu0 0
        %479 = vmatprep.subr.bf16.mxu0 0
        %480 = vmatpush1.bf16.msra.mxu0 0
        %481 = vmatprep.subr.bf16.mxu0 0
        %482 = vmatpush1.bf16.msra.mxu0 0
        %483 = vmatprep.mubr.bf16.mxu0 0
        %484 = vmatmul.mubr.bf16.gmra.mrb[0].mxu0 %v295
        %v485 = vpop.f32.mrb[0].mxu0
        %v486 = vadd.f32 0.0, %v485
        %v487 = vpop.f32.mrb[0].mxu0
        %v488 = vadd.f32 0.0, %v487
        %v489 = vpop.f32.mrb[0].mxu0
        %v490 = vadd.f32 0.0, %v489
        %v491 = vpop.f32.mrb[0].mxu0
        %v492 = vadd.f32 0.0, %v491
        %493 = vdwg.mxu0
        %v494 = vadd.f32 %v246, %v357
        %v495 = vadd.f32 %v247, %v359
        %v496 = vadd.f32 %v248, %v400
        %v497 = vadd.f32 %v249, %v402
        %v498 = vadd.f32 %v250, %v443
        %v499 = vadd.f32 %v251, %v445
        %v500 = vadd.f32 %v252, %v486
        %v501 = vadd.f32 %v253, %v488
        %v502 = vadd.f32 %v254, %v361
        %v503 = vadd.f32 %v255, %v363
        %v504 = vadd.f32 %v256, %v404
        %v505 = vadd.f32 %v257, %v406
        %v506 = vadd.f32 %v258, %v447
        %v507 = vadd.f32 %v259, %v449
        %v508 = vadd.f32 %v260, %v490
        %v509 = vadd.f32 %v261, %v492
        %510 = vst [vmem:[#allocation2] sm:$0xff] %v494
        %511 = vst [vmem:[#allocation2 + $0x8] sm:$0xff] %v495
        %512 = vst [vmem:[#allocation2 + $0x10] sm:$0xff] %v496
        %513 = vst [vmem:[#allocation2 + $0x18] sm:$0xff] %v497
        %514 = vst [vmem:[#allocation2 + $0x20] sm:$0xff] %v498
        %515 = vst [vmem:[#allocation2 + $0x28] sm:$0xff] %v499
        %516 = vst [vmem:[#allocation2 + $0x30] sm:$0xff] %v500
        %517 = vst [vmem:[#allocation2 + $0x38] sm:$0xff] %v501
        %518 = vst [vmem:[#allocation2 + $0x40] sm:$0xf] %v502
        %519 = vst [vmem:[#allocation2 + $0x48] sm:$0xf] %v503
        %520 = vst [vmem:[#allocation2 + $0x50] sm:$0xf] %v504
        %521 = vst [vmem:[#allocation2 + $0x58] sm:$0xf] %v505
        %522 = vst [vmem:[#allocation2 + $0x60] sm:$0xf] %v506
        %523 = vst [vmem:[#allocation2 + $0x68] sm:$0xf] %v507
        %524 = vst [vmem:[#allocation2 + $0x70] sm:$0xf] %v508
        %525 = vst [vmem:[#allocation2 + $0x78] sm:$0xf] %v509
        %p526 = scmp.eq.s32.totalorder %s23, 8
        // Predicated region
        $region33: #{generator_forward.17} parent=27 // pred_check
          %p527 = pneg %p526
        $region34: #{generator_forward.17} parent=27 // pred_check_branch
          %529 = sbr.rel (%p527) target = $region36
        $region35: #{generator_forward.17} parent=27 // pred_region
          %v530 = vld [vmem:[#allocation2] sm:$0xff]
          %v531 = vld [vmem:[#allocation2 + $0x8] sm:$0xff]
          %v532 = vld [vmem:[#allocation2 + $0x10] sm:$0xff]
          %v533 = vld [vmem:[#allocation2 + $0x18] sm:$0xff]
          %v534 = vld [vmem:[#allocation2 + $0x20] sm:$0xff]
          %v535 = vld [vmem:[#allocation2 + $0x28] sm:$0xff]
          %v536 = vld [vmem:[#allocation2 + $0x30] sm:$0xff]
          %v537 = vld [vmem:[#allocation2 + $0x38] sm:$0xff]
          %v538 = vld [vmem:[#allocation2 + $0x40] sm:$0xf]
          %v539 = vld [vmem:[#allocation2 + $0x48] sm:$0xf]
          %v540 = vld [vmem:[#allocation2 + $0x50] sm:$0xf]
          %v541 = vld [vmem:[#allocation2 + $0x58] sm:$0xf]
          %v542 = vld [vmem:[#allocation2 + $0x60] sm:$0xf]
          %v543 = vld [vmem:[#allocation2 + $0x68] sm:$0xf]
          %v544 = vld [vmem:[#allocation2 + $0x70] sm:$0xf]
          %v545 = vld [vmem:[#allocation2 + $0x78] sm:$0xf]
          %v546 = vadd.f32 %v530, %v531
          %v547 = vadd.f32 %v546, %v532
          %v548 = vadd.f32 %v547, %v533
          %v549 = vadd.f32 %v548, %v534
          %v550 = vadd.f32 %v549, %v535
          %v551 = vadd.f32 %v550, %v536
          %v552 = vadd.f32 %v551, %v537
          %553 = vadd.xlane.f32.xlu0 %v552
          %v554 = vpop.xlane.xlu0 %553
          %v555 = vsel %vm297, %v538, 0.0
          %v556 = vsel %vm297, %v539, 0.0
          %v557 = vadd.f32 %v555, %v556
          %v558 = vsel %vm297, %v540, 0.0
          %v559 = vadd.f32 %v557, %v558
          %v560 = vsel %vm297, %v541, 0.0
          %v561 = vadd.f32 %v559, %v560
          %v562 = vsel %vm297, %v542, 0.0
          %v563 = vadd.f32 %v561, %v562
          %v564 = vsel %vm297, %v543, 0.0
          %v565 = vadd.f32 %v563, %v564
          %v566 = vsel %vm297, %v544, 0.0
          %v567 = vadd.f32 %v565, %v566
          %v568 = vsel %vm297, %v545, 0.0
          %v569 = vadd.f32 %v567, %v568
          %570 = vadd.xlane.f32.xlu0 %v569
          %v571 = vpop.xlane.xlu0 %570
          %v572 = vmul.f32 %v530, %v530
          %v573 = vmul.f32 %v531, %v531
          %v574 = vmul.f32 %v532, %v532
          %v575 = vmul.f32 %v533, %v533
          %v576 = vmul.f32 %v534, %v534
          %v577 = vmul.f32 %v535, %v535
          %v578 = vmul.f32 %v536, %v536
          %v579 = vmul.f32 %v537, %v537
          %v580 = vmul.f32 %v538, %v538
          %v581 = vmul.f32 %v539, %v539
          %v582 = vmul.f32 %v540, %v540
          %v583 = vmul.f32 %v541, %v541
          %v584 = vmul.f32 %v542, %v542
          %v585 = vmul.f32 %v543, %v543
          %v586 = vmul.f32 %v544, %v544
          %v587 = vmul.f32 %v545, %v545
          %v588 = vadd.f32 %v572, %v573
          %v589 = vadd.f32 %v588, %v574
          %v590 = vadd.f32 %v589, %v575
          %v591 = vadd.f32 %v590, %v576
          %v592 = vadd.f32 %v591, %v577
          %v593 = vadd.f32 %v592, %v578
          %v594 = vadd.f32 %v593, %v579
          %595 = vadd.xlane.f32.xlu0 %v594
          %v596 = vpop.xlane.xlu0 %595
          %v597 = vsel %vm297, %v580, 0.0
          %v598 = vsel %vm297, %v581, 0.0
          %v599 = vadd.f32 %v597, %v598
          %v600 = vsel %vm297, %v582, 0.0
          %v601 = vadd.f32 %v599, %v600
          %v602 = vsel %vm297, %v583, 0.0
          %v603 = vadd.f32 %v601, %v602
          %v604 = vsel %vm297, %v584, 0.0
          %v605 = vadd.f32 %v603, %v604
          %v606 = vsel %vm297, %v585, 0.0
          %v607 = vadd.f32 %v605, %v606
          %v608 = vsel %vm297, %v586, 0.0
          %v609 = vadd.f32 %v607, %v608
          %v610 = vsel %vm297, %v587, 0.0
          %v611 = vadd.f32 %v609, %v610
          %612 = vadd.xlane.f32.xlu0 %v611
          %v613 = vpop.xlane.xlu0 %612
          %vm614 = vcmask 7168
          %v615 = vsel %vm614, %v554, %v596
          %v616 = vsel %vm614, %v571, %v613
          %vm617 = vcmask 15360
          %618 = vst.msk [vmem:[%s208] sm:$0xff] %vm617, %v615
          %vm619 = vcmask 11264
          %620 = vst.msk [vmem:[%s208 + $0x8] sm:$0xf] %vm619, %v616
          %v621 = vtanh.pop %v530
          %v622 = vtanh.pop %v531
          %v623 = vtanh.pop %v532
          %v624 = vtanh.pop %v533
          %v625 = vtanh.pop %v534
          %v626 = vtanh.pop %v535
          %v627 = vtanh.pop %v536
          %v628 = vtanh.pop %v537
          %v629 = vtanh.pop %v538
          %v630 = vtanh.pop %v539
          %v631 = vtanh.pop %v540
          %v632 = vtanh.pop %v541
          %v633 = vtanh.pop %v542
          %v634 = vtanh.pop %v543
          %v635 = vtanh.pop %v544
          %v636 = vtanh.pop %v545
          %637 = vst [vmem:[%s201] sm:$0xff] %v621
          %638 = vst [vmem:[%s201 + $0x8] sm:$0xff] %v622
          %639 = vst [vmem:[%s201 + $0x10] sm:$0xff] %v623
          %640 = vst [vmem:[%s201 + $0x18] sm:$0xff] %v624
          %641 = vst [vmem:[%s201 + $0x20] sm:$0xff] %v625
          %642 = vst [vmem:[%s201 + $0x28] sm:$0xff] %v626
          %643 = vst [vmem:[%s201 + $0x30] sm:$0xff] %v627
          %644 = vst [vmem:[%s201 + $0x38] sm:$0xff] %v628
          %645 = vst [vmem:[%s201 + $0x40] sm:$0xf] %v629
          %646 = vst [vmem:[%s201 + $0x48] sm:$0xf] %v630
          %647 = vst [vmem:[%s201 + $0x50] sm:$0xf] %v631
          %648 = vst [vmem:[%s201 + $0x58] sm:$0xf] %v632
          %649 = vst [vmem:[%s201 + $0x60] sm:$0xf] %v633
          %650 = vst [vmem:[%s201 + $0x68] sm:$0xf] %v634
          %651 = vst [vmem:[%s201 + $0x70] sm:$0xf] %v635
          %652 = vst [vmem:[%s201 + $0x78] sm:$0xf] %v636
        $region36: #{generator_forward.17} parent=27 // pred_fallthru
          _
        %s653 = sand.u32 %s92, 1
        %s654 = sand.u32 %s92, 1
        %s655 = smul.addr %s654, 128
        %s656 = scalar_lea.vmem [#allocation3], %s655
        %s657 = sand.u32 %s118, 1
        %s658 = scalar_lea.sflag [#allocation5], %s657
        %s659 = sand.u32 %s118, 1
        %s660 = smul.addr %s659, 16
        %s661 = scalar_lea.vmem [#allocation4], %s660
        // Predicated region
        $region37: #{generator_forward.17} parent=27 // pred_check
          %p662 = pneg %p102
        $region38: #{generator_forward.17} parent=27 // pred_check_branch
          %664 = sbr.rel (%p662) target = $region40
        $region39: #{generator_forward.17} parent=27 // pred_region
          %s665 = smul.u32 8, %s22
          %s666 = smul.addr %s665, 8
          %s667 = scalar_lea.vmem %s2, %s666
          // Predicated region
          $region41: #{generator_forward.17} parent=39 // pred_check
            _
          $region42: #{generator_forward.17} parent=39 // pred_check_branch
            %669 = sbr.rel (0) target = $region44
          $region43: #{generator_forward.17} parent=39 // pred_region
            // Predicated region
            $region45: #{generator_forward.17} parent=43 // pred_check
              _
            $region46: #{generator_forward.17} parent=43 // pred_check_branch
              %671 = sbr.rel (0) target = $region48
            $region47: #{generator_forward.17} parent=43 // pred_region
              loop: start=0, step=1, limit=1
              $region49: #{generator_forward.17} parent=47 // loop_pre_header
                _
              $region50: #{generator_forward.17} parent=47 // loop_header
                %s673 = sphi 0, %s677
                %p674 = scmp.ge.s32.totalorder %s673, 1
                %s678 = sphi %s656, %s656
                %s679 = sphi %s667, %s667
              $region51: #{generator_forward.17} parent=47 // loop_header_branch
                %676 = sbr.rel (%p674) target = $region55
              $region52: #{generator_forward.17} parent=47 // loop_body
                %v680 = vld [vmem:[%s678] sm:$0xff]
                %681 = vst [vmem:[%s679] sm:$0xff] %v680
                %v682 = vld [vmem:[%s678 + $0x8] sm:$0xff]
                %683 = vst [vmem:[%s679 + $0x8] sm:$0xff] %v682
                %v684 = vld [vmem:[%s678 + $0x10] sm:$0xff]
                %685 = vst [vmem:[%s679 + $0x10] sm:$0xff] %v684
                %v686 = vld [vmem:[%s678 + $0x18] sm:$0xff]
                %687 = vst [vmem:[%s679 + $0x18] sm:$0xff] %v686
                %v688 = vld [vmem:[%s678 + $0x20] sm:$0xff]
                %689 = vst [vmem:[%s679 + $0x20] sm:$0xff] %v688
                %v690 = vld [vmem:[%s678 + $0x28] sm:$0xff]
                %691 = vst [vmem:[%s679 + $0x28] sm:$0xff] %v690
                %v692 = vld [vmem:[%s678 + $0x30] sm:$0xff]
                %693 = vst [vmem:[%s679 + $0x30] sm:$0xff] %v692
                %v694 = vld [vmem:[%s678 + $0x38] sm:$0xff]
                %695 = vst [vmem:[%s679 + $0x38] sm:$0xff] %v694
                %v696 = vld [vmem:[%s678 + $0x40] sm:$0xff]
                %697 = vst [vmem:[%s679 + $0x80] sm:$0xff] %v696
                %v698 = vld [vmem:[%s678 + $0x48] sm:$0xff]
                %699 = vst [vmem:[%s679 + $0x88] sm:$0xff] %v698
                %v700 = vld [vmem:[%s678 + $0x50] sm:$0xff]
                %701 = vst [vmem:[%s679 + $0x90] sm:$0xff] %v700
                %v702 = vld [vmem:[%s678 + $0x58] sm:$0xff]
                %703 = vst [vmem:[%s679 + $0x98] sm:$0xff] %v702
                %v704 = vld [vmem:[%s678 + $0x60] sm:$0xff]
                %705 = vst [vmem:[%s679 + $0xa0] sm:$0xff] %v704
                %v706 = vld [vmem:[%s678 + $0x68] sm:$0xff]
                %707 = vst [vmem:[%s679 + $0xa8] sm:$0xff] %v706
                %v708 = vld [vmem:[%s678 + $0x70] sm:$0xff]
                %709 = vst [vmem:[%s679 + $0xb0] sm:$0xff] %v708
                %v710 = vld [vmem:[%s678 + $0x78] sm:$0xff]
                %711 = vst [vmem:[%s679 + $0xb8] sm:$0xff] %v710
              $region53: #{generator_forward.17} parent=47 // loop_footer
                %s677 = sadd.s32 1, %s673
              $region54: #{generator_forward.17} parent=47 // loop_footer_branch
                %672 = sbr.rel target = $region50
              $region55: #{generator_forward.17} parent=47 // loop_exit
                _
            $region48: #{generator_forward.17} parent=43 // pred_fallthru
              _
            // Predicated region
            $region56: #{generator_forward.17} parent=43 // pred_check
              _
            $region57: #{generator_forward.17} parent=43 // pred_check_branch
              %713 = sbr.rel target = $region59
            $region58: #{generator_forward.17} parent=43 // pred_region
              _
            $region59: #{generator_forward.17} parent=43 // pred_fallthru
              _
          $region44: #{generator_forward.17} parent=39 // pred_fallthru
            _
          %714 = vnop
        $region40: #{generator_forward.17} parent=27 // pred_fallthru
          _
        // Predicated region
        $region60: #{generator_forward.17} parent=27 // pred_check
          %p715 = pneg %p128
        $region61: #{generator_forward.17} parent=27 // pred_check_branch
          %717 = sbr.rel (%p715) target = $region63
        $region62: #{generator_forward.17} parent=27 // pred_region
          %s719 = ssub.s32 256, 256
          %720 = vsyncadd %s658, %s719
          %s721 = smul.addr %s22, 2
          %s722 = smul.addr %s721, 128
          %s723 = scalar_lea.hbm %s3, %s722
          %s724 = sshll.u32 %s661, 4
          %s725 = int_to_ptr.vmem [resolvable:$true] %s724
          %730 = dma.vmem_to_hbm [thread:$0]  %s725, 256, %s723, %s658, 128, 128, 8
        $region63: #{generator_forward.17} parent=27 // pred_fallthru
          _
      $region28: #{generator_forward.17} parent=5 // pred_fallthru
        _
      %p731 = scmp.le.s32.totalorder 2, %s13
      // Predicated region
      $region64: #{generator_forward.17} parent=5 // pred_check
        %p732 = pneg %p731
      $region65: #{generator_forward.17} parent=5 // pred_check_branch
        %734 = sbr.rel (%p732) target = $region67
      $region66: #{generator_forward.17} parent=5 // pred_region
        %s735 = ssub.s32 %s13, 2
        // Predicated region
        $region68: #{generator_forward.17} parent=66 // pred_check
          %p736 = pneg %p108
        $region69: #{generator_forward.17} parent=66 // pred_check_branch
          %738 = sbr.rel (%p736) target = $region71
        $region70: #{generator_forward.17} parent=66 // pred_region
          %s739 = sand.u32 %s93, 1
          %s740 = sand.u32 %s93, 1
          %s741 = smul.addr %s740, 128
          %s742 = scalar_lea.vmem [#allocation3], %s741
        $region71: #{generator_forward.17} parent=66 // pred_fallthru
          _
        // Predicated region
        $region72: #{generator_forward.17} parent=66 // pred_check
          %p743 = pneg %p134
        $region73: #{generator_forward.17} parent=66 // pred_check_branch
          %745 = sbr.rel (%p743) target = $region75
        $region74: #{generator_forward.17} parent=66 // pred_region
          %s746 = sand.u32 %s119, 1
          %s747 = scalar_lea.sflag [#allocation5], %s746
          %s748 = sand.u32 %s119, 1
          %s749 = smul.addr %s748, 16
          %s750 = scalar_lea.vmem [#allocation4], %s749
          %751 = dma.done %s747, 256
        $region75: #{generator_forward.17} parent=66 // pred_fallthru
          _
      $region67: #{generator_forward.17} parent=5 // pred_fallthru
        _
    $region6: #{generator_forward.17} parent=1 // loop_footer
      %s17 = sadd.s32 1, %s13
    $region7: #{generator_forward.17} parent=1 // loop_footer_branch
      %12 = sbr.rel target = $region3
    $region8: #{generator_forward.17} parent=1 // loop_exit
      _
    %752 = vsyncpa [#allocation5], 1
    %s753 = scalar_lea.sflag [#allocation5], 1
    %754 = vsyncpa %s753, 1

</llo_original>
